<compile_context>
chip_gen: v5e
topology: v5e:2x2
jax: 0.10.0
libtpu: 0.0.40
codegen_flags: <defaults>
</compile_context>

<pallas_src>
import functools

import jax
import jax.numpy as jnp
import numpy as np
from jax import lax
from jax.experimental import pallas as pl
from jax.experimental.pallas import tpu as pltpu


def _upsample_kernel(x_ref, h_ref, w_ref, b_ref, o_ref, xf_ref, *,
                     H, W, Cin, Cout, TD, fuse_k):
    """One depth tile of the parity-folded ConvTranspose3d.

    x_ref : (TD, H+1, W+1, Cin)   bf16 main depth tile
    h_ref : (1,  H+1, W+1, Cin)   bf16 +1 depth halo slice
    w_ref : (8*Cin, 8*Cout) bf16  if fuse_k else (8, Cin, 8*Cout) bf16
    b_ref : (1, 8*Cout)           f32 bias tiled over the 8 output parities
    o_ref : (TD, H*W, 8*Cout)     f32 parity-major output slab
    xf_ref: (TD+1, H+1, W+1, Cin) bf16 scratch (tile + halo window)
    """
    # Assemble the (TD+1)-deep window once; both pieces arrived through the
    # normal BlockSpec pipeline (no wrapper-side overlapping-tile copy).
    xf_ref[pl.ds(0, TD), :, :, :] = x_ref[...]
    xf_ref[pl.ds(TD, 1), :, :, :] = h_ref[...]

    M = TD * H * W
    HW = H * W

    def tap(dd, dh, dw):  # im2col slab for one 2x2x2 tap: (TD*H*W, Cin)
        v = xf_ref[pl.ds(dd, TD), pl.ds(dh, H), pl.ds(dw, W), :]
        return v.reshape(M, Cin)

    taps = [(dd, dh, dw) for dd in (0, 1) for dh in (0, 1) for dw in (0, 1)]

    if fuse_k:
        # Small Cin: fold the contraction to K = 8*Cin and do one matmul.
        patches = jnp.concatenate([tap(*t) for t in taps], axis=-1)  # (M, 8*Cin)
        y = jnp.dot(patches, w_ref[...], preferred_element_type=jnp.float32)
    else:
        # Larger Cin: 8 accumulating tap-matmuls — no lane-interleaving concat
        # and no 8x patches buffer (v7x MRB accumulates in place).
        y = jnp.dot(tap(*taps[0]), w_ref[0], preferred_element_type=jnp.float32)
        for i in range(1, 8):
            y = y + jnp.dot(tap(*taps[i]), w_ref[i],
                            preferred_element_type=jnp.float32)

    y = y + b_ref[...]                       # (1, 8*Cout) broadcasts over rows
    o_ref[...] = y.reshape(TD, HW, 8 * Cout)  # single dense store per step


def _fold_weights(weight, bias, dtype=jnp.bfloat16):
    """PyTorch ConvTranspose3d weight (Cin, Cout, 3, 3, 3) -> (8, Cin, 8*Cout).

    Tap block (dd, dh, dw), column block (pd, ph, pw):
        out[2m+pd, 2n+ph, 2l+pw] += x[m+dd, n+dh, l+dw] @ W_taps
    with per-axis kernel index k(parity, offset): (0,0)->1, (1,0)->2, (1,1)->0,
    (0,1) -> no contribution (zero block).
    """
    Cin, Cout = weight.shape[0], weight.shape[1]
    ktap = {(0, 0): 1, (1, 0): 2, (1, 1): 0}
    zeros = jnp.zeros((Cin, Cout), jnp.float32)
    tap_mats = []
    for dd in (0, 1):
        for dh in (0, 1):
            for dw in (0, 1):
                col_blocks = []
                for pd in (0, 1):
                    for ph in (0, 1):
                        for pw in (0, 1):
                            kd = ktap.get((pd, dd))
                            kh = ktap.get((ph, dh))
                            kw = ktap.get((pw, dw))
                            if kd is None or kh is None or kw is None:
                                col_blocks.append(zeros)
                            else:
                                col_blocks.append(
                                    weight[:, :, kd, kh, kw].astype(jnp.float32))
                tap_mats.append(jnp.concatenate(col_blocks, axis=1))  # (Cin, 8*Cout)
    w_taps = jnp.stack(tap_mats, axis=0).astype(dtype)                # (8, Cin, 8*Cout)
    b_row = jnp.tile(bias.astype(jnp.float32), 8).reshape(1, 8 * Cout)
    return w_taps, b_row


def _pick_depth_tile(D, H, W, Cin, Cout, budget_bytes):
    """Largest divisor of D whose (double-buffered) blocks fit the VMEM budget."""
    def tile_bytes(td):
        bf, f32 = 2, 4
        main = td * (H + 1) * (W + 1) * Cin * bf
        halo = (H + 1) * (W + 1) * Cin * bf
        wgt = 8 * Cin * 8 * Cout * bf
        bias = 8 * Cout * f32
        out = td * H * W * 8 * Cout * f32
        scratch = (td + 1) * (H + 1) * (W + 1) * Cin * bf
        temps = td * H * W * 8 * Cin * bf + td * H * W * 8 * Cout * f32
        return 2 * (main + halo + wgt + bias + out) + scratch + temps

    divisors = [t for t in range(1, D + 1) if D % t == 0]
    fitting = [t for t in divisors if tile_bytes(t) <= budget_bytes]
    # NOTE: if even TD=1 exceeds the budget (very large H*W*Cout on v7x), a
    # third grid axis tiling H (with a +1 row halo) would be needed.
    return max(fitting) if fitting else 1


def upsample_trans_conv3d(x, weight, bias):
    """nn.ConvTranspose3d(k=3, s=2, p=1, output_padding=1) forward.

    x: (N, Cin, D, H, W) f32, weight: (Cin, Cout, 3, 3, 3), bias: (Cout,)
    returns (N, Cout, 2D, 2H, 2W) f32. MXU operands are bf16, accumulation f32.
    """
    N, Cin, D, H, W = x.shape
    Cout = weight.shape[1]

    # Generation-aware VMEM budget (v5e/v6e: 128 MiB, v7x: 64 MiB per TC).
    try:
        vmem_cap = int(pltpu.get_tpu_info().vmem_capacity_bytes)
    except Exception:
        vmem_cap = 64 * 1024 * 1024
    vmem_limit = min(int(vmem_cap * 0.75), 96 * 1024 * 1024)
    block_budget = int(vmem_limit * 0.6)

    TD = _pick_depth_tile(D, H, W, Cin, Cout, block_budget)
    n_td = D // TD

    # NCDHW -> NDHWC (lane axis = Cin), bf16 operands, +1 zero halo at the far
    # end of every spatial axis (this is exactly the k=3/p=1/output_padding=1
    # boundary behaviour).  No overlapping-tile materialization.
    x_cl = jnp.transpose(x, (0, 2, 3, 4, 1)).astype(jnp.bfloat16)
    x_pad = jnp.pad(x_cl, ((0, 0), (0, 1), (0, 1), (0, 1), (0, 0)))

    w_taps, b_row = _fold_weights(weight, bias, jnp.bfloat16)  # (8, Cin, 8*Cout)

    fuse_k = Cin < 32
    if fuse_k:
        w_arg = w_taps.reshape(8 * Cin, 8 * Cout)
        w_spec = pl.BlockSpec((8 * Cin, 8 * Cout), lambda n, t: (0, 0))
    else:
        w_arg = w_taps
        w_spec = pl.BlockSpec((8, Cin, 8 * Cout), lambda n, t: (0, 0, 0))

    kern = functools.partial(_upsample_kernel, H=H, W=W, Cin=Cin, Cout=Cout,
                             TD=TD, fuse_k=fuse_k)

    in_bytes = x_pad.size * 2
    halo_bytes = (x_pad.size * 2) // max(TD, 1)
    out_bytes = N * D * H * W * 8 * Cout * 4
    w_bytes = w_arg.size * 2 + b_row.size * 4
    cost = pl.CostEstimate(
        flops=int(2 * N * D * H * W * (8 * Cin) * (8 * Cout)),
        transcendentals=0,
        bytes_accessed=int(in_bytes + halo_bytes + out_bytes + w_bytes))

    out_raw = pl.pallas_call(
        kern,
        out_shape=jax.ShapeDtypeStruct((N, D, H * W, 8 * Cout), jnp.float32),
        grid_spec=pltpu.PrefetchScalarGridSpec(
            num_scalar_prefetch=0,
            grid=(N, n_td),
            in_specs=[
                # Main depth tile: TD slices starting at element t*TD.
                pl.BlockSpec((None, TD, H + 1, W + 1, Cin),
                             lambda n, t: (n, t, 0, 0, 0)),
                # +1 depth halo: one slice at element (t+1)*TD (block size 1,
                # so the block index IS the element index).  For the last tile
                # this is the zero-pad slice -> output_padding semantics.
                pl.BlockSpec((None, 1, H + 1, W + 1, Cin),
                             lambda n, t: (n, (t + 1) * TD, 0, 0, 0)),
                w_spec,
                pl.BlockSpec((1, 8 * Cout), lambda n, t: (0, 0)),
            ],
            out_specs=pl.BlockSpec((None, TD, H * W, 8 * Cout),
                                   lambda n, t: (n, t, 0, 0)),
            scratch_shapes=[
                pltpu.VMEM((TD + 1, H + 1, W + 1, Cin), jnp.bfloat16)],
        ),
        compiler_params=pltpu.CompilerParams(
            dimension_semantics=("parallel", "parallel"),
            vmem_limit_bytes=vmem_limit),
        cost_estimate=cost,
    )(x_pad, x_pad, w_arg, b_row)

    # Fused depth-to-space + channels-last -> NCDHW: one XLA transpose pass
    # (the NCDHW conversion is needed anyway, so the pixel-shuffle is free).
    o = out_raw.reshape(N, D, H, W, 2, 2, 2, Cout)
    o = jnp.transpose(o, (0, 7, 1, 4, 2, 5, 3, 6))
    return o.reshape(N, Cout, 2 * D, 2 * H, 2 * W)


def _reference_conv_transpose3d(x, weight, bias):
    """Pure-JAX reference (lax.conv_general_dilated with lhs dilation)."""
    Cout = weight.shape[1]
    w_flip = jnp.transpose(weight[:, :, ::-1, ::-1, ::-1], (1, 0, 2, 3, 4))
    y = lax.conv_general_dilated(
        x, w_flip, window_strides=(1, 1, 1),
        padding=[(1, 2)] * 3, lhs_dilation=(2, 2, 2),
        dimension_numbers=('NCDHW', 'OIDHW', 'NCDHW'))
    return y + bias.reshape(1, Cout, 1, 1, 1)


def _check(x, weight, bias, rtol=2e-3, atol=2e-3):
    out = jax.block_until_ready(upsample_trans_conv3d(x, weight, bias))
    # The kernel uses bf16 MXU operands with f32 accumulation; compare against
    # the f32 reference evaluated on the same bf16-rounded operands so the
    # check validates the kernel math exactly.
    x_r = x.astype(jnp.bfloat16).astype(jnp.float32)
    w_r = weight.astype(jnp.bfloat16).astype(jnp.float32)
    ref = jax.block_until_ready(_reference_conv_transpose3d(x_r, w_r, bias))
    N, Cin, D, H, W = x.shape
    Cout = weight.shape[1]
    assert out.shape == (N, Cout, 2 * D, 2 * H, 2 * W), out.shape
    np.testing.assert_allclose(np.asarray(out), np.asarray(ref),
                               rtol=rtol, atol=atol)


if __name__ == "__main__":
    key = jax.random.PRNGKey(0)
    k1, k2, k3, k4, k5, k6 = jax.random.split(key, 6)

    # Case 1: small Cin (fused-K matmul path), toy Cout.
    N, Cin, Cout, D, H, W = 2, 4, 4, 8, 8, 8
    x = jax.random.normal(k1, (N, Cin, D, H, W), dtype=jnp.float32)
    weight = 0.1 * jax.random.normal(k2, (Cin, Cout, 3, 3, 3), dtype=jnp.float32)
    bias = 0.05 * jax.random.normal(k3, (Cout,), dtype=jnp.float32)
    _check(x, weight, bias)

    # Case 2: Cin >= 32 (8 accumulating tap-matmuls) with lane-dense output
    # (8*Cout = 128).
    N2, Cin2, Cout2, D2 = 1, 32, 16, 4
    x2 = jax.random.normal(k4, (N2, Cin2, D2, H, W), dtype=jnp.float32)
    w2 = 0.05 * jax.random.normal(k5, (Cin2, Cout2, 3, 3, 3), dtype=jnp.float32)
    b2 = 0.05 * jax.random.normal(k6, (Cout2,), dtype=jnp.float32)
    _check(x2, w2, b2)

    print("KERNEL_OK")
</pallas_src>

<mosaic_0001>
module attributes {stable_mosaic.version = 11 : i64} {
  func.func @_upsample_kernel(%arg0: i32, %arg1: i32, %arg2: memref<1x8x9x9x4xbf16, #tpu.memory_space<vmem>>, %arg3: memref<1x1x9x9x4xbf16, #tpu.memory_space<vmem>>, %arg4: memref<32x32xbf16, #tpu.memory_space<vmem>>, %arg5: memref<1x32xf32, #tpu.memory_space<vmem>>, %arg6: memref<1x8x64x32xf32, #tpu.memory_space<vmem>>, %arg7: memref<9x9x9x4xbf16, #tpu.memory_space<vmem>>) attributes {dimension_semantics = [#tpu.dimension_semantics<parallel>, #tpu.dimension_semantics<parallel>], iteration_bounds = array<i64: 2, 1>, scalar_prefetch = 0 : i64, scratch_operands = 1 : i64, tpu.core_type = #tpu.core_type<tc>, window_params = [{transform_indices = @transform_0, window_bounds = array<i64: 1, 8, 9, 9, 4>}, {transform_indices = @transform_1, window_bounds = array<i64: 1, 1, 9, 9, 4>}, {pipeline_mode = #tpu.pipeline_mode<synchronous>, transform_indices = @transform_2, window_bounds = array<i64: 32, 32>}, {pipeline_mode = #tpu.pipeline_mode<synchronous>, transform_indices = @transform_3, window_bounds = array<i64: 1, 32>}, {transform_indices = @transform_4, window_bounds = array<i64: 1, 8, 64, 32>}]} {
    %c0 = arith.constant 0 : index
    %c0_0 = arith.constant 0 : index
    %c0_1 = arith.constant 0 : index
    %c0_2 = arith.constant 0 : index
    %c0_3 = arith.constant 0 : index
    %0 = vector.load %arg2[%c0, %c0_0, %c0_1, %c0_2, %c0_3] : memref<1x8x9x9x4xbf16, #tpu.memory_space<vmem>>, vector<1x8x9x9x4xbf16>
    %1 = vector.shape_cast %0 : vector<1x8x9x9x4xbf16> to vector<8x9x9x4xbf16>
    %c0_4 = arith.constant 0 : index
    %c0_5 = arith.constant 0 : index
    %c0_6 = arith.constant 0 : index
    %c0_7 = arith.constant 0 : index
    %2 = vector.load %arg7[%c0_4, %c0_5, %c0_6, %c0_7] : memref<9x9x9x4xbf16, #tpu.memory_space<vmem>>, vector<8x9x9x4xbf16>
    tpu.vector_store %arg7[%c0_4, %c0_5, %c0_6, %c0_7], %1 {strides = array<i32>} : memref<9x9x9x4xbf16, #tpu.memory_space<vmem>>, vector<8x9x9x4xbf16>,
    %c0_8 = arith.constant 0 : index
    %c0_9 = arith.constant 0 : index
    %c0_10 = arith.constant 0 : index
    %c0_11 = arith.constant 0 : index
    %c0_12 = arith.constant 0 : index
    %3 = vector.load %arg3[%c0_8, %c0_9, %c0_10, %c0_11, %c0_12] : memref<1x1x9x9x4xbf16, #tpu.memory_space<vmem>>, vector<1x1x9x9x4xbf16>
    %4 = vector.shape_cast %3 : vector<1x1x9x9x4xbf16> to vector<1x9x9x4xbf16>
    %c8 = arith.constant 8 : index
    %c0_13 = arith.constant 0 : index
    %c0_14 = arith.constant 0 : index
    %c0_15 = arith.constant 0 : index
    %5 = vector.load %arg7[%c8, %c0_13, %c0_14, %c0_15] : memref<9x9x9x4xbf16, #tpu.memory_space<vmem>>, vector<1x9x9x4xbf16>
    tpu.vector_store %arg7[%c8, %c0_13, %c0_14, %c0_15], %4 {strides = array<i32>} : memref<9x9x9x4xbf16, #tpu.memory_space<vmem>>, vector<1x9x9x4xbf16>,
    %c0_16 = arith.constant 0 : index
    %c0_17 = arith.constant 0 : index
    %c0_18 = arith.constant 0 : index
    %c0_19 = arith.constant 0 : index
    %6 = vector.load %arg7[%c0_16, %c0_17, %c0_18, %c0_19] : memref<9x9x9x4xbf16, #tpu.memory_space<vmem>>, vector<8x8x8x4xbf16>
    %7 = vector.shape_cast %6 : vector<8x8x8x4xbf16> to vector<512x4xbf16>
    %c0_20 = arith.constant 0 : index
    %c0_21 = arith.constant 0 : index
    %c1 = arith.constant 1 : index
    %c0_22 = arith.constant 0 : index
    %8 = vector.load %arg7[%c0_20, %c0_21, %c1, %c0_22] : memref<9x9x9x4xbf16, #tpu.memory_space<vmem>>, vector<8x8x8x4xbf16>
    %9 = vector.shape_cast %8 : vector<8x8x8x4xbf16> to vector<512x4xbf16>
    %c0_23 = arith.constant 0 : index
    %c1_24 = arith.constant 1 : index
    %c0_25 = arith.constant 0 : index
    %c0_26 = arith.constant 0 : index
    %10 = vector.load %arg7[%c0_23, %c1_24, %c0_25, %c0_26] : memref<9x9x9x4xbf16, #tpu.memory_space<vmem>>, vector<8x8x8x4xbf16>
    %11 = vector.shape_cast %10 : vector<8x8x8x4xbf16> to vector<512x4xbf16>
    %c0_27 = arith.constant 0 : index
    %c1_28 = arith.constant 1 : index
    %c1_29 = arith.constant 1 : index
    %c0_30 = arith.constant 0 : index
    %12 = vector.load %arg7[%c0_27, %c1_28, %c1_29, %c0_30] : memref<9x9x9x4xbf16, #tpu.memory_space<vmem>>, vector<8x8x8x4xbf16>
    %13 = vector.shape_cast %12 : vector<8x8x8x4xbf16> to vector<512x4xbf16>
    %c1_31 = arith.constant 1 : index
    %c0_32 = arith.constant 0 : index
    %c0_33 = arith.constant 0 : index
    %c0_34 = arith.constant 0 : index
    %14 = vector.load %arg7[%c1_31, %c0_32, %c0_33, %c0_34] : memref<9x9x9x4xbf16, #tpu.memory_space<vmem>>, vector<8x8x8x4xbf16>
    %15 = vector.shape_cast %14 : vector<8x8x8x4xbf16> to vector<512x4xbf16>
    %c1_35 = arith.constant 1 : index
    %c0_36 = arith.constant 0 : index
    %c1_37 = arith.constant 1 : index
    %c0_38 = arith.constant 0 : index
    %16 = vector.load %arg7[%c1_35, %c0_36, %c1_37, %c0_38] : memref<9x9x9x4xbf16, #tpu.memory_space<vmem>>, vector<8x8x8x4xbf16>
    %17 = vector.shape_cast %16 : vector<8x8x8x4xbf16> to vector<512x4xbf16>
    %c1_39 = arith.constant 1 : index
    %c1_40 = arith.constant 1 : index
    %c0_41 = arith.constant 0 : index
    %c0_42 = arith.constant 0 : index
    %18 = vector.load %arg7[%c1_39, %c1_40, %c0_41, %c0_42] : memref<9x9x9x4xbf16, #tpu.memory_space<vmem>>, vector<8x8x8x4xbf16>
    %19 = vector.shape_cast %18 : vector<8x8x8x4xbf16> to vector<512x4xbf16>
    %c1_43 = arith.constant 1 : index
    %c1_44 = arith.constant 1 : index
    %c1_45 = arith.constant 1 : index
    %c0_46 = arith.constant 0 : index
    %20 = vector.load %arg7[%c1_43, %c1_44, %c1_45, %c0_46] : memref<9x9x9x4xbf16, #tpu.memory_space<vmem>>, vector<8x8x8x4xbf16>
    %21 = vector.shape_cast %20 : vector<8x8x8x4xbf16> to vector<512x4xbf16>
    %22 = tpu.concatenate %7, %9, %11, %13, %15, %17, %19, %21 in 1 : vector<512x4xbf16>, vector<512x4xbf16>, vector<512x4xbf16>, vector<512x4xbf16>, vector<512x4xbf16>, vector<512x4xbf16>, vector<512x4xbf16>, vector<512x4xbf16> -> vector<512x32xbf16>
    %c0_47 = arith.constant 0 : index
    %c0_48 = arith.constant 0 : index
    %23 = vector.load %arg4[%c0_47, %c0_48] : memref<32x32xbf16, #tpu.memory_space<vmem>>, vector<32x32xbf16>
    %cst = arith.constant dense<0.000000e+00> : vector<512x32xf32>
    %24 = tpu.matmul %22, %23, %cst {dimension_numbers = #tpu.dot_dimension_numbers<[1], [0], [0], [1], [0, 0, 1, 1], [], []>} : vector<512x32xbf16>, vector<32x32xbf16>, vector<512x32xf32> -> vector<512x32xf32>
    %c0_49 = arith.constant 0 : index
    %c0_50 = arith.constant 0 : index
    %25 = vector.load %arg5[%c0_49, %c0_50] : memref<1x32xf32, #tpu.memory_space<vmem>>, vector<1x32xf32>
    %26 = vector.broadcast %25 : vector<1x32xf32> to vector<512x32xf32>
    %27 = arith.addf %24, %26 : vector<512x32xf32>
    %28 = vector.shape_cast %27 : vector<512x32xf32> to vector<8x64x32xf32>
    %c0_51 = arith.constant 0 : index
    %c0_52 = arith.constant 0 : index
    %c0_53 = arith.constant 0 : index
    %c0_54 = arith.constant 0 : index
    %29 = vector.load %arg6[%c0_51, %c0_52, %c0_53, %c0_54] : memref<1x8x64x32xf32, #tpu.memory_space<vmem>>, vector<1x8x64x32xf32>
    %30 = vector.shape_cast %29 : vector<1x8x64x32xf32> to vector<8x64x32xf32>
    %31 = vector.shape_cast %28 : vector<8x64x32xf32> to vector<1x8x64x32xf32>
    tpu.vector_store %arg6[%c0_51, %c0_52, %c0_53, %c0_54], %31 {strides = array<i32>} : memref<1x8x64x32xf32, #tpu.memory_space<vmem>>, vector<1x8x64x32xf32>,
    return
  }
  func.func @transform_0(%arg0: i32, %arg1: i32) -> (i32, i32, i32, i32, i32) {
    %c0_i32 = arith.constant 0 : i32
    %c0_i32_0 = arith.constant 0 : i32
    %c0_i32_1 = arith.constant 0 : i32
    %c0_i32_2 = arith.constant 0 : i32
    return %arg0, %arg1, %c0_i32, %c0_i32_0, %c0_i32_1 : i32, i32, i32, i32, i32
  }
  func.func @transform_1(%arg0: i32, %arg1: i32) -> (i32, i32, i32, i32, i32) {
    %c1_i32 = arith.constant 1 : i32
    %0 = arith.addi %arg1, %c1_i32 : i32
    %c8_i32 = arith.constant 8 : i32
    %1 = arith.muli %0, %c8_i32 : i32
    %c0_i32 = arith.constant 0 : i32
    %c0_i32_0 = arith.constant 0 : i32
    %c0_i32_1 = arith.constant 0 : i32
    %c0_i32_2 = arith.constant 0 : i32
    return %arg0, %1, %c0_i32, %c0_i32_0, %c0_i32_1 : i32, i32, i32, i32, i32
  }
  func.func @transform_2(%arg0: i32, %arg1: i32) -> (i32, i32) {
    %c0_i32 = arith.constant 0 : i32
    %c0_i32_0 = arith.constant 0 : i32
    %c0_i32_1 = arith.constant 0 : i32
    return %c0_i32, %c0_i32_0 : i32, i32
  }
  func.func @transform_3(%arg0: i32, %arg1: i32) -> (i32, i32) {
    %c0_i32 = arith.constant 0 : i32
    %c0_i32_0 = arith.constant 0 : i32
    %c0_i32_1 = arith.constant 0 : i32
    return %c0_i32, %c0_i32_0 : i32, i32
  }
  func.func @transform_4(%arg0: i32, %arg1: i32) -> (i32, i32, i32, i32) {
    %c0_i32 = arith.constant 0 : i32
    %c0_i32_0 = arith.constant 0 : i32
    %c0_i32_1 = arith.constant 0 : i32
    return %arg0, %arg1, %c0_i32, %c0_i32_0 : i32, i32, i32, i32
  }
}

</mosaic_0001>

<llo_original>
// kernel: tpu_custom_call.1
$region0: #{tpu_custom_call.1}
  #allocation0 [shape = 'u32[]', space=smem, size = 0x4, offset = 0x4, fixed_abs, tag = 'smem constant byte address 0x4 - core index']
  #allocation1 [shape = 'u32[72,128]{1,0:T(1,128)}', space=vmem, size = 0x9000, scoped, tag = 'internal scratch']
  #allocation2 [shape = 'bf16[9,9,9,4]{3,2,1,0:T(8,128)(2,1)}', space=vmem, size = 0x51000, scoped, tag = 'scratch operand']
  %s0 = inlined_call_operand.vmem [shape: bf16[2,9,9,9,4], index: 0, kind: input, shape index: {}]
  %s1 = inlined_call_operand.vmem [shape: bf16[2,9,9,9,4], index: 1, kind: input, shape index: {}]
  %s2 = inlined_call_operand.vmem [shape: bf16[32,32], index: 2, kind: input, shape index: {}]
  %s3 = inlined_call_operand.vmem [shape: f32[1,32], index: 3, kind: input, shape index: {}]
  %s4 = inlined_call_operand.vmem [shape: f32[2,8,64,32], index: 4, kind: output, shape index: {}]
  %s5 = sld [smem:[#allocation0]]
  $region49: #{tpu_custom_call.1} parent=0
    _
  %s7 = ssub.s32 1, %s5
  %s8 = scalar_select 0, %s7, %s5
  loop: start=0, step=1, limit=4
  $region2: #{tpu_custom_call.1} parent=0 // loop_pre_header
    _
  $region3: #{tpu_custom_call.1} parent=0 // loop_header
    %s10 = sphi 0, %s14
    %p11 = scmp.ge.s32.totalorder %s10, 4
    %s17 = sphi 0, %s29
    %s18 = sphi 0, %s25
    %s19 = sphi 0, %s17
    %s20 = sphi 0, %s18
    %s21 = sphi 0, %s19
    %s22 = sphi 0, %s20
    %s34 = sphi 0, %s36
    %s37 = sphi 0, %s34
    %s38 = sphi 0, %s37
    %s54 = sphi 0, %s38
    %s66 = sphi 0, %s68
    %s69 = sphi 0, %s66
    %s70 = sphi 0, %s69
    %s86 = sphi 0, %s70
    %s90 = sphi 0, %s90
    %s92 = sphi 0, %s90
    %s93 = sphi 0, %s92
    %s107 = sphi 0, %s93
    %s111 = sphi 0, %s111
    %s113 = sphi 0, %s111
    %s114 = sphi 0, %s113
    %s128 = sphi 0, %s114
    %s136 = sphi 0, %s138
    %s139 = sphi 0, %s136
    %s140 = sphi 0, %s139
    %s156 = sphi 0, %s140
  $region4: #{tpu_custom_call.1} parent=0 // loop_header_branch
    %13 = sbr.rel (%p11) target = $region8
  $region5: #{tpu_custom_call.1} parent=0 // loop_body
    %s15 = ssub.s32 %s10, 1
    %s16 = ssub.s32 %s10, 2
    %s23 = sadd.s32 1, %s18
    %p24 = scmp.ge.s32.totalorder %s23, 1
    %s25 = scalar_select %p24, 0, %s23
    %s26 = sadd.s32 1, %s17
    %s27 = scalar_select %p24, %s26, %s17
    %p28 = scmp.ge.s32.totalorder %s27, 2
    %s29 = scalar_select %p28, 0, %s27
    %s30 = ssub.s32 %s17, %s29
    %s31 = ssub.s32 %s18, %s25
    %s32 = sor.u32 %s30, %s31
    %p33 = scmp.eq.s32.totalorder %s32, 0
    %s35 = sadd.s32 %s34, 1
    %s36 = scalar_select %p33, %s34, %s35
    %p39 = pneg %p33
    %p40 = scmp.eq.s32.totalorder %s10, 1
    %p41 = por %p39, %p40
    %p42 = scmp.ne.s32.totalorder %s34, %s37
    %p43 = scmp.eq.s32.totalorder %s10, 0
    %p44 = por %p42, %p43
    %p45 = scmp.ne.s32.totalorder %s34, %s37
    %p46 = scmp.eq.s32.totalorder %s15, 1
    %p47 = por %p45, %p46
    %p48 = scmp.ne.s32.totalorder %s37, %s38
    %p49 = scmp.eq.s32.totalorder %s15, 0
    %p50 = por %p48, %p49
    %p51 = scmp.ne.s32.totalorder %s37, %s38
    %p52 = scmp.eq.s32.totalorder %s16, 1
    %p53 = por %p51, %p52
    %p55 = scmp.ne.s32.totalorder %s38, %s54
    %p56 = scmp.eq.s32.totalorder %s16, 0
    %p57 = por %p55, %p56
    %s58 = sadd.s32 %s18, 1
    %s59 = smul.u32 %s58, 8
    %s60 = sadd.s32 %s25, 1
    %s61 = smul.u32 %s60, 8
    %s62 = ssub.s32 %s17, %s29
    %s63 = ssub.s32 %s59, %s61
    %s64 = sor.u32 %s62, %s63
    %p65 = scmp.eq.s32.totalorder %s64, 0
    %s67 = sadd.s32 %s66, 1
    %s68 = scalar_select %p65, %s66, %s67
    %p71 = pneg %p65
    %p72 = scmp.eq.s32.totalorder %s10, 1
    %p73 = por %p71, %p72
    %p74 = scmp.ne.s32.totalorder %s66, %s69
    %p75 = scmp.eq.s32.totalorder %s10, 0
    %p76 = por %p74, %p75
    %p77 = scmp.ne.s32.totalorder %s66, %s69
    %p78 = scmp.eq.s32.totalorder %s15, 1
    %p79 = por %p77, %p78
    %p80 = scmp.ne.s32.totalorder %s69, %s70
    %p81 = scmp.eq.s32.totalorder %s15, 0
    %p82 = por %p80, %p81
    %p83 = scmp.ne.s32.totalorder %s69, %s70
    %p84 = scmp.eq.s32.totalorder %s16, 1
    %p85 = por %p83, %p84
    %p87 = scmp.ne.s32.totalorder %s70, %s86
    %p88 = scmp.eq.s32.totalorder %s16, 0
    %p89 = por %p87, %p88
    %s91 = sadd.s32 %s90, 1
    %p94 = scmp.eq.s32.totalorder %s10, 1
    %p95 = scmp.ne.s32.totalorder %s90, %s92
    %p96 = scmp.eq.s32.totalorder %s10, 0
    %p97 = por %p95, %p96
    %p98 = scmp.ne.s32.totalorder %s90, %s92
    %p99 = scmp.eq.s32.totalorder %s15, 1
    %p100 = por %p98, %p99
    %p101 = scmp.ne.s32.totalorder %s92, %s93
    %p102 = scmp.eq.s32.totalorder %s15, 0
    %p103 = por %p101, %p102
    %p104 = scmp.ne.s32.totalorder %s92, %s93
    %p105 = scmp.eq.s32.totalorder %s16, 1
    %p106 = por %p104, %p105
    %p108 = scmp.ne.s32.totalorder %s93, %s107
    %p109 = scmp.eq.s32.totalorder %s16, 0
    %p110 = por %p108, %p109
    %s112 = sadd.s32 %s111, 1
    %p115 = scmp.eq.s32.totalorder %s10, 1
    %p116 = scmp.ne.s32.totalorder %s111, %s113
    %p117 = scmp.eq.s32.totalorder %s10, 0
    %p118 = por %p116, %p117
    %p119 = scmp.ne.s32.totalorder %s111, %s113
    %p120 = scmp.eq.s32.totalorder %s15, 1
    %p121 = por %p119, %p120
    %p122 = scmp.ne.s32.totalorder %s113, %s114
    %p123 = scmp.eq.s32.totalorder %s15, 0
    %p124 = por %p122, %p123
    %p125 = scmp.ne.s32.totalorder %s113, %s114
    %p126 = scmp.eq.s32.totalorder %s16, 1
    %p127 = por %p125, %p126
    %p129 = scmp.ne.s32.totalorder %s114, %s128
    %p130 = scmp.eq.s32.totalorder %s16, 0
    %p131 = por %p129, %p130
    %s132 = ssub.s32 %s17, %s29
    %s133 = ssub.s32 %s18, %s25
    %s134 = sor.u32 %s132, %s133
    %p135 = scmp.eq.s32.totalorder %s134, 0
    %s137 = sadd.s32 %s136, 1
    %s138 = scalar_select %p135, %s136, %s137
    %p141 = pneg %p135
    %p142 = scmp.eq.s32.totalorder %s10, 1
    %p143 = por %p141, %p142
    %p144 = scmp.ne.s32.totalorder %s136, %s139
    %p145 = scmp.eq.s32.totalorder %s10, 0
    %p146 = por %p144, %p145
    %p147 = scmp.ne.s32.totalorder %s136, %s139
    %p148 = scmp.eq.s32.totalorder %s15, 1
    %p149 = por %p147, %p148
    %p150 = scmp.ne.s32.totalorder %s139, %s140
    %p151 = scmp.eq.s32.totalorder %s15, 0
    %p152 = por %p150, %p151
    %p153 = scmp.ne.s32.totalorder %s139, %s140
    %p154 = scmp.eq.s32.totalorder %s16, 1
    %p155 = por %p153, %p154
    %p157 = scmp.ne.s32.totalorder %s140, %s156
    %p158 = scmp.eq.s32.totalorder %s16, 0
    %p159 = por %p157, %p158
    %p160 = scmp.le.s32.totalorder 1, %s10
    %p161 = scmp.lt.s32.totalorder %s10, 3
    %p162 = pnand %p160, %p161
    %p163 = pneg %p162
    // Predicated region
    $region9: #{tpu_custom_call.1} parent=5 // pred_check
      _
    $region10: #{tpu_custom_call.1} parent=5 // pred_check_branch
      %165 = sbr.rel (%p162) target = $region12
    $region11: #{tpu_custom_call.1} parent=5 // pred_region
      %s166 = ssub.s32 %s10, 1
      // Predicated region
      $region13: #{tpu_custom_call.1} parent=11 // pred_check
        %p167 = pneg %p103
      $region14: #{tpu_custom_call.1} parent=11 // pred_check_branch
        %169 = sbr.rel (%p167) target = $region16
      $region15: #{tpu_custom_call.1} parent=11 // pred_region
        _
      $region16: #{tpu_custom_call.1} parent=11 // pred_fallthru
        _
      // Predicated region
      $region17: #{tpu_custom_call.1} parent=11 // pred_check
        %p170 = pneg %p124
      $region18: #{tpu_custom_call.1} parent=11 // pred_check_branch
        %172 = sbr.rel (%p170) target = $region20
      $region19: #{tpu_custom_call.1} parent=11 // pred_region
        _
      $region20: #{tpu_custom_call.1} parent=11 // pred_fallthru
        _
    $region12: #{tpu_custom_call.1} parent=5 // pred_fallthru
      _
    %p173 = scmp.lt.s32.totalorder %s10, 2
    // Predicated region
    $region21: #{tpu_custom_call.1} parent=5 // pred_check
      %p174 = pneg %p173
    $region22: #{tpu_custom_call.1} parent=5 // pred_check_branch
      %176 = sbr.rel (%p174) target = $region24
    $region23: #{tpu_custom_call.1} parent=5 // pred_region
      // Predicated region
      $region25: #{tpu_custom_call.1} parent=23 // pred_check
        %p177 = pneg %p44
      $region26: #{tpu_custom_call.1} parent=23 // pred_check_branch
        %179 = sbr.rel (%p177) target = $region28
      $region27: #{tpu_custom_call.1} parent=23 // pred_region
        %s180 = smul.u32 8, %s18
        %s181 = ssub.s32 9, %s180
        %p182 = scmp.lt.s32.totalorder %s181, 8
        %s183 = scalar_select %p182, %s181, 8
        %s184 = smul.u32 4, %s183
        %s185 = smul.u32 %s184, 9
        %s186 = smul.u32 %s185, 2
        %p187 = scmp.lt.s32.totalorder %s17, 1
        %s188 = scalar_select %p187, %s17, 1
        %p189 = scmp.lt.s32.totalorder %s180, 8
        %s190 = scalar_select %p189, %s180, 8
        %s191 = smul.addr %s190, 18
        %s192 = smul.addr %s188, 162
        %s193 = sadd.s32 %s191, %s192
        %s194 = smul.addr %s193, 4
        %s195 = scalar_lea.vmem %s0, %s194
        %s196 = smul.u32 8, %s18
        %s197 = ssub.s32 9, %s196
        %p198 = scmp.lt.s32.totalorder %s197, 8
        %s199 = scalar_select %p198, %s197, 8
        %s200 = smul.u32 4, %s199
        %s201 = smul.u32 %s200, 9
        %s202 = smul.u32 %s201, 2
      $region28: #{tpu_custom_call.1} parent=23 // pred_fallthru
        _
      // Predicated region
      $region29: #{tpu_custom_call.1} parent=23 // pred_check
        %p203 = pneg %p76
      $region30: #{tpu_custom_call.1} parent=23 // pred_check_branch
        %205 = sbr.rel (%p203) target = $region32
      $region31: #{tpu_custom_call.1} parent=23 // pred_region
        %s206 = sadd.s32 %s18, 1
        %s207 = smul.u32 %s206, 8
        %p208 = scmp.lt.s32.totalorder %s17, 1
        %s209 = scalar_select %p208, %s17, 1
        %p210 = scmp.lt.s32.totalorder %s207, 8
        %s211 = scalar_select %p210, %s207, 8
        %s212 = smul.addr %s211, 18
        %s213 = smul.addr %s209, 162
        %s214 = sadd.s32 %s212, %s213
        %s215 = smul.addr %s214, 4
        %s216 = scalar_lea.vmem %s1, %s215
        %s217 = sadd.s32 %s18, 1
        %s218 = smul.u32 %s217, 8
      $region32: #{tpu_custom_call.1} parent=23 // pred_fallthru
        _
    $region24: #{tpu_custom_call.1} parent=5 // pred_fallthru
      _
    %p219 = scmp.le.s32.totalorder 1, %s10
    %p220 = scmp.lt.s32.totalorder %s10, 3
    %p221 = pnand %p219, %p220
    %p222 = pneg %p221
    // Predicated region
    $region33: #{tpu_custom_call.1} parent=5 // pred_check
      _
    $region34: #{tpu_custom_call.1} parent=5 // pred_check_branch
      %224 = sbr.rel (%p221) target = $region36
    $region35: #{tpu_custom_call.1} parent=5 // pred_region
      %s225 = ssub.s32 %s10, 1
      %s226 = smul.u32 8, %s20
      %s227 = ssub.s32 9, %s226
      %p228 = scmp.lt.s32.totalorder %s227, 8
      %s229 = scalar_select %p228, %s227, 8
      %s230 = smul.u32 4, %s229
      %s231 = smul.u32 %s230, 9
      %s232 = smul.u32 %s231, 2
      %p233 = scmp.lt.s32.totalorder %s19, 1
      %s234 = scalar_select %p233, %s19, 1
      %p235 = scmp.lt.s32.totalorder %s226, 8
      %s236 = scalar_select %p235, %s226, 8
      %s237 = smul.addr %s236, 18
      %s238 = smul.addr %s234, 162
      %s239 = sadd.s32 %s237, %s238
      %s240 = smul.addr %s239, 4
      %s241 = scalar_lea.vmem %s0, %s240
      %p242 = pneg %p50
      %p243 = pneg %p47
      %s244 = sadd.s32 %s20, 1
      %s245 = smul.u32 %s244, 8
      %p246 = scmp.lt.s32.totalorder %s19, 1
      %s247 = scalar_select %p246, %s19, 1
      %p248 = scmp.lt.s32.totalorder %s245, 8
      %s249 = scalar_select %p248, %s245, 8
      %s250 = smul.addr %s249, 18
      %s251 = smul.addr %s247, 162
      %s252 = sadd.s32 %s250, %s251
      %s253 = smul.addr %s252, 4
      %s254 = scalar_lea.vmem %s1, %s253
      %p255 = pneg %p82
      %p256 = pneg %p79
      %p257 = pneg %p103
      %p258 = pneg %p100
      %p259 = pneg %p124
      %p260 = pneg %p121
      %p261 = pneg %p152
      %p262 = pneg %p149
      %s263 = smul.u32 8, %s20
      %p264 = scmp.lt.s32.totalorder %s19, 1
      %s265 = scalar_select %p264, %s19, 1
      %p266 = scmp.lt.s32.totalorder %s263, 7
      %s267 = scalar_select %p266, %s263, 7
      %s268 = smul.addr %s267, 8
      %s269 = smul.addr %s265, 64
      %s270 = sadd.s32 %s268, %s269
      %s271 = smul.addr %s270, 8
      %s272 = scalar_lea.vmem %s4, %s271
      %s273 = smul.u32 8, %s20
      %s274 = ssub.s32 9, %s273
      %p275 = scmp.lt.s32.totalorder %s274, 8
      %s276 = scalar_select %p275, %s274, 8
      %s277 = smul.u32 4, %s276
      %s278 = smul.u32 %s277, 9
      %s279 = smul.u32 %s278, 2
      %p280 = scmp.lt.s32.totalorder %s19, 1
      %s281 = scalar_select %p280, %s19, 1
      %p282 = scmp.lt.s32.totalorder %s273, 8
      %s283 = scalar_select %p282, %s273, 8
      %s284 = smul.addr %s283, 18
      %s285 = smul.addr %s281, 162
      %s286 = sadd.s32 %s284, %s285
      %s287 = smul.addr %s286, 4
      %s288 = scalar_lea.vmem %s0, %s287
      %s289 = smul.u32 8, %s20
      %s290 = ssub.s32 9, %s289
      %p291 = scmp.lt.s32.totalorder %s290, 8
      %s292 = scalar_select %p291, %s290, 8
      %s293 = smul.u32 4, %s292
      %s294 = smul.u32 %s293, 9
      %s295 = smul.u32 %s294, 2
      %s296 = sadd.s32 %s20, 1
      %s297 = smul.u32 %s296, 8
      %p298 = scmp.lt.s32.totalorder %s19, 1
      %s299 = scalar_select %p298, %s19, 1
      %p300 = scmp.lt.s32.totalorder %s297, 8
      %s301 = scalar_select %p300, %s297, 8
      %s302 = smul.addr %s301, 18
      %s303 = smul.addr %s299, 162
      %s304 = sadd.s32 %s302, %s303
      %s305 = smul.addr %s304, 4
      %s306 = scalar_lea.vmem %s1, %s305
      %s307 = sadd.s32 %s20, 1
      %s308 = smul.u32 %s307, 8
      %s309 = smul.u32 8, %s20
      %p310 = scmp.lt.s32.totalorder %s19, 1
      %s311 = scalar_select %p310, %s19, 1
      %p312 = scmp.lt.s32.totalorder %s309, 7
      %s313 = scalar_select %p312, %s309, 7
      %s314 = smul.addr %s313, 8
      %s315 = smul.addr %s311, 64
      %s316 = sadd.s32 %s314, %s315
      %s317 = smul.addr %s316, 8
      %s318 = scalar_lea.vmem %s4, %s317
      %s319 = smul.u32 8, %s20
      %v321 = vld [vmem:[%s288] sm:$0xf]
      %v322 = vld [vmem:[%s288 + $0x4] sm:$0x1]
      %v323 = vld [vmem:[%s288 + $0x8] sm:$0xf]
      %v324 = vld [vmem:[%s288 + $0xc] sm:$0x1]
      %v325 = vld [vmem:[%s288 + $0x10] sm:$0xf]
      %v326 = vld [vmem:[%s288 + $0x14] sm:$0x1]
      %v327 = vld [vmem:[%s288 + $0x18] sm:$0xf]
      %v328 = vld [vmem:[%s288 + $0x1c] sm:$0x1]
      %v329 = vld [vmem:[%s288 + $0x20] sm:$0xf]
      %v330 = vld [vmem:[%s288 + $0x24] sm:$0x1]
      %v331 = vld [vmem:[%s288 + $0x28] sm:$0xf]
      %v332 = vld [vmem:[%s288 + $0x2c] sm:$0x1]
      %v333 = vld [vmem:[%s288 + $0x30] sm:$0xf]
      %v334 = vld [vmem:[%s288 + $0x34] sm:$0x1]
      %v335 = vld [vmem:[%s288 + $0x38] sm:$0xf]
      %v336 = vld [vmem:[%s288 + $0x3c] sm:$0x1]
      %v337 = vld [vmem:[%s288 + $0x40] sm:$0xf]
      %v338 = vld [vmem:[%s288 + $0x44] sm:$0x1]
      %v339 = vld [vmem:[%s288 + $0x48] sm:$0xf]
      %v340 = vld [vmem:[%s288 + $0x4c] sm:$0x1]
      %v341 = vld [vmem:[%s288 + $0x50] sm:$0xf]
      %v342 = vld [vmem:[%s288 + $0x54] sm:$0x1]
      %v343 = vld [vmem:[%s288 + $0x58] sm:$0xf]
      %v344 = vld [vmem:[%s288 + $0x5c] sm:$0x1]
      %v345 = vld [vmem:[%s288 + $0x60] sm:$0xf]
      %v346 = vld [vmem:[%s288 + $0x64] sm:$0x1]
      %v347 = vld [vmem:[%s288 + $0x68] sm:$0xf]
      %v348 = vld [vmem:[%s288 + $0x6c] sm:$0x1]
      %v349 = vld [vmem:[%s288 + $0x70] sm:$0xf]
      %v350 = vld [vmem:[%s288 + $0x74] sm:$0x1]
      %v351 = vld [vmem:[%s288 + $0x78] sm:$0xf]
      %v352 = vld [vmem:[%s288 + $0x7c] sm:$0x1]
      %v353 = vld [vmem:[%s288 + $0x80] sm:$0xf]
      %v354 = vld [vmem:[%s288 + $0x84] sm:$0x1]
      %v355 = vld [vmem:[%s288 + $0x88] sm:$0xf]
      %v356 = vld [vmem:[%s288 + $0x8c] sm:$0x1]
      %v357 = vld [vmem:[%s288 + $0x90] sm:$0xf]
      %v358 = vld [vmem:[%s288 + $0x94] sm:$0x1]
      %v359 = vld [vmem:[%s288 + $0x98] sm:$0xf]
      %v360 = vld [vmem:[%s288 + $0x9c] sm:$0x1]
      %v361 = vld [vmem:[%s288 + $0xa0] sm:$0xf]
      %v362 = vld [vmem:[%s288 + $0xa4] sm:$0x1]
      %v363 = vld [vmem:[%s288 + $0xa8] sm:$0xf]
      %v364 = vld [vmem:[%s288 + $0xac] sm:$0x1]
      %v365 = vld [vmem:[%s288 + $0xb0] sm:$0xf]
      %v366 = vld [vmem:[%s288 + $0xb4] sm:$0x1]
      %v367 = vld [vmem:[%s288 + $0xb8] sm:$0xf]
      %v368 = vld [vmem:[%s288 + $0xbc] sm:$0x1]
      %v369 = vld [vmem:[%s288 + $0xc0] sm:$0xf]
      %v370 = vld [vmem:[%s288 + $0xc4] sm:$0x1]
      %v371 = vld [vmem:[%s288 + $0xc8] sm:$0xf]
      %v372 = vld [vmem:[%s288 + $0xcc] sm:$0x1]
      %v373 = vld [vmem:[%s288 + $0xd0] sm:$0xf]
      %v374 = vld [vmem:[%s288 + $0xd4] sm:$0x1]
      %v375 = vld [vmem:[%s288 + $0xd8] sm:$0xf]
      %v376 = vld [vmem:[%s288 + $0xdc] sm:$0x1]
      %v377 = vld [vmem:[%s288 + $0xe0] sm:$0xf]
      %v378 = vld [vmem:[%s288 + $0xe4] sm:$0x1]
      %v379 = vld [vmem:[%s288 + $0xe8] sm:$0xf]
      %v380 = vld [vmem:[%s288 + $0xec] sm:$0x1]
      %v381 = vld [vmem:[%s288 + $0xf0] sm:$0xf]
      %v382 = vld [vmem:[%s288 + $0xf4] sm:$0x1]
      %v383 = vld [vmem:[%s288 + $0xf8] sm:$0xf]
      %v384 = vld [vmem:[%s288 + $0xfc] sm:$0x1]
      %v385 = vld [vmem:[%s288 + $0x100] sm:$0xf]
      %v386 = vld [vmem:[%s288 + $0x104] sm:$0x1]
      %v387 = vld [vmem:[%s288 + $0x108] sm:$0xf]
      %v388 = vld [vmem:[%s288 + $0x10c] sm:$0x1]
      %v389 = vld [vmem:[%s288 + $0x110] sm:$0xf]
      %v390 = vld [vmem:[%s288 + $0x114] sm:$0x1]
      %v391 = vld [vmem:[%s288 + $0x118] sm:$0xf]
      %v392 = vld [vmem:[%s288 + $0x11c] sm:$0x1]
      %v393 = vld [vmem:[%s288 + $0x120] sm:$0xf]
      %v394 = vld [vmem:[%s288 + $0x124] sm:$0x1]
      %v395 = vld [vmem:[%s288 + $0x128] sm:$0xf]
      %v396 = vld [vmem:[%s288 + $0x12c] sm:$0x1]
      %v397 = vld [vmem:[%s288 + $0x130] sm:$0xf]
      %v398 = vld [vmem:[%s288 + $0x134] sm:$0x1]
      %v399 = vld [vmem:[%s288 + $0x138] sm:$0xf]
      %v400 = vld [vmem:[%s288 + $0x13c] sm:$0x1]
      %v401 = vld [vmem:[%s288 + $0x140] sm:$0xf]
      %v402 = vld [vmem:[%s288 + $0x144] sm:$0x1]
      %v403 = vld [vmem:[%s288 + $0x148] sm:$0xf]
      %v404 = vld [vmem:[%s288 + $0x14c] sm:$0x1]
      %v405 = vld [vmem:[%s288 + $0x150] sm:$0xf]
      %v406 = vld [vmem:[%s288 + $0x154] sm:$0x1]
      %v407 = vld [vmem:[%s288 + $0x158] sm:$0xf]
      %v408 = vld [vmem:[%s288 + $0x15c] sm:$0x1]
      %v409 = vld [vmem:[%s288 + $0x160] sm:$0xf]
      %v410 = vld [vmem:[%s288 + $0x164] sm:$0x1]
      %v411 = vld [vmem:[%s288 + $0x168] sm:$0xf]
      %v412 = vld [vmem:[%s288 + $0x16c] sm:$0x1]
      %v413 = vld [vmem:[%s288 + $0x170] sm:$0xf]
      %v414 = vld [vmem:[%s288 + $0x174] sm:$0x1]
      %v415 = vld [vmem:[%s288 + $0x178] sm:$0xf]
      %v416 = vld [vmem:[%s288 + $0x17c] sm:$0x1]
      %v417 = vld [vmem:[%s288 + $0x180] sm:$0xf]
      %v418 = vld [vmem:[%s288 + $0x184] sm:$0x1]
      %v419 = vld [vmem:[%s288 + $0x188] sm:$0xf]
      %v420 = vld [vmem:[%s288 + $0x18c] sm:$0x1]
      %v421 = vld [vmem:[%s288 + $0x190] sm:$0xf]
      %v422 = vld [vmem:[%s288 + $0x194] sm:$0x1]
      %v423 = vld [vmem:[%s288 + $0x198] sm:$0xf]
      %v424 = vld [vmem:[%s288 + $0x19c] sm:$0x1]
      %v425 = vld [vmem:[%s288 + $0x1a0] sm:$0xf]
      %v426 = vld [vmem:[%s288 + $0x1a4] sm:$0x1]
      %v427 = vld [vmem:[%s288 + $0x1a8] sm:$0xf]
      %v428 = vld [vmem:[%s288 + $0x1ac] sm:$0x1]
      %v429 = vld [vmem:[%s288 + $0x1b0] sm:$0xf]
      %v430 = vld [vmem:[%s288 + $0x1b4] sm:$0x1]
      %v431 = vld [vmem:[%s288 + $0x1b8] sm:$0xf]
      %v432 = vld [vmem:[%s288 + $0x1bc] sm:$0x1]
      %v433 = vld [vmem:[%s288 + $0x1c0] sm:$0xf]
      %v434 = vld [vmem:[%s288 + $0x1c4] sm:$0x1]
      %v435 = vld [vmem:[%s288 + $0x1c8] sm:$0xf]
      %v436 = vld [vmem:[%s288 + $0x1cc] sm:$0x1]
      %v437 = vld [vmem:[%s288 + $0x1d0] sm:$0xf]
      %v438 = vld [vmem:[%s288 + $0x1d4] sm:$0x1]
      %v439 = vld [vmem:[%s288 + $0x1d8] sm:$0xf]
      %v440 = vld [vmem:[%s288 + $0x1dc] sm:$0x1]
      %v441 = vld [vmem:[%s288 + $0x1e0] sm:$0xf]
      %v442 = vld [vmem:[%s288 + $0x1e4] sm:$0x1]
      %v443 = vld [vmem:[%s288 + $0x1e8] sm:$0xf]
      %v444 = vld [vmem:[%s288 + $0x1ec] sm:$0x1]
      %v445 = vld [vmem:[%s288 + $0x1f0] sm:$0xf]
      %v446 = vld [vmem:[%s288 + $0x1f4] sm:$0x1]
      %v447 = vld [vmem:[%s288 + $0x1f8] sm:$0xf]
      %v448 = vld [vmem:[%s288 + $0x1fc] sm:$0x1]
      %v449 = vld [vmem:[%s288 + $0x200] sm:$0xf]
      %v450 = vld [vmem:[%s288 + $0x204] sm:$0x1]
      %v451 = vld [vmem:[%s288 + $0x208] sm:$0xf]
      %v452 = vld [vmem:[%s288 + $0x20c] sm:$0x1]
      %v453 = vld [vmem:[%s288 + $0x210] sm:$0xf]
      %v454 = vld [vmem:[%s288 + $0x214] sm:$0x1]
      %v455 = vld [vmem:[%s288 + $0x218] sm:$0xf]
      %v456 = vld [vmem:[%s288 + $0x21c] sm:$0x1]
      %v457 = vld [vmem:[%s288 + $0x220] sm:$0xf]
      %v458 = vld [vmem:[%s288 + $0x224] sm:$0x1]
      %v459 = vld [vmem:[%s288 + $0x228] sm:$0xf]
      %v460 = vld [vmem:[%s288 + $0x22c] sm:$0x1]
      %v461 = vld [vmem:[%s288 + $0x230] sm:$0xf]
      %v462 = vld [vmem:[%s288 + $0x234] sm:$0x1]
      %v463 = vld [vmem:[%s288 + $0x238] sm:$0xf]
      %v464 = vld [vmem:[%s288 + $0x23c] sm:$0x1]
      %vm465 = vcmask 27648
      %466 = vst.msk [vmem:[#allocation2] sm:$0xf] %vm465, %v321
      %vm467 = vcmask 24576
      %vm468 = vsmask.f32 256
      %vm469 = vmand %vm467, %vm468
      %v470 = vld [vmem:[#allocation2 + $0x4] sm:$0x1]
      %v471 = vsel %vm469, %v322, %v470
      %472 = vst [vmem:[#allocation2 + $0x4] sm:$0x1] %v471
      %473 = vst.msk [vmem:[#allocation2 + $0x8] sm:$0xf] %vm465, %v323
      %v474 = vld [vmem:[#allocation2 + $0xc] sm:$0x1]
      %v475 = vsel %vm469, %v324, %v474
      %476 = vst [vmem:[#allocation2 + $0xc] sm:$0x1] %v475
      %477 = vst.msk [vmem:[#allocation2 + $0x10] sm:$0xf] %vm465, %v325
      %v478 = vld [vmem:[#allocation2 + $0x14] sm:$0x1]
      %v479 = vsel %vm469, %v326, %v478
      %480 = vst [vmem:[#allocation2 + $0x14] sm:$0x1] %v479
      %481 = vst.msk [vmem:[#allocation2 + $0x18] sm:$0xf] %vm465, %v327
      %v482 = vld [vmem:[#allocation2 + $0x1c] sm:$0x1]
      %v483 = vsel %vm469, %v328, %v482
      %484 = vst [vmem:[#allocation2 + $0x1c] sm:$0x1] %v483
      %485 = vst.msk [vmem:[#allocation2 + $0x20] sm:$0xf] %vm465, %v329
      %v486 = vld [vmem:[#allocation2 + $0x24] sm:$0x1]
      %v487 = vsel %vm469, %v330, %v486
      %488 = vst [vmem:[#allocation2 + $0x24] sm:$0x1] %v487
      %489 = vst.msk [vmem:[#allocation2 + $0x28] sm:$0xf] %vm465, %v331
      %v490 = vld [vmem:[#allocation2 + $0x2c] sm:$0x1]
      %v491 = vsel %vm469, %v332, %v490
      %492 = vst [vmem:[#allocation2 + $0x2c] sm:$0x1] %v491
      %493 = vst.msk [vmem:[#allocation2 + $0x30] sm:$0xf] %vm465, %v333
      %v494 = vld [vmem:[#allocation2 + $0x34] sm:$0x1]
      %v495 = vsel %vm469, %v334, %v494
      %496 = vst [vmem:[#allocation2 + $0x34] sm:$0x1] %v495
      %497 = vst.msk [vmem:[#allocation2 + $0x38] sm:$0xf] %vm465, %v335
      %v498 = vld [vmem:[#allocation2 + $0x3c] sm:$0x1]
      %v499 = vsel %vm469, %v336, %v498
      %500 = vst [vmem:[#allocation2 + $0x3c] sm:$0x1] %v499
      %501 = vst.msk [vmem:[#allocation2 + $0x40] sm:$0xf] %vm465, %v337
      %v502 = vld [vmem:[#allocation2 + $0x44] sm:$0x1]
      %v503 = vsel %vm469, %v338, %v502
      %504 = vst [vmem:[#allocation2 + $0x44] sm:$0x1] %v503
      %505 = vst.msk [vmem:[#allocation2 + $0x48] sm:$0xf] %vm465, %v339
      %v506 = vld [vmem:[#allocation2 + $0x4c] sm:$0x1]
      %v507 = vsel %vm469, %v340, %v506
      %508 = vst [vmem:[#allocation2 + $0x4c] sm:$0x1] %v507
      %509 = vst.msk [vmem:[#allocation2 + $0x50] sm:$0xf] %vm465, %v341
      %v510 = vld [vmem:[#allocation2 + $0x54] sm:$0x1]
      %v511 = vsel %vm469, %v342, %v510
      %512 = vst [vmem:[#allocation2 + $0x54] sm:$0x1] %v511
      %513 = vst.msk [vmem:[#allocation2 + $0x58] sm:$0xf] %vm465, %v343
      %v514 = vld [vmem:[#allocation2 + $0x5c] sm:$0x1]
      %v515 = vsel %vm469, %v344, %v514
      %516 = vst [vmem:[#allocation2 + $0x5c] sm:$0x1] %v515
      %517 = vst.msk [vmem:[#allocation2 + $0x60] sm:$0xf] %vm465, %v345
      %v518 = vld [vmem:[#allocation2 + $0x64] sm:$0x1]
      %v519 = vsel %vm469, %v346, %v518
      %520 = vst [vmem:[#allocation2 + $0x64] sm:$0x1] %v519
      %521 = vst.msk [vmem:[#allocation2 + $0x68] sm:$0xf] %vm465, %v347
      %v522 = vld [vmem:[#allocation2 + $0x6c] sm:$0x1]
      %v523 = vsel %vm469, %v348, %v522
      %524 = vst [vmem:[#allocation2 + $0x6c] sm:$0x1] %v523
      %525 = vst.msk [vmem:[#allocation2 + $0x70] sm:$0xf] %vm465, %v349
      %v526 = vld [vmem:[#allocation2 + $0x74] sm:$0x1]
      %v527 = vsel %vm469, %v350, %v526
      %528 = vst [vmem:[#allocation2 + $0x74] sm:$0x1] %v527
      %529 = vst.msk [vmem:[#allocation2 + $0x78] sm:$0xf] %vm465, %v351
      %v530 = vld [vmem:[#allocation2 + $0x7c] sm:$0x1]
      %v531 = vsel %vm469, %v352, %v530
      %532 = vst [vmem:[#allocation2 + $0x7c] sm:$0x1] %v531
      %533 = vst.msk [vmem:[#allocation2 + $0x80] sm:$0xf] %vm465, %v353
      %v534 = vld [vmem:[#allocation2 + $0x84] sm:$0x1]
      %v535 = vsel %vm469, %v354, %v534
      %536 = vst [vmem:[#allocation2 + $0x84] sm:$0x1] %v535
      %537 = vst.msk [vmem:[#allocation2 + $0x88] sm:$0xf] %vm465, %v355
      %v538 = vld [vmem:[#allocation2 + $0x8c] sm:$0x1]
      %v539 = vsel %vm469, %v356, %v538
      %540 = vst [vmem:[#allocation2 + $0x8c] sm:$0x1] %v539
      %541 = vst.msk [vmem:[#allocation2 + $0x90] sm:$0xf] %vm465, %v357
      %v542 = vld [vmem:[#allocation2 + $0x94] sm:$0x1]
      %v543 = vsel %vm469, %v358, %v542
      %544 = vst [vmem:[#allocation2 + $0x94] sm:$0x1] %v543
      %545 = vst.msk [vmem:[#allocation2 + $0x98] sm:$0xf] %vm465, %v359
      %v546 = vld [vmem:[#allocation2 + $0x9c] sm:$0x1]
      %v547 = vsel %vm469, %v360, %v546
      %548 = vst [vmem:[#allocation2 + $0x9c] sm:$0x1] %v547
      %549 = vst.msk [vmem:[#allocation2 + $0xa0] sm:$0xf] %vm465, %v361
      %v550 = vld [vmem:[#allocation2 + $0xa4] sm:$0x1]
      %v551 = vsel %vm469, %v362, %v550
      %552 = vst [vmem:[#allocation2 + $0xa4] sm:$0x1] %v551
      %553 = vst.msk [vmem:[#allocation2 + $0xa8] sm:$0xf] %vm465, %v363
      %v554 = vld [vmem:[#allocation2 + $0xac] sm:$0x1]
      %v555 = vsel %vm469, %v364, %v554
      %556 = vst [vmem:[#allocation2 + $0xac] sm:$0x1] %v555
      %557 = vst.msk [vmem:[#allocation2 + $0xb0] sm:$0xf] %vm465, %v365
      %v558 = vld [vmem:[#allocation2 + $0xb4] sm:$0x1]
      %v559 = vsel %vm469, %v366, %v558
      %560 = vst [vmem:[#allocation2 + $0xb4] sm:$0x1] %v559
      %561 = vst.msk [vmem:[#allocation2 + $0xb8] sm:$0xf] %vm465, %v367
      %v562 = vld [vmem:[#allocation2 + $0xbc] sm:$0x1]
      %v563 = vsel %vm469, %v368, %v562
      %564 = vst [vmem:[#allocation2 + $0xbc] sm:$0x1] %v563
      %565 = vst.msk [vmem:[#allocation2 + $0xc0] sm:$0xf] %vm465, %v369
      %v566 = vld [vmem:[#allocation2 + $0xc4] sm:$0x1]
      %v567 = vsel %vm469, %v370, %v566
      %568 = vst [vmem:[#allocation2 + $0xc4] sm:$0x1] %v567
      %569 = vst.msk [vmem:[#allocation2 + $0xc8] sm:$0xf] %vm465, %v371
      %v570 = vld [vmem:[#allocation2 + $0xcc] sm:$0x1]
      %v571 = vsel %vm469, %v372, %v570
      %572 = vst [vmem:[#allocation2 + $0xcc] sm:$0x1] %v571
      %573 = vst.msk [vmem:[#allocation2 + $0xd0] sm:$0xf] %vm465, %v373
      %v574 = vld [vmem:[#allocation2 + $0xd4] sm:$0x1]
      %v575 = vsel %vm469, %v374, %v574
      %576 = vst [vmem:[#allocation2 + $0xd4] sm:$0x1] %v575
      %577 = vst.msk [vmem:[#allocation2 + $0xd8] sm:$0xf] %vm465, %v375
      %v578 = vld [vmem:[#allocation2 + $0xdc] sm:$0x1]
      %v579 = vsel %vm469, %v376, %v578
      %580 = vst [vmem:[#allocation2 + $0xdc] sm:$0x1] %v579
      %581 = vst.msk [vmem:[#allocation2 + $0xe0] sm:$0xf] %vm465, %v377
      %v582 = vld [vmem:[#allocation2 + $0xe4] sm:$0x1]
      %v583 = vsel %vm469, %v378, %v582
      %584 = vst [vmem:[#allocation2 + $0xe4] sm:$0x1] %v583
      %585 = vst.msk [vmem:[#allocation2 + $0xe8] sm:$0xf] %vm465, %v379
      %v586 = vld [vmem:[#allocation2 + $0xec] sm:$0x1]
      %v587 = vsel %vm469, %v380, %v586
      %588 = vst [vmem:[#allocation2 + $0xec] sm:$0x1] %v587
      %589 = vst.msk [vmem:[#allocation2 + $0xf0] sm:$0xf] %vm465, %v381
      %v590 = vld [vmem:[#allocation2 + $0xf4] sm:$0x1]
      %v591 = vsel %vm469, %v382, %v590
      %592 = vst [vmem:[#allocation2 + $0xf4] sm:$0x1] %v591
      %593 = vst.msk [vmem:[#allocation2 + $0xf8] sm:$0xf] %vm465, %v383
      %v594 = vld [vmem:[#allocation2 + $0xfc] sm:$0x1]
      %v595 = vsel %vm469, %v384, %v594
      %596 = vst [vmem:[#allocation2 + $0xfc] sm:$0x1] %v595
      %597 = vst.msk [vmem:[#allocation2 + $0x100] sm:$0xf] %vm465, %v385
      %v598 = vld [vmem:[#allocation2 + $0x104] sm:$0x1]
      %v599 = vsel %vm469, %v386, %v598
      %600 = vst [vmem:[#allocation2 + $0x104] sm:$0x1] %v599
      %601 = vst.msk [vmem:[#allocation2 + $0x108] sm:$0xf] %vm465, %v387
      %v602 = vld [vmem:[#allocation2 + $0x10c] sm:$0x1]
      %v603 = vsel %vm469, %v388, %v602
      %604 = vst [vmem:[#allocation2 + $0x10c] sm:$0x1] %v603
      %605 = vst.msk [vmem:[#allocation2 + $0x110] sm:$0xf] %vm465, %v389
      %v606 = vld [vmem:[#allocation2 + $0x114] sm:$0x1]
      %v607 = vsel %vm469, %v390, %v606
      %608 = vst [vmem:[#allocation2 + $0x114] sm:$0x1] %v607
      %609 = vst.msk [vmem:[#allocation2 + $0x118] sm:$0xf] %vm465, %v391
      %v610 = vld [vmem:[#allocation2 + $0x11c] sm:$0x1]
      %v611 = vsel %vm469, %v392, %v610
      %612 = vst [vmem:[#allocation2 + $0x11c] sm:$0x1] %v611
      %613 = vst.msk [vmem:[#allocation2 + $0x120] sm:$0xf] %vm465, %v393
      %v614 = vld [vmem:[#allocation2 + $0x124] sm:$0x1]
      %v615 = vsel %vm469, %v394, %v614
      %616 = vst [vmem:[#allocation2 + $0x124] sm:$0x1] %v615
      %617 = vst.msk [vmem:[#allocation2 + $0x128] sm:$0xf] %vm465, %v395
      %v618 = vld [vmem:[#allocation2 + $0x12c] sm:$0x1]
      %v619 = vsel %vm469, %v396, %v618
      %620 = vst [vmem:[#allocation2 + $0x12c] sm:$0x1] %v619
      %621 = vst.msk [vmem:[#allocation2 + $0x130] sm:$0xf] %vm465, %v397
      %v622 = vld [vmem:[#allocation2 + $0x134] sm:$0x1]
      %v623 = vsel %vm469, %v398, %v622
      %624 = vst [vmem:[#allocation2 + $0x134] sm:$0x1] %v623
      %625 = vst.msk [vmem:[#allocation2 + $0x138] sm:$0xf] %vm465, %v399
      %v626 = vld [vmem:[#allocation2 + $0x13c] sm:$0x1]
      %v627 = vsel %vm469, %v400, %v626
      %628 = vst [vmem:[#allocation2 + $0x13c] sm:$0x1] %v627
      %629 = vst.msk [vmem:[#allocation2 + $0x140] sm:$0xf] %vm465, %v401
      %v630 = vld [vmem:[#allocation2 + $0x144] sm:$0x1]
      %v631 = vsel %vm469, %v402, %v630
      %632 = vst [vmem:[#allocation2 + $0x144] sm:$0x1] %v631
      %633 = vst.msk [vmem:[#allocation2 + $0x148] sm:$0xf] %vm465, %v403
      %v634 = vld [vmem:[#allocation2 + $0x14c] sm:$0x1]
      %v635 = vsel %vm469, %v404, %v634
      %636 = vst [vmem:[#allocation2 + $0x14c] sm:$0x1] %v635
      %637 = vst.msk [vmem:[#allocation2 + $0x150] sm:$0xf] %vm465, %v405
      %v638 = vld [vmem:[#allocation2 + $0x154] sm:$0x1]
      %v639 = vsel %vm469, %v406, %v638
      %640 = vst [vmem:[#allocation2 + $0x154] sm:$0x1] %v639
      %641 = vst.msk [vmem:[#allocation2 + $0x158] sm:$0xf] %vm465, %v407
      %v642 = vld [vmem:[#allocation2 + $0x15c] sm:$0x1]
      %v643 = vsel %vm469, %v408, %v642
      %644 = vst [vmem:[#allocation2 + $0x15c] sm:$0x1] %v643
      %645 = vst.msk [vmem:[#allocation2 + $0x160] sm:$0xf] %vm465, %v409
      %v646 = vld [vmem:[#allocation2 + $0x164] sm:$0x1]
      %v647 = vsel %vm469, %v410, %v646
      %648 = vst [vmem:[#allocation2 + $0x164] sm:$0x1] %v647
      %649 = vst.msk [vmem:[#allocation2 + $0x168] sm:$0xf] %vm465, %v411
      %v650 = vld [vmem:[#allocation2 + $0x16c] sm:$0x1]
      %v651 = vsel %vm469, %v412, %v650
      %652 = vst [vmem:[#allocation2 + $0x16c] sm:$0x1] %v651
      %653 = vst.msk [vmem:[#allocation2 + $0x170] sm:$0xf] %vm465, %v413
      %v654 = vld [vmem:[#allocation2 + $0x174] sm:$0x1]
      %v655 = vsel %vm469, %v414, %v654
      %656 = vst [vmem:[#allocation2 + $0x174] sm:$0x1] %v655
      %657 = vst.msk [vmem:[#allocation2 + $0x178] sm:$0xf] %vm465, %v415
      %v658 = vld [vmem:[#allocation2 + $0x17c] sm:$0x1]
      %v659 = vsel %vm469, %v416, %v658
      %660 = vst [vmem:[#allocation2 + $0x17c] sm:$0x1] %v659
      %661 = vst.msk [vmem:[#allocation2 + $0x180] sm:$0xf] %vm465, %v417
      %v662 = vld [vmem:[#allocation2 + $0x184] sm:$0x1]
      %v663 = vsel %vm469, %v418, %v662
      %664 = vst [vmem:[#allocation2 + $0x184] sm:$0x1] %v663
      %665 = vst.msk [vmem:[#allocation2 + $0x188] sm:$0xf] %vm465, %v419
      %v666 = vld [vmem:[#allocation2 + $0x18c] sm:$0x1]
      %v667 = vsel %vm469, %v420, %v666
      %668 = vst [vmem:[#allocation2 + $0x18c] sm:$0x1] %v667
      %669 = vst.msk [vmem:[#allocation2 + $0x190] sm:$0xf] %vm465, %v421
      %v670 = vld [vmem:[#allocation2 + $0x194] sm:$0x1]
      %v671 = vsel %vm469, %v422, %v670
      %672 = vst [vmem:[#allocation2 + $0x194] sm:$0x1] %v671
      %673 = vst.msk [vmem:[#allocation2 + $0x198] sm:$0xf] %vm465, %v423
      %v674 = vld [vmem:[#allocation2 + $0x19c] sm:$0x1]
      %v675 = vsel %vm469, %v424, %v674
      %676 = vst [vmem:[#allocation2 + $0x19c] sm:$0x1] %v675
      %677 = vst.msk [vmem:[#allocation2 + $0x1a0] sm:$0xf] %vm465, %v425
      %v678 = vld [vmem:[#allocation2 + $0x1a4] sm:$0x1]
      %v679 = vsel %vm469, %v426, %v678
      %680 = vst [vmem:[#allocation2 + $0x1a4] sm:$0x1] %v679
      %681 = vst.msk [vmem:[#allocation2 + $0x1a8] sm:$0xf] %vm465, %v427
      %v682 = vld [vmem:[#allocation2 + $0x1ac] sm:$0x1]
      %v683 = vsel %vm469, %v428, %v682
      %684 = vst [vmem:[#allocation2 + $0x1ac] sm:$0x1] %v683
      %685 = vst.msk [vmem:[#allocation2 + $0x1b0] sm:$0xf] %vm465, %v429
      %v686 = vld [vmem:[#allocation2 + $0x1b4] sm:$0x1]
      %v687 = vsel %vm469, %v430, %v686
      %688 = vst [vmem:[#allocation2 + $0x1b4] sm:$0x1] %v687
      %689 = vst.msk [vmem:[#allocation2 + $0x1b8] sm:$0xf] %vm465, %v431
      %v690 = vld [vmem:[#allocation2 + $0x1bc] sm:$0x1]
      %v691 = vsel %vm469, %v432, %v690
      %692 = vst [vmem:[#allocation2 + $0x1bc] sm:$0x1] %v691
      %693 = vst.msk [vmem:[#allocation2 + $0x1c0] sm:$0xf] %vm465, %v433
      %v694 = vld [vmem:[#allocation2 + $0x1c4] sm:$0x1]
      %v695 = vsel %vm469, %v434, %v694
      %696 = vst [vmem:[#allocation2 + $0x1c4] sm:$0x1] %v695
      %697 = vst.msk [vmem:[#allocation2 + $0x1c8] sm:$0xf] %vm465, %v435
      %v698 = vld [vmem:[#allocation2 + $0x1cc] sm:$0x1]
      %v699 = vsel %vm469, %v436, %v698
      %700 = vst [vmem:[#allocation2 + $0x1cc] sm:$0x1] %v699
      %701 = vst.msk [vmem:[#allocation2 + $0x1d0] sm:$0xf] %vm465, %v437
      %v702 = vld [vmem:[#allocation2 + $0x1d4] sm:$0x1]
      %v703 = vsel %vm469, %v438, %v702
      %704 = vst [vmem:[#allocation2 + $0x1d4] sm:$0x1] %v703
      %705 = vst.msk [vmem:[#allocation2 + $0x1d8] sm:$0xf] %vm465, %v439
      %v706 = vld [vmem:[#allocation2 + $0x1dc] sm:$0x1]
      %v707 = vsel %vm469, %v440, %v706
      %708 = vst [vmem:[#allocation2 + $0x1dc] sm:$0x1] %v707
      %709 = vst.msk [vmem:[#allocation2 + $0x1e0] sm:$0xf] %vm465, %v441
      %v710 = vld [vmem:[#allocation2 + $0x1e4] sm:$0x1]
      %v711 = vsel %vm469, %v442, %v710
      %712 = vst [vmem:[#allocation2 + $0x1e4] sm:$0x1] %v711
      %713 = vst.msk [vmem:[#allocation2 + $0x1e8] sm:$0xf] %vm465, %v443
      %v714 = vld [vmem:[#allocation2 + $0x1ec] sm:$0x1]
      %v715 = vsel %vm469, %v444, %v714
      %716 = vst [vmem:[#allocation2 + $0x1ec] sm:$0x1] %v715
      %717 = vst.msk [vmem:[#allocation2 + $0x1f0] sm:$0xf] %vm465, %v445
      %v718 = vld [vmem:[#allocation2 + $0x1f4] sm:$0x1]
      %v719 = vsel %vm469, %v446, %v718
      %720 = vst [vmem:[#allocation2 + $0x1f4] sm:$0x1] %v719
      %721 = vst.msk [vmem:[#allocation2 + $0x1f8] sm:$0xf] %vm465, %v447
      %v722 = vld [vmem:[#allocation2 + $0x1fc] sm:$0x1]
      %v723 = vsel %vm469, %v448, %v722
      %724 = vst [vmem:[#allocation2 + $0x1fc] sm:$0x1] %v723
      %725 = vst.msk [vmem:[#allocation2 + $0x200] sm:$0xf] %vm465, %v449
      %v726 = vld [vmem:[#allocation2 + $0x204] sm:$0x1]
      %v727 = vsel %vm469, %v450, %v726
      %728 = vst [vmem:[#allocation2 + $0x204] sm:$0x1] %v727
      %729 = vst.msk [vmem:[#allocation2 + $0x208] sm:$0xf] %vm465, %v451
      %v730 = vld [vmem:[#allocation2 + $0x20c] sm:$0x1]
      %v731 = vsel %vm469, %v452, %v730
      %732 = vst [vmem:[#allocation2 + $0x20c] sm:$0x1] %v731
      %733 = vst.msk [vmem:[#allocation2 + $0x210] sm:$0xf] %vm465, %v453
      %v734 = vld [vmem:[#allocation2 + $0x214] sm:$0x1]
      %v735 = vsel %vm469, %v454, %v734
      %736 = vst [vmem:[#allocation2 + $0x214] sm:$0x1] %v735
      %737 = vst.msk [vmem:[#allocation2 + $0x218] sm:$0xf] %vm465, %v455
      %v738 = vld [vmem:[#allocation2 + $0x21c] sm:$0x1]
      %v739 = vsel %vm469, %v456, %v738
      %740 = vst [vmem:[#allocation2 + $0x21c] sm:$0x1] %v739
      %741 = vst.msk [vmem:[#allocation2 + $0x220] sm:$0xf] %vm465, %v457
      %v742 = vld [vmem:[#allocation2 + $0x224] sm:$0x1]
      %v743 = vsel %vm469, %v458, %v742
      %744 = vst [vmem:[#allocation2 + $0x224] sm:$0x1] %v743
      %745 = vst.msk [vmem:[#allocation2 + $0x228] sm:$0xf] %vm465, %v459
      %v746 = vld [vmem:[#allocation2 + $0x22c] sm:$0x1]
      %v747 = vsel %vm469, %v460, %v746
      %748 = vst [vmem:[#allocation2 + $0x22c] sm:$0x1] %v747
      %749 = vst.msk [vmem:[#allocation2 + $0x230] sm:$0xf] %vm465, %v461
      %v750 = vld [vmem:[#allocation2 + $0x234] sm:$0x1]
      %v751 = vsel %vm469, %v462, %v750
      %752 = vst [vmem:[#allocation2 + $0x234] sm:$0x1] %v751
      %753 = vst.msk [vmem:[#allocation2 + $0x238] sm:$0xf] %vm465, %v463
      %v754 = vld [vmem:[#allocation2 + $0x23c] sm:$0x1]
      %v755 = vsel %vm469, %v464, %v754
      %756 = vst [vmem:[#allocation2 + $0x23c] sm:$0x1] %v755
      %v757 = vld [vmem:[%s306] sm:$0xf]
      %v758 = vld [vmem:[%s306 + $0x4] sm:$0x1]
      %v759 = vld [vmem:[%s306 + $0x8] sm:$0xf]
      %v760 = vld [vmem:[%s306 + $0xc] sm:$0x1]
      %v761 = vld [vmem:[%s306 + $0x10] sm:$0xf]
      %v762 = vld [vmem:[%s306 + $0x14] sm:$0x1]
      %v763 = vld [vmem:[%s306 + $0x18] sm:$0xf]
      %v764 = vld [vmem:[%s306 + $0x1c] sm:$0x1]
      %v765 = vld [vmem:[%s306 + $0x20] sm:$0xf]
      %v766 = vld [vmem:[%s306 + $0x24] sm:$0x1]
      %v767 = vld [vmem:[%s306 + $0x28] sm:$0xf]
      %v768 = vld [vmem:[%s306 + $0x2c] sm:$0x1]
      %v769 = vld [vmem:[%s306 + $0x30] sm:$0xf]
      %v770 = vld [vmem:[%s306 + $0x34] sm:$0x1]
      %v771 = vld [vmem:[%s306 + $0x38] sm:$0xf]
      %v772 = vld [vmem:[%s306 + $0x3c] sm:$0x1]
      %v773 = vld [vmem:[%s306 + $0x40] sm:$0xf]
      %v774 = vld [vmem:[%s306 + $0x44] sm:$0x1]
      %s775 = scalar_lea.vmem [#allocation2], 576
      %776 = vst.msk [vmem:[%s775] sm:$0xf] %vm465, %v757
      %v777 = vld [vmem:[%s775 + $0x4] sm:$0x1]
      %v778 = vsel %vm469, %v758, %v777
      %779 = vst [vmem:[%s775 + $0x4] sm:$0x1] %v778
      %780 = vst.msk [vmem:[%s775 + $0x8] sm:$0xf] %vm465, %v759
      %v781 = vld [vmem:[%s775 + $0xc] sm:$0x1]
      %v782 = vsel %vm469, %v760, %v781
      %783 = vst [vmem:[%s775 + $0xc] sm:$0x1] %v782
      %784 = vst.msk [vmem:[%s775 + $0x10] sm:$0xf] %vm465, %v761
      %v785 = vld [vmem:[%s775 + $0x14] sm:$0x1]
      %v786 = vsel %vm469, %v762, %v785
      %787 = vst [vmem:[%s775 + $0x14] sm:$0x1] %v786
      %788 = vst.msk [vmem:[%s775 + $0x18] sm:$0xf] %vm465, %v763
      %v789 = vld [vmem:[%s775 + $0x1c] sm:$0x1]
      %v790 = vsel %vm469, %v764, %v789
      %791 = vst [vmem:[%s775 + $0x1c] sm:$0x1] %v790
      %792 = vst.msk [vmem:[%s775 + $0x20] sm:$0xf] %vm465, %v765
      %v793 = vld [vmem:[%s775 + $0x24] sm:$0x1]
      %v794 = vsel %vm469, %v766, %v793
      %795 = vst [vmem:[%s775 + $0x24] sm:$0x1] %v794
      %796 = vst.msk [vmem:[%s775 + $0x28] sm:$0xf] %vm465, %v767
      %v797 = vld [vmem:[%s775 + $0x2c] sm:$0x1]
      %v798 = vsel %vm469, %v768, %v797
      %799 = vst [vmem:[%s775 + $0x2c] sm:$0x1] %v798
      %800 = vst.msk [vmem:[%s775 + $0x30] sm:$0xf] %vm465, %v769
      %v801 = vld [vmem:[%s775 + $0x34] sm:$0x1]
      %v802 = vsel %vm469, %v770, %v801
      %803 = vst [vmem:[%s775 + $0x34] sm:$0x1] %v802
      %804 = vst.msk [vmem:[%s775 + $0x38] sm:$0xf] %vm465, %v771
      %v805 = vld [vmem:[%s775 + $0x3c] sm:$0x1]
      %v806 = vsel %vm469, %v772, %v805
      %807 = vst [vmem:[%s775 + $0x3c] sm:$0x1] %v806
      %808 = vst.msk [vmem:[%s775 + $0x40] sm:$0xf] %vm465, %v773
      %v809 = vld [vmem:[%s775 + $0x44] sm:$0x1]
      %v810 = vsel %vm469, %v774, %v809
      %811 = vst [vmem:[%s775 + $0x44] sm:$0x1] %v810
      %v812 = vld [vmem:[#allocation2] sm:$0xf]
      %v813 = vld [vmem:[#allocation2 + $0x8] sm:$0xf]
      %v814 = vld [vmem:[#allocation2 + $0x10] sm:$0xf]
      %v815 = vld [vmem:[#allocation2 + $0x18] sm:$0xf]
      %v816 = vld [vmem:[#allocation2 + $0x20] sm:$0xf]
      %v817 = vld [vmem:[#allocation2 + $0x28] sm:$0xf]
      %v818 = vld [vmem:[#allocation2 + $0x30] sm:$0xf]
      %v819 = vld [vmem:[#allocation2 + $0x38] sm:$0xf]
      %v820 = vld [vmem:[#allocation2 + $0x48] sm:$0xf]
      %v821 = vld [vmem:[#allocation2 + $0x50] sm:$0xf]
      %v822 = vld [vmem:[#allocation2 + $0x58] sm:$0xf]
      %v823 = vld [vmem:[#allocation2 + $0x60] sm:$0xf]
      %v824 = vld [vmem:[#allocation2 + $0x68] sm:$0xf]
      %v825 = vld [vmem:[#allocation2 + $0x70] sm:$0xf]
      %v826 = vld [vmem:[#allocation2 + $0x78] sm:$0xf]
      %v827 = vld [vmem:[#allocation2 + $0x80] sm:$0xf]
      %v828 = vld [vmem:[#allocation2 + $0x90] sm:$0xf]
      %v829 = vld [vmem:[#allocation2 + $0x98] sm:$0xf]
      %v830 = vld [vmem:[#allocation2 + $0xa0] sm:$0xf]
      %v831 = vld [vmem:[#allocation2 + $0xa8] sm:$0xf]
      %v832 = vld [vmem:[#allocation2 + $0xb0] sm:$0xf]
      %v833 = vld [vmem:[#allocation2 + $0xb8] sm:$0xf]
      %v834 = vld [vmem:[#allocation2 + $0xc0] sm:$0xf]
      %v835 = vld [vmem:[#allocation2 + $0xc8] sm:$0xf]
      %v836 = vld [vmem:[#allocation2 + $0xd8] sm:$0xf]
      %v837 = vld [vmem:[#allocation2 + $0xe0] sm:$0xf]
      %v838 = vld [vmem:[#allocation2 + $0xe8] sm:$0xf]
      %v839 = vld [vmem:[#allocation2 + $0xf0] sm:$0xf]
      %v840 = vld [vmem:[#allocation2 + $0xf8] sm:$0xf]
      %v841 = vld [vmem:[#allocation2 + $0x100] sm:$0xf]
      %v842 = vld [vmem:[#allocation2 + $0x108] sm:$0xf]
      %v843 = vld [vmem:[#allocation2 + $0x110] sm:$0xf]
      %v844 = vld [vmem:[#allocation2 + $0x120] sm:$0xf]
      %v845 = vld [vmem:[#allocation2 + $0x128] sm:$0xf]
      %v846 = vld [vmem:[#allocation2 + $0x130] sm:$0xf]
      %v847 = vld [vmem:[#allocation2 + $0x138] sm:$0xf]
      %v848 = vld [vmem:[#allocation2 + $0x140] sm:$0xf]
      %v849 = vld [vmem:[#allocation2 + $0x148] sm:$0xf]
      %v850 = vld [vmem:[#allocation2 + $0x150] sm:$0xf]
      %v851 = vld [vmem:[#allocation2 + $0x158] sm:$0xf]
      %v852 = vld [vmem:[#allocation2 + $0x168] sm:$0xf]
      %v853 = vld [vmem:[#allocation2 + $0x170] sm:$0xf]
      %v854 = vld [vmem:[#allocation2 + $0x178] sm:$0xf]
      %v855 = vld [vmem:[#allocation2 + $0x180] sm:$0xf]
      %v856 = vld [vmem:[#allocation2 + $0x188] sm:$0xf]
      %v857 = vld [vmem:[#allocation2 + $0x190] sm:$0xf]
      %v858 = vld [vmem:[#allocation2 + $0x198] sm:$0xf]
      %v859 = vld [vmem:[#allocation2 + $0x1a0] sm:$0xf]
      %v860 = vld [vmem:[#allocation2 + $0x1b0] sm:$0xf]
      %v861 = vld [vmem:[#allocation2 + $0x1b8] sm:$0xf]
      %v862 = vld [vmem:[#allocation2 + $0x1c0] sm:$0xf]
      %v863 = vld [vmem:[#allocation2 + $0x1c8] sm:$0xf]
      %v864 = vld [vmem:[#allocation2 + $0x1d0] sm:$0xf]
      %v865 = vld [vmem:[#allocation2 + $0x1d8] sm:$0xf]
      %v866 = vld [vmem:[#allocation2 + $0x1e0] sm:$0xf]
      %v867 = vld [vmem:[#allocation2 + $0x1e8] sm:$0xf]
      %v868 = vld [vmem:[#allocation2 + $0x1f8] sm:$0xf]
      %v869 = vld [vmem:[#allocation2 + $0x200] sm:$0xf]
      %v870 = vld [vmem:[#allocation2 + $0x208] sm:$0xf]
      %v871 = vld [vmem:[#allocation2 + $0x210] sm:$0xf]
      %v872 = vld [vmem:[#allocation2 + $0x218] sm:$0xf]
      %v873 = vld [vmem:[#allocation2 + $0x220] sm:$0xf]
      %v874 = vld [vmem:[#allocation2 + $0x228] sm:$0xf]
      %v875 = vld [vmem:[#allocation2 + $0x230] sm:$0xf]
      %v876 = vld [vmem:[#allocation2 + $0x4] sm:$0x1]
      %v877 = vld [vmem:[#allocation2 + $0xc] sm:$0x1]
      %v878 = vld [vmem:[#allocation2 + $0x14] sm:$0x1]
      %v879 = vld [vmem:[#allocation2 + $0x1c] sm:$0x1]
      %v880 = vld [vmem:[#allocation2 + $0x24] sm:$0x1]
      %v881 = vld [vmem:[#allocation2 + $0x2c] sm:$0x1]
      %v882 = vld [vmem:[#allocation2 + $0x34] sm:$0x1]
      %v883 = vld [vmem:[#allocation2 + $0x3c] sm:$0x1]
      %v884 = vld [vmem:[#allocation2 + $0x4c] sm:$0x1]
      %v885 = vld [vmem:[#allocation2 + $0x54] sm:$0x1]
      %v886 = vld [vmem:[#allocation2 + $0x5c] sm:$0x1]
      %v887 = vld [vmem:[#allocation2 + $0x64] sm:$0x1]
      %v888 = vld [vmem:[#allocation2 + $0x6c] sm:$0x1]
      %v889 = vld [vmem:[#allocation2 + $0x74] sm:$0x1]
      %v890 = vld [vmem:[#allocation2 + $0x7c] sm:$0x1]
      %v891 = vld [vmem:[#allocation2 + $0x84] sm:$0x1]
      %v892 = vld [vmem:[#allocation2 + $0x94] sm:$0x1]
      %v893 = vld [vmem:[#allocation2 + $0x9c] sm:$0x1]
      %v894 = vld [vmem:[#allocation2 + $0xa4] sm:$0x1]
      %v895 = vld [vmem:[#allocation2 + $0xac] sm:$0x1]
      %v896 = vld [vmem:[#allocation2 + $0xb4] sm:$0x1]
      %v897 = vld [vmem:[#allocation2 + $0xbc] sm:$0x1]
      %v898 = vld [vmem:[#allocation2 + $0xc4] sm:$0x1]
      %v899 = vld [vmem:[#allocation2 + $0xcc] sm:$0x1]
      %v900 = vld [vmem:[#allocation2 + $0xdc] sm:$0x1]
      %v901 = vld [vmem:[#allocation2 + $0xe4] sm:$0x1]
      %v902 = vld [vmem:[#allocation2 + $0xec] sm:$0x1]
      %v903 = vld [vmem:[#allocation2 + $0xf4] sm:$0x1]
      %v904 = vld [vmem:[#allocation2 + $0xfc] sm:$0x1]
      %v905 = vld [vmem:[#allocation2 + $0x104] sm:$0x1]
      %v906 = vld [vmem:[#allocation2 + $0x10c] sm:$0x1]
      %v907 = vld [vmem:[#allocation2 + $0x114] sm:$0x1]
      %v908 = vld [vmem:[#allocation2 + $0x124] sm:$0x1]
      %v909 = vld [vmem:[#allocation2 + $0x12c] sm:$0x1]
      %v910 = vld [vmem:[#allocation2 + $0x134] sm:$0x1]
      %v911 = vld [vmem:[#allocation2 + $0x13c] sm:$0x1]
      %v912 = vld [vmem:[#allocation2 + $0x144] sm:$0x1]
      %v913 = vld [vmem:[#allocation2 + $0x14c] sm:$0x1]
      %v914 = vld [vmem:[#allocation2 + $0x154] sm:$0x1]
      %v915 = vld [vmem:[#allocation2 + $0x15c] sm:$0x1]
      %v916 = vld [vmem:[#allocation2 + $0x16c] sm:$0x1]
      %v917 = vld [vmem:[#allocation2 + $0x174] sm:$0x1]
      %v918 = vld [vmem:[#allocation2 + $0x17c] sm:$0x1]
      %v919 = vld [vmem:[#allocation2 + $0x184] sm:$0x1]
      %v920 = vld [vmem:[#allocation2 + $0x18c] sm:$0x1]
      %v921 = vld [vmem:[#allocation2 + $0x194] sm:$0x1]
      %v922 = vld [vmem:[#allocation2 + $0x19c] sm:$0x1]
      %v923 = vld [vmem:[#allocation2 + $0x1a4] sm:$0x1]
      %v924 = vld [vmem:[#allocation2 + $0x1b4] sm:$0x1]
      %v925 = vld [vmem:[#allocation2 + $0x1bc] sm:$0x1]
      %v926 = vld [vmem:[#allocation2 + $0x1c4] sm:$0x1]
      %v927 = vld [vmem:[#allocation2 + $0x1cc] sm:$0x1]
      %v928 = vld [vmem:[#allocation2 + $0x1d4] sm:$0x1]
      %v929 = vld [vmem:[#allocation2 + $0x1dc] sm:$0x1]
      %v930 = vld [vmem:[#allocation2 + $0x1e4] sm:$0x1]
      %v931 = vld [vmem:[#allocation2 + $0x1ec] sm:$0x1]
      %v932 = vld [vmem:[#allocation2 + $0x1fc] sm:$0x1]
      %v933 = vld [vmem:[#allocation2 + $0x204] sm:$0x1]
      %v934 = vld [vmem:[#allocation2 + $0x20c] sm:$0x1]
      %v935 = vld [vmem:[#allocation2 + $0x214] sm:$0x1]
      %v936 = vld [vmem:[#allocation2 + $0x21c] sm:$0x1]
      %v937 = vld [vmem:[#allocation2 + $0x224] sm:$0x1]
      %v938 = vld [vmem:[#allocation2 + $0x22c] sm:$0x1]
      %v939 = vld [vmem:[#allocation2 + $0x234] sm:$0x1]
      %vm940 = vsmask.f32 3328
      %vm941 = vsmask.f32 7440
      %vm942 = vmor %vm940, %vm941
      %v944 = vshrl.u32 %v812, 16
      %v946 = vrot.slane %v944, 4
      %v947 = vshll.u32 %v812, 16
      %v949 = vrot.slane %v947, 5
      %v950 = vor.u32 %v946, %v949
      %v951 = vrot.slane %v950, 4
      %v953 = vshll.u32 %v876, 16
      %v955 = vrot.slane %v953, 5
      %v956 = vsel %vm942, %v951, %v955
      %v958 = vshrl.u32 %v813, 16
      %v960 = vrot.slane %v958, 4
      %v961 = vshll.u32 %v813, 16
      %v963 = vrot.slane %v961, 5
      %v964 = vor.u32 %v960, %v963
      %v965 = vrot.slane %v964, 4
      %v967 = vshll.u32 %v877, 16
      %v969 = vrot.slane %v967, 5
      %v970 = vsel %vm942, %v965, %v969
      %v972 = vshrl.u32 %v814, 16
      %v974 = vrot.slane %v972, 4
      %v975 = vshll.u32 %v814, 16
      %v977 = vrot.slane %v975, 5
      %v978 = vor.u32 %v974, %v977
      %v979 = vrot.slane %v978, 4
      %v981 = vshll.u32 %v878, 16
      %v983 = vrot.slane %v981, 5
      %v984 = vsel %vm942, %v979, %v983
      %v986 = vshrl.u32 %v815, 16
      %v988 = vrot.slane %v986, 4
      %v989 = vshll.u32 %v815, 16
      %v991 = vrot.slane %v989, 5
      %v992 = vor.u32 %v988, %v991
      %v993 = vrot.slane %v992, 4
      %v995 = vshll.u32 %v879, 16
      %v997 = vrot.slane %v995, 5
      %v998 = vsel %vm942, %v993, %v997
      %v1000 = vshrl.u32 %v816, 16
      %v1002 = vrot.slane %v1000, 4
      %v1003 = vshll.u32 %v816, 16
      %v1005 = vrot.slane %v1003, 5
      %v1006 = vor.u32 %v1002, %v1005
      %v1007 = vrot.slane %v1006, 4
      %v1009 = vshll.u32 %v880, 16
      %v1011 = vrot.slane %v1009, 5
      %v1012 = vsel %vm942, %v1007, %v1011
      %v1014 = vshrl.u32 %v817, 16
      %v1016 = vrot.slane %v1014, 4
      %v1017 = vshll.u32 %v817, 16
      %v1019 = vrot.slane %v1017, 5
      %v1020 = vor.u32 %v1016, %v1019
      %v1021 = vrot.slane %v1020, 4
      %v1023 = vshll.u32 %v881, 16
      %v1025 = vrot.slane %v1023, 5
      %v1026 = vsel %vm942, %v1021, %v1025
      %v1028 = vshrl.u32 %v818, 16
      %v1030 = vrot.slane %v1028, 4
      %v1031 = vshll.u32 %v818, 16
      %v1033 = vrot.slane %v1031, 5
      %v1034 = vor.u32 %v1030, %v1033
      %v1035 = vrot.slane %v1034, 4
      %v1037 = vshll.u32 %v882, 16
      %v1039 = vrot.slane %v1037, 5
      %v1040 = vsel %vm942, %v1035, %v1039
      %v1042 = vshrl.u32 %v819, 16
      %v1044 = vrot.slane %v1042, 4
      %v1045 = vshll.u32 %v819, 16
      %v1047 = vrot.slane %v1045, 5
      %v1048 = vor.u32 %v1044, %v1047
      %v1049 = vrot.slane %v1048, 4
      %v1051 = vshll.u32 %v883, 16
      %v1053 = vrot.slane %v1051, 5
      %v1054 = vsel %vm942, %v1049, %v1053
      %v1056 = vshrl.u32 %v820, 16
      %v1058 = vrot.slane %v1056, 4
      %v1059 = vshll.u32 %v820, 16
      %v1061 = vrot.slane %v1059, 5
      %v1062 = vor.u32 %v1058, %v1061
      %v1063 = vrot.slane %v1062, 4
      %v1065 = vshll.u32 %v884, 16
      %v1067 = vrot.slane %v1065, 5
      %v1068 = vsel %vm942, %v1063, %v1067
      %v1070 = vshrl.u32 %v821, 16
      %v1072 = vrot.slane %v1070, 4
      %v1073 = vshll.u32 %v821, 16
      %v1075 = vrot.slane %v1073, 5
      %v1076 = vor.u32 %v1072, %v1075
      %v1077 = vrot.slane %v1076, 4
      %v1079 = vshll.u32 %v885, 16
      %v1081 = vrot.slane %v1079, 5
      %v1082 = vsel %vm942, %v1077, %v1081
      %v1084 = vshrl.u32 %v822, 16
      %v1086 = vrot.slane %v1084, 4
      %v1087 = vshll.u32 %v822, 16
      %v1089 = vrot.slane %v1087, 5
      %v1090 = vor.u32 %v1086, %v1089
      %v1091 = vrot.slane %v1090, 4
      %v1093 = vshll.u32 %v886, 16
      %v1095 = vrot.slane %v1093, 5
      %v1096 = vsel %vm942, %v1091, %v1095
      %v1098 = vshrl.u32 %v823, 16
      %v1100 = vrot.slane %v1098, 4
      %v1101 = vshll.u32 %v823, 16
      %v1103 = vrot.slane %v1101, 5
      %v1104 = vor.u32 %v1100, %v1103
      %v1105 = vrot.slane %v1104, 4
      %v1107 = vshll.u32 %v887, 16
      %v1109 = vrot.slane %v1107, 5
      %v1110 = vsel %vm942, %v1105, %v1109
      %v1112 = vshrl.u32 %v824, 16
      %v1114 = vrot.slane %v1112, 4
      %v1115 = vshll.u32 %v824, 16
      %v1117 = vrot.slane %v1115, 5
      %v1118 = vor.u32 %v1114, %v1117
      %v1119 = vrot.slane %v1118, 4
      %v1121 = vshll.u32 %v888, 16
      %v1123 = vrot.slane %v1121, 5
      %v1124 = vsel %vm942, %v1119, %v1123
      %v1126 = vshrl.u32 %v825, 16
      %v1128 = vrot.slane %v1126, 4
      %v1129 = vshll.u32 %v825, 16
      %v1131 = vrot.slane %v1129, 5
      %v1132 = vor.u32 %v1128, %v1131
      %v1133 = vrot.slane %v1132, 4
      %v1135 = vshll.u32 %v889, 16
      %v1137 = vrot.slane %v1135, 5
      %v1138 = vsel %vm942, %v1133, %v1137
      %v1140 = vshrl.u32 %v826, 16
      %v1142 = vrot.slane %v1140, 4
      %v1143 = vshll.u32 %v826, 16
      %v1145 = vrot.slane %v1143, 5
      %v1146 = vor.u32 %v1142, %v1145
      %v1147 = vrot.slane %v1146, 4
      %v1149 = vshll.u32 %v890, 16
      %v1151 = vrot.slane %v1149, 5
      %v1152 = vsel %vm942, %v1147, %v1151
      %v1154 = vshrl.u32 %v827, 16
      %v1156 = vrot.slane %v1154, 4
      %v1157 = vshll.u32 %v827, 16
      %v1159 = vrot.slane %v1157, 5
      %v1160 = vor.u32 %v1156, %v1159
      %v1161 = vrot.slane %v1160, 4
      %v1163 = vshll.u32 %v891, 16
      %v1165 = vrot.slane %v1163, 5
      %v1166 = vsel %vm942, %v1161, %v1165
      %v1168 = vshrl.u32 %v828, 16
      %v1170 = vrot.slane %v1168, 4
      %v1171 = vshll.u32 %v828, 16
      %v1173 = vrot.slane %v1171, 5
      %v1174 = vor.u32 %v1170, %v1173
      %v1175 = vrot.slane %v1174, 4
      %v1177 = vshll.u32 %v892, 16
      %v1179 = vrot.slane %v1177, 5
      %v1180 = vsel %vm942, %v1175, %v1179
      %v1182 = vshrl.u32 %v829, 16
      %v1184 = vrot.slane %v1182, 4
      %v1185 = vshll.u32 %v829, 16
      %v1187 = vrot.slane %v1185, 5
      %v1188 = vor.u32 %v1184, %v1187
      %v1189 = vrot.slane %v1188, 4
      %v1191 = vshll.u32 %v893, 16
      %v1193 = vrot.slane %v1191, 5
      %v1194 = vsel %vm942, %v1189, %v1193
      %v1196 = vshrl.u32 %v830, 16
      %v1198 = vrot.slane %v1196, 4
      %v1199 = vshll.u32 %v830, 16
      %v1201 = vrot.slane %v1199, 5
      %v1202 = vor.u32 %v1198, %v1201
      %v1203 = vrot.slane %v1202, 4
      %v1205 = vshll.u32 %v894, 16
      %v1207 = vrot.slane %v1205, 5
      %v1208 = vsel %vm942, %v1203, %v1207
      %v1210 = vshrl.u32 %v831, 16
      %v1212 = vrot.slane %v1210, 4
      %v1213 = vshll.u32 %v831, 16
      %v1215 = vrot.slane %v1213, 5
      %v1216 = vor.u32 %v1212, %v1215
      %v1217 = vrot.slane %v1216, 4
      %v1219 = vshll.u32 %v895, 16
      %v1221 = vrot.slane %v1219, 5
      %v1222 = vsel %vm942, %v1217, %v1221
      %v1224 = vshrl.u32 %v832, 16
      %v1226 = vrot.slane %v1224, 4
      %v1227 = vshll.u32 %v832, 16
      %v1229 = vrot.slane %v1227, 5
      %v1230 = vor.u32 %v1226, %v1229
      %v1231 = vrot.slane %v1230, 4
      %v1233 = vshll.u32 %v896, 16
      %v1235 = vrot.slane %v1233, 5
      %v1236 = vsel %vm942, %v1231, %v1235
      %v1238 = vshrl.u32 %v833, 16
      %v1240 = vrot.slane %v1238, 4
      %v1241 = vshll.u32 %v833, 16
      %v1243 = vrot.slane %v1241, 5
      %v1244 = vor.u32 %v1240, %v1243
      %v1245 = vrot.slane %v1244, 4
      %v1247 = vshll.u32 %v897, 16
      %v1249 = vrot.slane %v1247, 5
      %v1250 = vsel %vm942, %v1245, %v1249
      %v1252 = vshrl.u32 %v834, 16
      %v1254 = vrot.slane %v1252, 4
      %v1255 = vshll.u32 %v834, 16
      %v1257 = vrot.slane %v1255, 5
      %v1258 = vor.u32 %v1254, %v1257
      %v1259 = vrot.slane %v1258, 4
      %v1261 = vshll.u32 %v898, 16
      %v1263 = vrot.slane %v1261, 5
      %v1264 = vsel %vm942, %v1259, %v1263
      %v1266 = vshrl.u32 %v835, 16
      %v1268 = vrot.slane %v1266, 4
      %v1269 = vshll.u32 %v835, 16
      %v1271 = vrot.slane %v1269, 5
      %v1272 = vor.u32 %v1268, %v1271
      %v1273 = vrot.slane %v1272, 4
      %v1275 = vshll.u32 %v899, 16
      %v1277 = vrot.slane %v1275, 5
      %v1278 = vsel %vm942, %v1273, %v1277
      %v1280 = vshrl.u32 %v836, 16
      %v1282 = vrot.slane %v1280, 4
      %v1283 = vshll.u32 %v836, 16
      %v1285 = vrot.slane %v1283, 5
      %v1286 = vor.u32 %v1282, %v1285
      %v1287 = vrot.slane %v1286, 4
      %v1289 = vshll.u32 %v900, 16
      %v1291 = vrot.slane %v1289, 5
      %v1292 = vsel %vm942, %v1287, %v1291
      %v1294 = vshrl.u32 %v837, 16
      %v1296 = vrot.slane %v1294, 4
      %v1297 = vshll.u32 %v837, 16
      %v1299 = vrot.slane %v1297, 5
      %v1300 = vor.u32 %v1296, %v1299
      %v1301 = vrot.slane %v1300, 4
      %v1303 = vshll.u32 %v901, 16
      %v1305 = vrot.slane %v1303, 5
      %v1306 = vsel %vm942, %v1301, %v1305
      %v1308 = vshrl.u32 %v838, 16
      %v1310 = vrot.slane %v1308, 4
      %v1311 = vshll.u32 %v838, 16
      %v1313 = vrot.slane %v1311, 5
      %v1314 = vor.u32 %v1310, %v1313
      %v1315 = vrot.slane %v1314, 4
      %v1317 = vshll.u32 %v902, 16
      %v1319 = vrot.slane %v1317, 5
      %v1320 = vsel %vm942, %v1315, %v1319
      %v1322 = vshrl.u32 %v839, 16
      %v1324 = vrot.slane %v1322, 4
      %v1325 = vshll.u32 %v839, 16
      %v1327 = vrot.slane %v1325, 5
      %v1328 = vor.u32 %v1324, %v1327
      %v1329 = vrot.slane %v1328, 4
      %v1331 = vshll.u32 %v903, 16
      %v1333 = vrot.slane %v1331, 5
      %v1334 = vsel %vm942, %v1329, %v1333
      %v1336 = vshrl.u32 %v840, 16
      %v1338 = vrot.slane %v1336, 4
      %v1339 = vshll.u32 %v840, 16
      %v1341 = vrot.slane %v1339, 5
      %v1342 = vor.u32 %v1338, %v1341
      %v1343 = vrot.slane %v1342, 4
      %v1345 = vshll.u32 %v904, 16
      %v1347 = vrot.slane %v1345, 5
      %v1348 = vsel %vm942, %v1343, %v1347
      %v1350 = vshrl.u32 %v841, 16
      %v1352 = vrot.slane %v1350, 4
      %v1353 = vshll.u32 %v841, 16
      %v1355 = vrot.slane %v1353, 5
      %v1356 = vor.u32 %v1352, %v1355
      %v1357 = vrot.slane %v1356, 4
      %v1359 = vshll.u32 %v905, 16
      %v1361 = vrot.slane %v1359, 5
      %v1362 = vsel %vm942, %v1357, %v1361
      %v1364 = vshrl.u32 %v842, 16
      %v1366 = vrot.slane %v1364, 4
      %v1367 = vshll.u32 %v842, 16
      %v1369 = vrot.slane %v1367, 5
      %v1370 = vor.u32 %v1366, %v1369
      %v1371 = vrot.slane %v1370, 4
      %v1373 = vshll.u32 %v906, 16
      %v1375 = vrot.slane %v1373, 5
      %v1376 = vsel %vm942, %v1371, %v1375
      %v1378 = vshrl.u32 %v843, 16
      %v1380 = vrot.slane %v1378, 4
      %v1381 = vshll.u32 %v843, 16
      %v1383 = vrot.slane %v1381, 5
      %v1384 = vor.u32 %v1380, %v1383
      %v1385 = vrot.slane %v1384, 4
      %v1387 = vshll.u32 %v907, 16
      %v1389 = vrot.slane %v1387, 5
      %v1390 = vsel %vm942, %v1385, %v1389
      %v1392 = vshrl.u32 %v844, 16
      %v1394 = vrot.slane %v1392, 4
      %v1395 = vshll.u32 %v844, 16
      %v1397 = vrot.slane %v1395, 5
      %v1398 = vor.u32 %v1394, %v1397
      %v1399 = vrot.slane %v1398, 4
      %v1401 = vshll.u32 %v908, 16
      %v1403 = vrot.slane %v1401, 5
      %v1404 = vsel %vm942, %v1399, %v1403
      %v1406 = vshrl.u32 %v845, 16
      %v1408 = vrot.slane %v1406, 4
      %v1409 = vshll.u32 %v845, 16
      %v1411 = vrot.slane %v1409, 5
      %v1412 = vor.u32 %v1408, %v1411
      %v1413 = vrot.slane %v1412, 4
      %v1415 = vshll.u32 %v909, 16
      %v1417 = vrot.slane %v1415, 5
      %v1418 = vsel %vm942, %v1413, %v1417
      %v1420 = vshrl.u32 %v846, 16
      %v1422 = vrot.slane %v1420, 4
      %v1423 = vshll.u32 %v846, 16
      %v1425 = vrot.slane %v1423, 5
      %v1426 = vor.u32 %v1422, %v1425
      %v1427 = vrot.slane %v1426, 4
      %v1429 = vshll.u32 %v910, 16
      %v1431 = vrot.slane %v1429, 5
      %v1432 = vsel %vm942, %v1427, %v1431
      %v1434 = vshrl.u32 %v847, 16
      %v1436 = vrot.slane %v1434, 4
      %v1437 = vshll.u32 %v847, 16
      %v1439 = vrot.slane %v1437, 5
      %v1440 = vor.u32 %v1436, %v1439
      %v1441 = vrot.slane %v1440, 4
      %v1443 = vshll.u32 %v911, 16
      %v1445 = vrot.slane %v1443, 5
      %v1446 = vsel %vm942, %v1441, %v1445
      %v1448 = vshrl.u32 %v848, 16
      %v1450 = vrot.slane %v1448, 4
      %v1451 = vshll.u32 %v848, 16
      %v1453 = vrot.slane %v1451, 5
      %v1454 = vor.u32 %v1450, %v1453
      %v1455 = vrot.slane %v1454, 4
      %v1457 = vshll.u32 %v912, 16
      %v1459 = vrot.slane %v1457, 5
      %v1460 = vsel %vm942, %v1455, %v1459
      %v1462 = vshrl.u32 %v849, 16
      %v1464 = vrot.slane %v1462, 4
      %v1465 = vshll.u32 %v849, 16
      %v1467 = vrot.slane %v1465, 5
      %v1468 = vor.u32 %v1464, %v1467
      %v1469 = vrot.slane %v1468, 4
      %v1471 = vshll.u32 %v913, 16
      %v1473 = vrot.slane %v1471, 5
      %v1474 = vsel %vm942, %v1469, %v1473
      %v1476 = vshrl.u32 %v850, 16
      %v1478 = vrot.slane %v1476, 4
      %v1479 = vshll.u32 %v850, 16
      %v1481 = vrot.slane %v1479, 5
      %v1482 = vor.u32 %v1478, %v1481
      %v1483 = vrot.slane %v1482, 4
      %v1485 = vshll.u32 %v914, 16
      %v1487 = vrot.slane %v1485, 5
      %v1488 = vsel %vm942, %v1483, %v1487
      %v1490 = vshrl.u32 %v851, 16
      %v1492 = vrot.slane %v1490, 4
      %v1493 = vshll.u32 %v851, 16
      %v1495 = vrot.slane %v1493, 5
      %v1496 = vor.u32 %v1492, %v1495
      %v1497 = vrot.slane %v1496, 4
      %v1499 = vshll.u32 %v915, 16
      %v1501 = vrot.slane %v1499, 5
      %v1502 = vsel %vm942, %v1497, %v1501
      %v1504 = vshrl.u32 %v852, 16
      %v1506 = vrot.slane %v1504, 4
      %v1507 = vshll.u32 %v852, 16
      %v1509 = vrot.slane %v1507, 5
      %v1510 = vor.u32 %v1506, %v1509
      %v1511 = vrot.slane %v1510, 4
      %v1513 = vshll.u32 %v916, 16
      %v1515 = vrot.slane %v1513, 5
      %v1516 = vsel %vm942, %v1511, %v1515
      %v1518 = vshrl.u32 %v853, 16
      %v1520 = vrot.slane %v1518, 4
      %v1521 = vshll.u32 %v853, 16
      %v1523 = vrot.slane %v1521, 5
      %v1524 = vor.u32 %v1520, %v1523
      %v1525 = vrot.slane %v1524, 4
      %v1527 = vshll.u32 %v917, 16
      %v1529 = vrot.slane %v1527, 5
      %v1530 = vsel %vm942, %v1525, %v1529
      %v1532 = vshrl.u32 %v854, 16
      %v1534 = vrot.slane %v1532, 4
      %v1535 = vshll.u32 %v854, 16
      %v1537 = vrot.slane %v1535, 5
      %v1538 = vor.u32 %v1534, %v1537
      %v1539 = vrot.slane %v1538, 4
      %v1541 = vshll.u32 %v918, 16
      %v1543 = vrot.slane %v1541, 5
      %v1544 = vsel %vm942, %v1539, %v1543
      %v1546 = vshrl.u32 %v855, 16
      %v1548 = vrot.slane %v1546, 4
      %v1549 = vshll.u32 %v855, 16
      %v1551 = vrot.slane %v1549, 5
      %v1552 = vor.u32 %v1548, %v1551
      %v1553 = vrot.slane %v1552, 4
      %v1555 = vshll.u32 %v919, 16
      %v1557 = vrot.slane %v1555, 5
      %v1558 = vsel %vm942, %v1553, %v1557
      %v1560 = vshrl.u32 %v856, 16
      %v1562 = vrot.slane %v1560, 4
      %v1563 = vshll.u32 %v856, 16
      %v1565 = vrot.slane %v1563, 5
      %v1566 = vor.u32 %v1562, %v1565
      %v1567 = vrot.slane %v1566, 4
      %v1569 = vshll.u32 %v920, 16
      %v1571 = vrot.slane %v1569, 5
      %v1572 = vsel %vm942, %v1567, %v1571
      %v1574 = vshrl.u32 %v857, 16
      %v1576 = vrot.slane %v1574, 4
      %v1577 = vshll.u32 %v857, 16
      %v1579 = vrot.slane %v1577, 5
      %v1580 = vor.u32 %v1576, %v1579
      %v1581 = vrot.slane %v1580, 4
      %v1583 = vshll.u32 %v921, 16
      %v1585 = vrot.slane %v1583, 5
      %v1586 = vsel %vm942, %v1581, %v1585
      %v1588 = vshrl.u32 %v858, 16
      %v1590 = vrot.slane %v1588, 4
      %v1591 = vshll.u32 %v858, 16
      %v1593 = vrot.slane %v1591, 5
      %v1594 = vor.u32 %v1590, %v1593
      %v1595 = vrot.slane %v1594, 4
      %v1597 = vshll.u32 %v922, 16
      %v1599 = vrot.slane %v1597, 5
      %v1600 = vsel %vm942, %v1595, %v1599
      %v1602 = vshrl.u32 %v859, 16
      %v1604 = vrot.slane %v1602, 4
      %v1605 = vshll.u32 %v859, 16
      %v1607 = vrot.slane %v1605, 5
      %v1608 = vor.u32 %v1604, %v1607
      %v1609 = vrot.slane %v1608, 4
      %v1611 = vshll.u32 %v923, 16
      %v1613 = vrot.slane %v1611, 5
      %v1614 = vsel %vm942, %v1609, %v1613
      %v1616 = vshrl.u32 %v860, 16
      %v1618 = vrot.slane %v1616, 4
      %v1619 = vshll.u32 %v860, 16
      %v1621 = vrot.slane %v1619, 5
      %v1622 = vor.u32 %v1618, %v1621
      %v1623 = vrot.slane %v1622, 4
      %v1625 = vshll.u32 %v924, 16
      %v1627 = vrot.slane %v1625, 5
      %v1628 = vsel %vm942, %v1623, %v1627
      %v1630 = vshrl.u32 %v861, 16
      %v1632 = vrot.slane %v1630, 4
      %v1633 = vshll.u32 %v861, 16
      %v1635 = vrot.slane %v1633, 5
      %v1636 = vor.u32 %v1632, %v1635
      %v1637 = vrot.slane %v1636, 4
      %v1639 = vshll.u32 %v925, 16
      %v1641 = vrot.slane %v1639, 5
      %v1642 = vsel %vm942, %v1637, %v1641
      %v1644 = vshrl.u32 %v862, 16
      %v1646 = vrot.slane %v1644, 4
      %v1647 = vshll.u32 %v862, 16
      %v1649 = vrot.slane %v1647, 5
      %v1650 = vor.u32 %v1646, %v1649
      %v1651 = vrot.slane %v1650, 4
      %v1653 = vshll.u32 %v926, 16
      %v1655 = vrot.slane %v1653, 5
      %v1656 = vsel %vm942, %v1651, %v1655
      %v1658 = vshrl.u32 %v863, 16
      %v1660 = vrot.slane %v1658, 4
      %v1661 = vshll.u32 %v863, 16
      %v1663 = vrot.slane %v1661, 5
      %v1664 = vor.u32 %v1660, %v1663
      %v1665 = vrot.slane %v1664, 4
      %v1667 = vshll.u32 %v927, 16
      %v1669 = vrot.slane %v1667, 5
      %v1670 = vsel %vm942, %v1665, %v1669
      %v1672 = vshrl.u32 %v864, 16
      %v1674 = vrot.slane %v1672, 4
      %v1675 = vshll.u32 %v864, 16
      %v1677 = vrot.slane %v1675, 5
      %v1678 = vor.u32 %v1674, %v1677
      %v1679 = vrot.slane %v1678, 4
      %v1681 = vshll.u32 %v928, 16
      %v1683 = vrot.slane %v1681, 5
      %v1684 = vsel %vm942, %v1679, %v1683
      %v1686 = vshrl.u32 %v865, 16
      %v1688 = vrot.slane %v1686, 4
      %v1689 = vshll.u32 %v865, 16
      %v1691 = vrot.slane %v1689, 5
      %v1692 = vor.u32 %v1688, %v1691
      %v1693 = vrot.slane %v1692, 4
      %v1695 = vshll.u32 %v929, 16
      %v1697 = vrot.slane %v1695, 5
      %v1698 = vsel %vm942, %v1693, %v1697
      %v1700 = vshrl.u32 %v866, 16
      %v1702 = vrot.slane %v1700, 4
      %v1703 = vshll.u32 %v866, 16
      %v1705 = vrot.slane %v1703, 5
      %v1706 = vor.u32 %v1702, %v1705
      %v1707 = vrot.slane %v1706, 4
      %v1709 = vshll.u32 %v930, 16
      %v1711 = vrot.slane %v1709, 5
      %v1712 = vsel %vm942, %v1707, %v1711
      %v1714 = vshrl.u32 %v867, 16
      %v1716 = vrot.slane %v1714, 4
      %v1717 = vshll.u32 %v867, 16
      %v1719 = vrot.slane %v1717, 5
      %v1720 = vor.u32 %v1716, %v1719
      %v1721 = vrot.slane %v1720, 4
      %v1723 = vshll.u32 %v931, 16
      %v1725 = vrot.slane %v1723, 5
      %v1726 = vsel %vm942, %v1721, %v1725
      %v1728 = vshrl.u32 %v868, 16
      %v1730 = vrot.slane %v1728, 4
      %v1731 = vshll.u32 %v868, 16
      %v1733 = vrot.slane %v1731, 5
      %v1734 = vor.u32 %v1730, %v1733
      %v1735 = vrot.slane %v1734, 4
      %v1737 = vshll.u32 %v932, 16
      %v1739 = vrot.slane %v1737, 5
      %v1740 = vsel %vm942, %v1735, %v1739
      %v1742 = vshrl.u32 %v869, 16
      %v1744 = vrot.slane %v1742, 4
      %v1745 = vshll.u32 %v869, 16
      %v1747 = vrot.slane %v1745, 5
      %v1748 = vor.u32 %v1744, %v1747
      %v1749 = vrot.slane %v1748, 4
      %v1751 = vshll.u32 %v933, 16
      %v1753 = vrot.slane %v1751, 5
      %v1754 = vsel %vm942, %v1749, %v1753
      %v1756 = vshrl.u32 %v870, 16
      %v1758 = vrot.slane %v1756, 4
      %v1759 = vshll.u32 %v870, 16
      %v1761 = vrot.slane %v1759, 5
      %v1762 = vor.u32 %v1758, %v1761
      %v1763 = vrot.slane %v1762, 4
      %v1765 = vshll.u32 %v934, 16
      %v1767 = vrot.slane %v1765, 5
      %v1768 = vsel %vm942, %v1763, %v1767
      %v1770 = vshrl.u32 %v871, 16
      %v1772 = vrot.slane %v1770, 4
      %v1773 = vshll.u32 %v871, 16
      %v1775 = vrot.slane %v1773, 5
      %v1776 = vor.u32 %v1772, %v1775
      %v1777 = vrot.slane %v1776, 4
      %v1779 = vshll.u32 %v935, 16
      %v1781 = vrot.slane %v1779, 5
      %v1782 = vsel %vm942, %v1777, %v1781
      %v1784 = vshrl.u32 %v872, 16
      %v1786 = vrot.slane %v1784, 4
      %v1787 = vshll.u32 %v872, 16
      %v1789 = vrot.slane %v1787, 5
      %v1790 = vor.u32 %v1786, %v1789
      %v1791 = vrot.slane %v1790, 4
      %v1793 = vshll.u32 %v936, 16
      %v1795 = vrot.slane %v1793, 5
      %v1796 = vsel %vm942, %v1791, %v1795
      %v1798 = vshrl.u32 %v873, 16
      %v1800 = vrot.slane %v1798, 4
      %v1801 = vshll.u32 %v873, 16
      %v1803 = vrot.slane %v1801, 5
      %v1804 = vor.u32 %v1800, %v1803
      %v1805 = vrot.slane %v1804, 4
      %v1807 = vshll.u32 %v937, 16
      %v1809 = vrot.slane %v1807, 5
      %v1810 = vsel %vm942, %v1805, %v1809
      %v1812 = vshrl.u32 %v874, 16
      %v1814 = vrot.slane %v1812, 4
      %v1815 = vshll.u32 %v874, 16
      %v1817 = vrot.slane %v1815, 5
      %v1818 = vor.u32 %v1814, %v1817
      %v1819 = vrot.slane %v1818, 4
      %v1821 = vshll.u32 %v938, 16
      %v1823 = vrot.slane %v1821, 5
      %v1824 = vsel %vm942, %v1819, %v1823
      %v1826 = vshrl.u32 %v875, 16
      %v1828 = vrot.slane %v1826, 4
      %v1829 = vshll.u32 %v875, 16
      %v1831 = vrot.slane %v1829, 5
      %v1832 = vor.u32 %v1828, %v1831
      %v1833 = vrot.slane %v1832, 4
      %v1835 = vshll.u32 %v939, 16
      %v1837 = vrot.slane %v1835, 5
      %v1838 = vsel %vm942, %v1833, %v1837
      %s1839 = scalar_lea.vmem [#allocation2], 8
      %v1840 = vld [vmem:[%s1839] sm:$0xf]
      %v1841 = vld [vmem:[%s1839 + $0x8] sm:$0xf]
      %v1842 = vld [vmem:[%s1839 + $0x10] sm:$0xf]
      %v1843 = vld [vmem:[%s1839 + $0x18] sm:$0xf]
      %v1844 = vld [vmem:[%s1839 + $0x20] sm:$0xf]
      %v1845 = vld [vmem:[%s1839 + $0x28] sm:$0xf]
      %v1846 = vld [vmem:[%s1839 + $0x30] sm:$0xf]
      %v1847 = vld [vmem:[%s1839 + $0x38] sm:$0xf]
      %v1848 = vld [vmem:[%s1839 + $0x48] sm:$0xf]
      %v1849 = vld [vmem:[%s1839 + $0x50] sm:$0xf]
      %v1850 = vld [vmem:[%s1839 + $0x58] sm:$0xf]
      %v1851 = vld [vmem:[%s1839 + $0x60] sm:$0xf]
      %v1852 = vld [vmem:[%s1839 + $0x68] sm:$0xf]
      %v1853 = vld [vmem:[%s1839 + $0x70] sm:$0xf]
      %v1854 = vld [vmem:[%s1839 + $0x78] sm:$0xf]
      %v1855 = vld [vmem:[%s1839 + $0x80] sm:$0xf]
      %v1856 = vld [vmem:[%s1839 + $0x90] sm:$0xf]
      %v1857 = vld [vmem:[%s1839 + $0x98] sm:$0xf]
      %v1858 = vld [vmem:[%s1839 + $0xa0] sm:$0xf]
      %v1859 = vld [vmem:[%s1839 + $0xa8] sm:$0xf]
      %v1860 = vld [vmem:[%s1839 + $0xb0] sm:$0xf]
      %v1861 = vld [vmem:[%s1839 + $0xb8] sm:$0xf]
      %v1862 = vld [vmem:[%s1839 + $0xc0] sm:$0xf]
      %v1863 = vld [vmem:[%s1839 + $0xc8] sm:$0xf]
      %v1864 = vld [vmem:[%s1839 + $0xd8] sm:$0xf]
      %v1865 = vld [vmem:[%s1839 + $0xe0] sm:$0xf]
      %v1866 = vld [vmem:[%s1839 + $0xe8] sm:$0xf]
      %v1867 = vld [vmem:[%s1839 + $0xf0] sm:$0xf]
      %v1868 = vld [vmem:[%s1839 + $0xf8] sm:$0xf]
      %v1869 = vld [vmem:[%s1839 + $0x100] sm:$0xf]
      %v1870 = vld [vmem:[%s1839 + $0x108] sm:$0xf]
      %v1871 = vld [vmem:[%s1839 + $0x110] sm:$0xf]
      %v1872 = vld [vmem:[%s1839 + $0x120] sm:$0xf]
      %v1873 = vld [vmem:[%s1839 + $0x128] sm:$0xf]
      %v1874 = vld [vmem:[%s1839 + $0x130] sm:$0xf]
      %v1875 = vld [vmem:[%s1839 + $0x138] sm:$0xf]
      %v1876 = vld [vmem:[%s1839 + $0x140] sm:$0xf]
      %v1877 = vld [vmem:[%s1839 + $0x148] sm:$0xf]
      %v1878 = vld [vmem:[%s1839 + $0x150] sm:$0xf]
      %v1879 = vld [vmem:[%s1839 + $0x158] sm:$0xf]
      %v1880 = vld [vmem:[%s1839 + $0x168] sm:$0xf]
      %v1881 = vld [vmem:[%s1839 + $0x170] sm:$0xf]
      %v1882 = vld [vmem:[%s1839 + $0x178] sm:$0xf]
      %v1883 = vld [vmem:[%s1839 + $0x180] sm:$0xf]
      %v1884 = vld [vmem:[%s1839 + $0x188] sm:$0xf]
      %v1885 = vld [vmem:[%s1839 + $0x190] sm:$0xf]
      %v1886 = vld [vmem:[%s1839 + $0x198] sm:$0xf]
      %v1887 = vld [vmem:[%s1839 + $0x1a0] sm:$0xf]
      %v1888 = vld [vmem:[%s1839 + $0x1b0] sm:$0xf]
      %v1889 = vld [vmem:[%s1839 + $0x1b8] sm:$0xf]
      %v1890 = vld [vmem:[%s1839 + $0x1c0] sm:$0xf]
      %v1891 = vld [vmem:[%s1839 + $0x1c8] sm:$0xf]
      %v1892 = vld [vmem:[%s1839 + $0x1d0] sm:$0xf]
      %v1893 = vld [vmem:[%s1839 + $0x1d8] sm:$0xf]
      %v1894 = vld [vmem:[%s1839 + $0x1e0] sm:$0xf]
      %v1895 = vld [vmem:[%s1839 + $0x1e8] sm:$0xf]
      %v1896 = vld [vmem:[%s1839 + $0x1f8] sm:$0xf]
      %v1897 = vld [vmem:[%s1839 + $0x200] sm:$0xf]
      %v1898 = vld [vmem:[%s1839 + $0x208] sm:$0xf]
      %v1899 = vld [vmem:[%s1839 + $0x210] sm:$0xf]
      %v1900 = vld [vmem:[%s1839 + $0x218] sm:$0xf]
      %v1901 = vld [vmem:[%s1839 + $0x220] sm:$0xf]
      %v1902 = vld [vmem:[%s1839 + $0x228] sm:$0xf]
      %v1903 = vld [vmem:[%s1839 + $0x230] sm:$0xf]
      %v1904 = vld [vmem:[%s1839 + $0x4] sm:$0x1]
      %v1905 = vld [vmem:[%s1839 + $0xc] sm:$0x1]
      %v1906 = vld [vmem:[%s1839 + $0x14] sm:$0x1]
      %v1907 = vld [vmem:[%s1839 + $0x1c] sm:$0x1]
      %v1908 = vld [vmem:[%s1839 + $0x24] sm:$0x1]
      %v1909 = vld [vmem:[%s1839 + $0x2c] sm:$0x1]
      %v1910 = vld [vmem:[%s1839 + $0x34] sm:$0x1]
      %v1911 = vld [vmem:[%s1839 + $0x3c] sm:$0x1]
      %v1912 = vld [vmem:[%s1839 + $0x4c] sm:$0x1]
      %v1913 = vld [vmem:[%s1839 + $0x54] sm:$0x1]
      %v1914 = vld [vmem:[%s1839 + $0x5c] sm:$0x1]
      %v1915 = vld [vmem:[%s1839 + $0x64] sm:$0x1]
      %v1916 = vld [vmem:[%s1839 + $0x6c] sm:$0x1]
      %v1917 = vld [vmem:[%s1839 + $0x74] sm:$0x1]
      %v1918 = vld [vmem:[%s1839 + $0x7c] sm:$0x1]
      %v1919 = vld [vmem:[%s1839 + $0x84] sm:$0x1]
      %v1920 = vld [vmem:[%s1839 + $0x94] sm:$0x1]
      %v1921 = vld [vmem:[%s1839 + $0x9c] sm:$0x1]
      %v1922 = vld [vmem:[%s1839 + $0xa4] sm:$0x1]
      %v1923 = vld [vmem:[%s1839 + $0xac] sm:$0x1]
      %v1924 = vld [vmem:[%s1839 + $0xb4] sm:$0x1]
      %v1925 = vld [vmem:[%s1839 + $0xbc] sm:$0x1]
      %v1926 = vld [vmem:[%s1839 + $0xc4] sm:$0x1]
      %v1927 = vld [vmem:[%s1839 + $0xcc] sm:$0x1]
      %v1928 = vld [vmem:[%s1839 + $0xdc] sm:$0x1]
      %v1929 = vld [vmem:[%s1839 + $0xe4] sm:$0x1]
      %v1930 = vld [vmem:[%s1839 + $0xec] sm:$0x1]
      %v1931 = vld [vmem:[%s1839 + $0xf4] sm:$0x1]
      %v1932 = vld [vmem:[%s1839 + $0xfc] sm:$0x1]
      %v1933 = vld [vmem:[%s1839 + $0x104] sm:$0x1]
      %v1934 = vld [vmem:[%s1839 + $0x10c] sm:$0x1]
      %v1935 = vld [vmem:[%s1839 + $0x114] sm:$0x1]
      %v1936 = vld [vmem:[%s1839 + $0x124] sm:$0x1]
      %v1937 = vld [vmem:[%s1839 + $0x12c] sm:$0x1]
      %v1938 = vld [vmem:[%s1839 + $0x134] sm:$0x1]
      %v1939 = vld [vmem:[%s1839 + $0x13c] sm:$0x1]
      %v1940 = vld [vmem:[%s1839 + $0x144] sm:$0x1]
      %v1941 = vld [vmem:[%s1839 + $0x14c] sm:$0x1]
      %v1942 = vld [vmem:[%s1839 + $0x154] sm:$0x1]
      %v1943 = vld [vmem:[%s1839 + $0x15c] sm:$0x1]
      %v1944 = vld [vmem:[%s1839 + $0x16c] sm:$0x1]
      %v1945 = vld [vmem:[%s1839 + $0x174] sm:$0x1]
      %v1946 = vld [vmem:[%s1839 + $0x17c] sm:$0x1]
      %v1947 = vld [vmem:[%s1839 + $0x184] sm:$0x1]
      %v1948 = vld [vmem:[%s1839 + $0x18c] sm:$0x1]
      %v1949 = vld [vmem:[%s1839 + $0x194] sm:$0x1]
      %v1950 = vld [vmem:[%s1839 + $0x19c] sm:$0x1]
      %v1951 = vld [vmem:[%s1839 + $0x1a4] sm:$0x1]
      %v1952 = vld [vmem:[%s1839 + $0x1b4] sm:$0x1]
      %v1953 = vld [vmem:[%s1839 + $0x1bc] sm:$0x1]
      %v1954 = vld [vmem:[%s1839 + $0x1c4] sm:$0x1]
      %v1955 = vld [vmem:[%s1839 + $0x1cc] sm:$0x1]
      %v1956 = vld [vmem:[%s1839 + $0x1d4] sm:$0x1]
      %v1957 = vld [vmem:[%s1839 + $0x1dc] sm:$0x1]
      %v1958 = vld [vmem:[%s1839 + $0x1e4] sm:$0x1]
      %v1959 = vld [vmem:[%s1839 + $0x1ec] sm:$0x1]
      %v1960 = vld [vmem:[%s1839 + $0x1fc] sm:$0x1]
      %v1961 = vld [vmem:[%s1839 + $0x204] sm:$0x1]
      %v1962 = vld [vmem:[%s1839 + $0x20c] sm:$0x1]
      %v1963 = vld [vmem:[%s1839 + $0x214] sm:$0x1]
      %v1964 = vld [vmem:[%s1839 + $0x21c] sm:$0x1]
      %v1965 = vld [vmem:[%s1839 + $0x224] sm:$0x1]
      %v1966 = vld [vmem:[%s1839 + $0x22c] sm:$0x1]
      %v1967 = vld [vmem:[%s1839 + $0x234] sm:$0x1]
      %v1969 = vshrl.u32 %v1840, 16
      %v1971 = vrot.slane %v1969, 4
      %v1972 = vshll.u32 %v1840, 16
      %v1974 = vrot.slane %v1972, 5
      %v1975 = vor.u32 %v1971, %v1974
      %v1976 = vrot.slane %v1975, 4
      %v1978 = vshll.u32 %v1904, 16
      %v1980 = vrot.slane %v1978, 5
      %v1981 = vsel %vm942, %v1976, %v1980
      %v1983 = vshrl.u32 %v1841, 16
      %v1985 = vrot.slane %v1983, 4
      %v1986 = vshll.u32 %v1841, 16
      %v1988 = vrot.slane %v1986, 5
      %v1989 = vor.u32 %v1985, %v1988
      %v1990 = vrot.slane %v1989, 4
      %v1992 = vshll.u32 %v1905, 16
      %v1994 = vrot.slane %v1992, 5
      %v1995 = vsel %vm942, %v1990, %v1994
      %v1997 = vshrl.u32 %v1842, 16
      %v1999 = vrot.slane %v1997, 4
      %v2000 = vshll.u32 %v1842, 16
      %v2002 = vrot.slane %v2000, 5
      %v2003 = vor.u32 %v1999, %v2002
      %v2004 = vrot.slane %v2003, 4
      %v2006 = vshll.u32 %v1906, 16
      %v2008 = vrot.slane %v2006, 5
      %v2009 = vsel %vm942, %v2004, %v2008
      %v2011 = vshrl.u32 %v1843, 16
      %v2013 = vrot.slane %v2011, 4
      %v2014 = vshll.u32 %v1843, 16
      %v2016 = vrot.slane %v2014, 5
      %v2017 = vor.u32 %v2013, %v2016
      %v2018 = vrot.slane %v2017, 4
      %v2020 = vshll.u32 %v1907, 16
      %v2022 = vrot.slane %v2020, 5
      %v2023 = vsel %vm942, %v2018, %v2022
      %v2025 = vshrl.u32 %v1844, 16
      %v2027 = vrot.slane %v2025, 4
      %v2028 = vshll.u32 %v1844, 16
      %v2030 = vrot.slane %v2028, 5
      %v2031 = vor.u32 %v2027, %v2030
      %v2032 = vrot.slane %v2031, 4
      %v2034 = vshll.u32 %v1908, 16
      %v2036 = vrot.slane %v2034, 5
      %v2037 = vsel %vm942, %v2032, %v2036
      %v2039 = vshrl.u32 %v1845, 16
      %v2041 = vrot.slane %v2039, 4
      %v2042 = vshll.u32 %v1845, 16
      %v2044 = vrot.slane %v2042, 5
      %v2045 = vor.u32 %v2041, %v2044
      %v2046 = vrot.slane %v2045, 4
      %v2048 = vshll.u32 %v1909, 16
      %v2050 = vrot.slane %v2048, 5
      %v2051 = vsel %vm942, %v2046, %v2050
      %v2053 = vshrl.u32 %v1846, 16
      %v2055 = vrot.slane %v2053, 4
      %v2056 = vshll.u32 %v1846, 16
      %v2058 = vrot.slane %v2056, 5
      %v2059 = vor.u32 %v2055, %v2058
      %v2060 = vrot.slane %v2059, 4
      %v2062 = vshll.u32 %v1910, 16
      %v2064 = vrot.slane %v2062, 5
      %v2065 = vsel %vm942, %v2060, %v2064
      %v2067 = vshrl.u32 %v1847, 16
      %v2069 = vrot.slane %v2067, 4
      %v2070 = vshll.u32 %v1847, 16
      %v2072 = vrot.slane %v2070, 5
      %v2073 = vor.u32 %v2069, %v2072
      %v2074 = vrot.slane %v2073, 4
      %v2076 = vshll.u32 %v1911, 16
      %v2078 = vrot.slane %v2076, 5
      %v2079 = vsel %vm942, %v2074, %v2078
      %v2081 = vshrl.u32 %v1848, 16
      %v2083 = vrot.slane %v2081, 4
      %v2084 = vshll.u32 %v1848, 16
      %v2086 = vrot.slane %v2084, 5
      %v2087 = vor.u32 %v2083, %v2086
      %v2088 = vrot.slane %v2087, 4
      %v2090 = vshll.u32 %v1912, 16
      %v2092 = vrot.slane %v2090, 5
      %v2093 = vsel %vm942, %v2088, %v2092
      %v2095 = vshrl.u32 %v1849, 16
      %v2097 = vrot.slane %v2095, 4
      %v2098 = vshll.u32 %v1849, 16
      %v2100 = vrot.slane %v2098, 5
      %v2101 = vor.u32 %v2097, %v2100
      %v2102 = vrot.slane %v2101, 4
      %v2104 = vshll.u32 %v1913, 16
      %v2106 = vrot.slane %v2104, 5
      %v2107 = vsel %vm942, %v2102, %v2106
      %v2109 = vshrl.u32 %v1850, 16
      %v2111 = vrot.slane %v2109, 4
      %v2112 = vshll.u32 %v1850, 16
      %v2114 = vrot.slane %v2112, 5
      %v2115 = vor.u32 %v2111, %v2114
      %v2116 = vrot.slane %v2115, 4
      %v2118 = vshll.u32 %v1914, 16
      %v2120 = vrot.slane %v2118, 5
      %v2121 = vsel %vm942, %v2116, %v2120
      %v2123 = vshrl.u32 %v1851, 16
      %v2125 = vrot.slane %v2123, 4
      %v2126 = vshll.u32 %v1851, 16
      %v2128 = vrot.slane %v2126, 5
      %v2129 = vor.u32 %v2125, %v2128
      %v2130 = vrot.slane %v2129, 4
      %v2132 = vshll.u32 %v1915, 16
      %v2134 = vrot.slane %v2132, 5
      %v2135 = vsel %vm942, %v2130, %v2134
      %v2137 = vshrl.u32 %v1852, 16
      %v2139 = vrot.slane %v2137, 4
      %v2140 = vshll.u32 %v1852, 16
      %v2142 = vrot.slane %v2140, 5
      %v2143 = vor.u32 %v2139, %v2142
      %v2144 = vrot.slane %v2143, 4
      %v2146 = vshll.u32 %v1916, 16
      %v2148 = vrot.slane %v2146, 5
      %v2149 = vsel %vm942, %v2144, %v2148
      %v2151 = vshrl.u32 %v1853, 16
      %v2153 = vrot.slane %v2151, 4
      %v2154 = vshll.u32 %v1853, 16
      %v2156 = vrot.slane %v2154, 5
      %v2157 = vor.u32 %v2153, %v2156
      %v2158 = vrot.slane %v2157, 4
      %v2160 = vshll.u32 %v1917, 16
      %v2162 = vrot.slane %v2160, 5
      %v2163 = vsel %vm942, %v2158, %v2162
      %v2165 = vshrl.u32 %v1854, 16
      %v2167 = vrot.slane %v2165, 4
      %v2168 = vshll.u32 %v1854, 16
      %v2170 = vrot.slane %v2168, 5
      %v2171 = vor.u32 %v2167, %v2170
      %v2172 = vrot.slane %v2171, 4
      %v2174 = vshll.u32 %v1918, 16
      %v2176 = vrot.slane %v2174, 5
      %v2177 = vsel %vm942, %v2172, %v2176
      %v2179 = vshrl.u32 %v1855, 16
      %v2181 = vrot.slane %v2179, 4
      %v2182 = vshll.u32 %v1855, 16
      %v2184 = vrot.slane %v2182, 5
      %v2185 = vor.u32 %v2181, %v2184
      %v2186 = vrot.slane %v2185, 4
      %v2188 = vshll.u32 %v1919, 16
      %v2190 = vrot.slane %v2188, 5
      %v2191 = vsel %vm942, %v2186, %v2190
      %v2193 = vshrl.u32 %v1856, 16
      %v2195 = vrot.slane %v2193, 4
      %v2196 = vshll.u32 %v1856, 16
      %v2198 = vrot.slane %v2196, 5
      %v2199 = vor.u32 %v2195, %v2198
      %v2200 = vrot.slane %v2199, 4
      %v2202 = vshll.u32 %v1920, 16
      %v2204 = vrot.slane %v2202, 5
      %v2205 = vsel %vm942, %v2200, %v2204
      %v2207 = vshrl.u32 %v1857, 16
      %v2209 = vrot.slane %v2207, 4
      %v2210 = vshll.u32 %v1857, 16
      %v2212 = vrot.slane %v2210, 5
      %v2213 = vor.u32 %v2209, %v2212
      %v2214 = vrot.slane %v2213, 4
      %v2216 = vshll.u32 %v1921, 16
      %v2218 = vrot.slane %v2216, 5
      %v2219 = vsel %vm942, %v2214, %v2218
      %v2221 = vshrl.u32 %v1858, 16
      %v2223 = vrot.slane %v2221, 4
      %v2224 = vshll.u32 %v1858, 16
      %v2226 = vrot.slane %v2224, 5
      %v2227 = vor.u32 %v2223, %v2226
      %v2228 = vrot.slane %v2227, 4
      %v2230 = vshll.u32 %v1922, 16
      %v2232 = vrot.slane %v2230, 5
      %v2233 = vsel %vm942, %v2228, %v2232
      %v2235 = vshrl.u32 %v1859, 16
      %v2237 = vrot.slane %v2235, 4
      %v2238 = vshll.u32 %v1859, 16
      %v2240 = vrot.slane %v2238, 5
      %v2241 = vor.u32 %v2237, %v2240
      %v2242 = vrot.slane %v2241, 4
      %v2244 = vshll.u32 %v1923, 16
      %v2246 = vrot.slane %v2244, 5
      %v2247 = vsel %vm942, %v2242, %v2246
      %v2249 = vshrl.u32 %v1860, 16
      %v2251 = vrot.slane %v2249, 4
      %v2252 = vshll.u32 %v1860, 16
      %v2254 = vrot.slane %v2252, 5
      %v2255 = vor.u32 %v2251, %v2254
      %v2256 = vrot.slane %v2255, 4
      %v2258 = vshll.u32 %v1924, 16
      %v2260 = vrot.slane %v2258, 5
      %v2261 = vsel %vm942, %v2256, %v2260
      %v2263 = vshrl.u32 %v1861, 16
      %v2265 = vrot.slane %v2263, 4
      %v2266 = vshll.u32 %v1861, 16
      %v2268 = vrot.slane %v2266, 5
      %v2269 = vor.u32 %v2265, %v2268
      %v2270 = vrot.slane %v2269, 4
      %v2272 = vshll.u32 %v1925, 16
      %v2274 = vrot.slane %v2272, 5
      %v2275 = vsel %vm942, %v2270, %v2274
      %v2277 = vshrl.u32 %v1862, 16
      %v2279 = vrot.slane %v2277, 4
      %v2280 = vshll.u32 %v1862, 16
      %v2282 = vrot.slane %v2280, 5
      %v2283 = vor.u32 %v2279, %v2282
      %v2284 = vrot.slane %v2283, 4
      %v2286 = vshll.u32 %v1926, 16
      %v2288 = vrot.slane %v2286, 5
      %v2289 = vsel %vm942, %v2284, %v2288
      %v2291 = vshrl.u32 %v1863, 16
      %v2293 = vrot.slane %v2291, 4
      %v2294 = vshll.u32 %v1863, 16
      %v2296 = vrot.slane %v2294, 5
      %v2297 = vor.u32 %v2293, %v2296
      %v2298 = vrot.slane %v2297, 4
      %v2300 = vshll.u32 %v1927, 16
      %v2302 = vrot.slane %v2300, 5
      %v2303 = vsel %vm942, %v2298, %v2302
      %v2305 = vshrl.u32 %v1864, 16
      %v2307 = vrot.slane %v2305, 4
      %v2308 = vshll.u32 %v1864, 16
      %v2310 = vrot.slane %v2308, 5
      %v2311 = vor.u32 %v2307, %v2310
      %v2312 = vrot.slane %v2311, 4
      %v2314 = vshll.u32 %v1928, 16
      %v2316 = vrot.slane %v2314, 5
      %v2317 = vsel %vm942, %v2312, %v2316
      %v2319 = vshrl.u32 %v1865, 16
      %v2321 = vrot.slane %v2319, 4
      %v2322 = vshll.u32 %v1865, 16
      %v2324 = vrot.slane %v2322, 5
      %v2325 = vor.u32 %v2321, %v2324
      %v2326 = vrot.slane %v2325, 4
      %v2328 = vshll.u32 %v1929, 16
      %v2330 = vrot.slane %v2328, 5
      %v2331 = vsel %vm942, %v2326, %v2330
      %v2333 = vshrl.u32 %v1866, 16
      %v2335 = vrot.slane %v2333, 4
      %v2336 = vshll.u32 %v1866, 16
      %v2338 = vrot.slane %v2336, 5
      %v2339 = vor.u32 %v2335, %v2338
      %v2340 = vrot.slane %v2339, 4
      %v2342 = vshll.u32 %v1930, 16
      %v2344 = vrot.slane %v2342, 5
      %v2345 = vsel %vm942, %v2340, %v2344
      %v2347 = vshrl.u32 %v1867, 16
      %v2349 = vrot.slane %v2347, 4
      %v2350 = vshll.u32 %v1867, 16
      %v2352 = vrot.slane %v2350, 5
      %v2353 = vor.u32 %v2349, %v2352
      %v2354 = vrot.slane %v2353, 4
      %v2356 = vshll.u32 %v1931, 16
      %v2358 = vrot.slane %v2356, 5
      %v2359 = vsel %vm942, %v2354, %v2358
      %v2361 = vshrl.u32 %v1868, 16
      %v2363 = vrot.slane %v2361, 4
      %v2364 = vshll.u32 %v1868, 16
      %v2366 = vrot.slane %v2364, 5
      %v2367 = vor.u32 %v2363, %v2366
      %v2368 = vrot.slane %v2367, 4
      %v2370 = vshll.u32 %v1932, 16
      %v2372 = vrot.slane %v2370, 5
      %v2373 = vsel %vm942, %v2368, %v2372
      %v2375 = vshrl.u32 %v1869, 16
      %v2377 = vrot.slane %v2375, 4
      %v2378 = vshll.u32 %v1869, 16
      %v2380 = vrot.slane %v2378, 5
      %v2381 = vor.u32 %v2377, %v2380
      %v2382 = vrot.slane %v2381, 4
      %v2384 = vshll.u32 %v1933, 16
      %v2386 = vrot.slane %v2384, 5
      %v2387 = vsel %vm942, %v2382, %v2386
      %v2389 = vshrl.u32 %v1870, 16
      %v2391 = vrot.slane %v2389, 4
      %v2392 = vshll.u32 %v1870, 16
      %v2394 = vrot.slane %v2392, 5
      %v2395 = vor.u32 %v2391, %v2394
      %v2396 = vrot.slane %v2395, 4
      %v2398 = vshll.u32 %v1934, 16
      %v2400 = vrot.slane %v2398, 5
      %v2401 = vsel %vm942, %v2396, %v2400
      %v2403 = vshrl.u32 %v1871, 16
      %v2405 = vrot.slane %v2403, 4
      %v2406 = vshll.u32 %v1871, 16
      %v2408 = vrot.slane %v2406, 5
      %v2409 = vor.u32 %v2405, %v2408
      %v2410 = vrot.slane %v2409, 4
      %v2412 = vshll.u32 %v1935, 16
      %v2414 = vrot.slane %v2412, 5
      %v2415 = vsel %vm942, %v2410, %v2414
      %v2417 = vshrl.u32 %v1872, 16
      %v2419 = vrot.slane %v2417, 4
      %v2420 = vshll.u32 %v1872, 16
      %v2422 = vrot.slane %v2420, 5
      %v2423 = vor.u32 %v2419, %v2422
      %v2424 = vrot.slane %v2423, 4
      %v2426 = vshll.u32 %v1936, 16
      %v2428 = vrot.slane %v2426, 5
      %v2429 = vsel %vm942, %v2424, %v2428
      %v2431 = vshrl.u32 %v1873, 16
      %v2433 = vrot.slane %v2431, 4
      %v2434 = vshll.u32 %v1873, 16
      %v2436 = vrot.slane %v2434, 5
      %v2437 = vor.u32 %v2433, %v2436
      %v2438 = vrot.slane %v2437, 4
      %v2440 = vshll.u32 %v1937, 16
      %v2442 = vrot.slane %v2440, 5
      %v2443 = vsel %vm942, %v2438, %v2442
      %v2445 = vshrl.u32 %v1874, 16
      %v2447 = vrot.slane %v2445, 4
      %v2448 = vshll.u32 %v1874, 16
      %v2450 = vrot.slane %v2448, 5
      %v2451 = vor.u32 %v2447, %v2450
      %v2452 = vrot.slane %v2451, 4
      %v2454 = vshll.u32 %v1938, 16
      %v2456 = vrot.slane %v2454, 5
      %v2457 = vsel %vm942, %v2452, %v2456
      %v2459 = vshrl.u32 %v1875, 16
      %v2461 = vrot.slane %v2459, 4
      %v2462 = vshll.u32 %v1875, 16
      %v2464 = vrot.slane %v2462, 5
      %v2465 = vor.u32 %v2461, %v2464
      %v2466 = vrot.slane %v2465, 4
      %v2468 = vshll.u32 %v1939, 16
      %v2470 = vrot.slane %v2468, 5
      %v2471 = vsel %vm942, %v2466, %v2470
      %v2473 = vshrl.u32 %v1876, 16
      %v2475 = vrot.slane %v2473, 4
      %v2476 = vshll.u32 %v1876, 16
      %v2478 = vrot.slane %v2476, 5
      %v2479 = vor.u32 %v2475, %v2478
      %v2480 = vrot.slane %v2479, 4
      %v2482 = vshll.u32 %v1940, 16
      %v2484 = vrot.slane %v2482, 5
      %v2485 = vsel %vm942, %v2480, %v2484
      %v2487 = vshrl.u32 %v1877, 16
      %v2489 = vrot.slane %v2487, 4
      %v2490 = vshll.u32 %v1877, 16
      %v2492 = vrot.slane %v2490, 5
      %v2493 = vor.u32 %v2489, %v2492
      %v2494 = vrot.slane %v2493, 4
      %v2496 = vshll.u32 %v1941, 16
      %v2498 = vrot.slane %v2496, 5
      %v2499 = vsel %vm942, %v2494, %v2498
      %v2501 = vshrl.u32 %v1878, 16
      %v2503 = vrot.slane %v2501, 4
      %v2504 = vshll.u32 %v1878, 16
      %v2506 = vrot.slane %v2504, 5
      %v2507 = vor.u32 %v2503, %v2506
      %v2508 = vrot.slane %v2507, 4
      %v2510 = vshll.u32 %v1942, 16
      %v2512 = vrot.slane %v2510, 5
      %v2513 = vsel %vm942, %v2508, %v2512
      %v2515 = vshrl.u32 %v1879, 16
      %v2517 = vrot.slane %v2515, 4
      %v2518 = vshll.u32 %v1879, 16
      %v2520 = vrot.slane %v2518, 5
      %v2521 = vor.u32 %v2517, %v2520
      %v2522 = vrot.slane %v2521, 4
      %v2524 = vshll.u32 %v1943, 16
      %v2526 = vrot.slane %v2524, 5
      %v2527 = vsel %vm942, %v2522, %v2526
      %v2529 = vshrl.u32 %v1880, 16
      %v2531 = vrot.slane %v2529, 4
      %v2532 = vshll.u32 %v1880, 16
      %v2534 = vrot.slane %v2532, 5
      %v2535 = vor.u32 %v2531, %v2534
      %v2536 = vrot.slane %v2535, 4
      %v2538 = vshll.u32 %v1944, 16
      %v2540 = vrot.slane %v2538, 5
      %v2541 = vsel %vm942, %v2536, %v2540
      %v2543 = vshrl.u32 %v1881, 16
      %v2545 = vrot.slane %v2543, 4
      %v2546 = vshll.u32 %v1881, 16
      %v2548 = vrot.slane %v2546, 5
      %v2549 = vor.u32 %v2545, %v2548
      %v2550 = vrot.slane %v2549, 4
      %v2552 = vshll.u32 %v1945, 16
      %v2554 = vrot.slane %v2552, 5
      %v2555 = vsel %vm942, %v2550, %v2554
      %v2557 = vshrl.u32 %v1882, 16
      %v2559 = vrot.slane %v2557, 4
      %v2560 = vshll.u32 %v1882, 16
      %v2562 = vrot.slane %v2560, 5
      %v2563 = vor.u32 %v2559, %v2562
      %v2564 = vrot.slane %v2563, 4
      %v2566 = vshll.u32 %v1946, 16
      %v2568 = vrot.slane %v2566, 5
      %v2569 = vsel %vm942, %v2564, %v2568
      %v2571 = vshrl.u32 %v1883, 16
      %v2573 = vrot.slane %v2571, 4
      %v2574 = vshll.u32 %v1883, 16
      %v2576 = vrot.slane %v2574, 5
      %v2577 = vor.u32 %v2573, %v2576
      %v2578 = vrot.slane %v2577, 4
      %v2580 = vshll.u32 %v1947, 16
      %v2582 = vrot.slane %v2580, 5
      %v2583 = vsel %vm942, %v2578, %v2582
      %v2585 = vshrl.u32 %v1884, 16
      %v2587 = vrot.slane %v2585, 4
      %v2588 = vshll.u32 %v1884, 16
      %v2590 = vrot.slane %v2588, 5
      %v2591 = vor.u32 %v2587, %v2590
      %v2592 = vrot.slane %v2591, 4
      %v2594 = vshll.u32 %v1948, 16
      %v2596 = vrot.slane %v2594, 5
      %v2597 = vsel %vm942, %v2592, %v2596
      %v2599 = vshrl.u32 %v1885, 16
      %v2601 = vrot.slane %v2599, 4
      %v2602 = vshll.u32 %v1885, 16
      %v2604 = vrot.slane %v2602, 5
      %v2605 = vor.u32 %v2601, %v2604
      %v2606 = vrot.slane %v2605, 4
      %v2608 = vshll.u32 %v1949, 16
      %v2610 = vrot.slane %v2608, 5
      %v2611 = vsel %vm942, %v2606, %v2610
      %v2613 = vshrl.u32 %v1886, 16
      %v2615 = vrot.slane %v2613, 4
      %v2616 = vshll.u32 %v1886, 16
      %v2618 = vrot.slane %v2616, 5
      %v2619 = vor.u32 %v2615, %v2618
      %v2620 = vrot.slane %v2619, 4
      %v2622 = vshll.u32 %v1950, 16
      %v2624 = vrot.slane %v2622, 5
      %v2625 = vsel %vm942, %v2620, %v2624
      %v2627 = vshrl.u32 %v1887, 16
      %v2629 = vrot.slane %v2627, 4
      %v2630 = vshll.u32 %v1887, 16
      %v2632 = vrot.slane %v2630, 5
      %v2633 = vor.u32 %v2629, %v2632
      %v2634 = vrot.slane %v2633, 4
      %v2636 = vshll.u32 %v1951, 16
      %v2638 = vrot.slane %v2636, 5
      %v2639 = vsel %vm942, %v2634, %v2638
      %v2641 = vshrl.u32 %v1888, 16
      %v2643 = vrot.slane %v2641, 4
      %v2644 = vshll.u32 %v1888, 16
      %v2646 = vrot.slane %v2644, 5
      %v2647 = vor.u32 %v2643, %v2646
      %v2648 = vrot.slane %v2647, 4
      %v2650 = vshll.u32 %v1952, 16
      %v2652 = vrot.slane %v2650, 5
      %v2653 = vsel %vm942, %v2648, %v2652
      %v2655 = vshrl.u32 %v1889, 16
      %v2657 = vrot.slane %v2655, 4
      %v2658 = vshll.u32 %v1889, 16
      %v2660 = vrot.slane %v2658, 5
      %v2661 = vor.u32 %v2657, %v2660
      %v2662 = vrot.slane %v2661, 4
      %v2664 = vshll.u32 %v1953, 16
      %v2666 = vrot.slane %v2664, 5
      %v2667 = vsel %vm942, %v2662, %v2666
      %v2669 = vshrl.u32 %v1890, 16
      %v2671 = vrot.slane %v2669, 4
      %v2672 = vshll.u32 %v1890, 16
      %v2674 = vrot.slane %v2672, 5
      %v2675 = vor.u32 %v2671, %v2674
      %v2676 = vrot.slane %v2675, 4
      %v2678 = vshll.u32 %v1954, 16
      %v2680 = vrot.slane %v2678, 5
      %v2681 = vsel %vm942, %v2676, %v2680
      %v2683 = vshrl.u32 %v1891, 16
      %v2685 = vrot.slane %v2683, 4
      %v2686 = vshll.u32 %v1891, 16
      %v2688 = vrot.slane %v2686, 5
      %v2689 = vor.u32 %v2685, %v2688
      %v2690 = vrot.slane %v2689, 4
      %v2692 = vshll.u32 %v1955, 16
      %v2694 = vrot.slane %v2692, 5
      %v2695 = vsel %vm942, %v2690, %v2694
      %v2697 = vshrl.u32 %v1892, 16
      %v2699 = vrot.slane %v2697, 4
      %v2700 = vshll.u32 %v1892, 16
      %v2702 = vrot.slane %v2700, 5
      %v2703 = vor.u32 %v2699, %v2702
      %v2704 = vrot.slane %v2703, 4
      %v2706 = vshll.u32 %v1956, 16
      %v2708 = vrot.slane %v2706, 5
      %v2709 = vsel %vm942, %v2704, %v2708
      %v2711 = vshrl.u32 %v1893, 16
      %v2713 = vrot.slane %v2711, 4
      %v2714 = vshll.u32 %v1893, 16
      %v2716 = vrot.slane %v2714, 5
      %v2717 = vor.u32 %v2713, %v2716
      %v2718 = vrot.slane %v2717, 4
      %v2720 = vshll.u32 %v1957, 16
      %v2722 = vrot.slane %v2720, 5
      %v2723 = vsel %vm942, %v2718, %v2722
      %v2725 = vshrl.u32 %v1894, 16
      %v2727 = vrot.slane %v2725, 4
      %v2728 = vshll.u32 %v1894, 16
      %v2730 = vrot.slane %v2728, 5
      %v2731 = vor.u32 %v2727, %v2730
      %v2732 = vrot.slane %v2731, 4
      %v2734 = vshll.u32 %v1958, 16
      %v2736 = vrot.slane %v2734, 5
      %v2737 = vsel %vm942, %v2732, %v2736
      %v2739 = vshrl.u32 %v1895, 16
      %v2741 = vrot.slane %v2739, 4
      %v2742 = vshll.u32 %v1895, 16
      %v2744 = vrot.slane %v2742, 5
      %v2745 = vor.u32 %v2741, %v2744
      %v2746 = vrot.slane %v2745, 4
      %v2748 = vshll.u32 %v1959, 16
      %v2750 = vrot.slane %v2748, 5
      %v2751 = vsel %vm942, %v2746, %v2750
      %v2753 = vshrl.u32 %v1896, 16
      %v2755 = vrot.slane %v2753, 4
      %v2756 = vshll.u32 %v1896, 16
      %v2758 = vrot.slane %v2756, 5
      %v2759 = vor.u32 %v2755, %v2758
      %v2760 = vrot.slane %v2759, 4
      %v2762 = vshll.u32 %v1960, 16
      %v2764 = vrot.slane %v2762, 5
      %v2765 = vsel %vm942, %v2760, %v2764
      %v2767 = vshrl.u32 %v1897, 16
      %v2769 = vrot.slane %v2767, 4
      %v2770 = vshll.u32 %v1897, 16
      %v2772 = vrot.slane %v2770, 5
      %v2773 = vor.u32 %v2769, %v2772
      %v2774 = vrot.slane %v2773, 4
      %v2776 = vshll.u32 %v1961, 16
      %v2778 = vrot.slane %v2776, 5
      %v2779 = vsel %vm942, %v2774, %v2778
      %v2781 = vshrl.u32 %v1898, 16
      %v2783 = vrot.slane %v2781, 4
      %v2784 = vshll.u32 %v1898, 16
      %v2786 = vrot.slane %v2784, 5
      %v2787 = vor.u32 %v2783, %v2786
      %v2788 = vrot.slane %v2787, 4
      %v2790 = vshll.u32 %v1962, 16
      %v2792 = vrot.slane %v2790, 5
      %v2793 = vsel %vm942, %v2788, %v2792
      %v2795 = vshrl.u32 %v1899, 16
      %v2797 = vrot.slane %v2795, 4
      %v2798 = vshll.u32 %v1899, 16
      %v2800 = vrot.slane %v2798, 5
      %v2801 = vor.u32 %v2797, %v2800
      %v2802 = vrot.slane %v2801, 4
      %v2804 = vshll.u32 %v1963, 16
      %v2806 = vrot.slane %v2804, 5
      %v2807 = vsel %vm942, %v2802, %v2806
      %v2809 = vshrl.u32 %v1900, 16
      %v2811 = vrot.slane %v2809, 4
      %v2812 = vshll.u32 %v1900, 16
      %v2814 = vrot.slane %v2812, 5
      %v2815 = vor.u32 %v2811, %v2814
      %v2816 = vrot.slane %v2815, 4
      %v2818 = vshll.u32 %v1964, 16
      %v2820 = vrot.slane %v2818, 5
      %v2821 = vsel %vm942, %v2816, %v2820
      %v2823 = vshrl.u32 %v1901, 16
      %v2825 = vrot.slane %v2823, 4
      %v2826 = vshll.u32 %v1901, 16
      %v2828 = vrot.slane %v2826, 5
      %v2829 = vor.u32 %v2825, %v2828
      %v2830 = vrot.slane %v2829, 4
      %v2832 = vshll.u32 %v1965, 16
      %v2834 = vrot.slane %v2832, 5
      %v2835 = vsel %vm942, %v2830, %v2834
      %v2837 = vshrl.u32 %v1902, 16
      %v2839 = vrot.slane %v2837, 4
      %v2840 = vshll.u32 %v1902, 16
      %v2842 = vrot.slane %v2840, 5
      %v2843 = vor.u32 %v2839, %v2842
      %v2844 = vrot.slane %v2843, 4
      %v2846 = vshll.u32 %v1966, 16
      %v2848 = vrot.slane %v2846, 5
      %v2849 = vsel %vm942, %v2844, %v2848
      %v2851 = vshrl.u32 %v1903, 16
      %v2853 = vrot.slane %v2851, 4
      %v2854 = vshll.u32 %v1903, 16
      %v2856 = vrot.slane %v2854, 5
      %v2857 = vor.u32 %v2853, %v2856
      %v2858 = vrot.slane %v2857, 4
      %v2860 = vshll.u32 %v1967, 16
      %v2862 = vrot.slane %v2860, 5
      %v2863 = vsel %vm942, %v2858, %v2862
      %s2864 = scalar_lea.vmem [#allocation2], 72
      %v2865 = vld [vmem:[%s2864] sm:$0xf]
      %v2866 = vld [vmem:[%s2864 + $0x8] sm:$0xf]
      %v2867 = vld [vmem:[%s2864 + $0x10] sm:$0xf]
      %v2868 = vld [vmem:[%s2864 + $0x18] sm:$0xf]
      %v2869 = vld [vmem:[%s2864 + $0x20] sm:$0xf]
      %v2870 = vld [vmem:[%s2864 + $0x28] sm:$0xf]
      %v2871 = vld [vmem:[%s2864 + $0x30] sm:$0xf]
      %v2872 = vld [vmem:[%s2864 + $0x38] sm:$0xf]
      %v2873 = vld [vmem:[%s2864 + $0x48] sm:$0xf]
      %v2874 = vld [vmem:[%s2864 + $0x50] sm:$0xf]
      %v2875 = vld [vmem:[%s2864 + $0x58] sm:$0xf]
      %v2876 = vld [vmem:[%s2864 + $0x60] sm:$0xf]
      %v2877 = vld [vmem:[%s2864 + $0x68] sm:$0xf]
      %v2878 = vld [vmem:[%s2864 + $0x70] sm:$0xf]
      %v2879 = vld [vmem:[%s2864 + $0x78] sm:$0xf]
      %v2880 = vld [vmem:[%s2864 + $0x80] sm:$0xf]
      %v2881 = vld [vmem:[%s2864 + $0x90] sm:$0xf]
      %v2882 = vld [vmem:[%s2864 + $0x98] sm:$0xf]
      %v2883 = vld [vmem:[%s2864 + $0xa0] sm:$0xf]
      %v2884 = vld [vmem:[%s2864 + $0xa8] sm:$0xf]
      %v2885 = vld [vmem:[%s2864 + $0xb0] sm:$0xf]
      %v2886 = vld [vmem:[%s2864 + $0xb8] sm:$0xf]
      %v2887 = vld [vmem:[%s2864 + $0xc0] sm:$0xf]
      %v2888 = vld [vmem:[%s2864 + $0xc8] sm:$0xf]
      %v2889 = vld [vmem:[%s2864 + $0xd8] sm:$0xf]
      %v2890 = vld [vmem:[%s2864 + $0xe0] sm:$0xf]
      %v2891 = vld [vmem:[%s2864 + $0xe8] sm:$0xf]
      %v2892 = vld [vmem:[%s2864 + $0xf0] sm:$0xf]
      %v2893 = vld [vmem:[%s2864 + $0xf8] sm:$0xf]
      %v2894 = vld [vmem:[%s2864 + $0x100] sm:$0xf]
      %v2895 = vld [vmem:[%s2864 + $0x108] sm:$0xf]
      %v2896 = vld [vmem:[%s2864 + $0x110] sm:$0xf]
      %v2897 = vld [vmem:[%s2864 + $0x120] sm:$0xf]
      %v2898 = vld [vmem:[%s2864 + $0x128] sm:$0xf]
      %v2899 = vld [vmem:[%s2864 + $0x130] sm:$0xf]
      %v2900 = vld [vmem:[%s2864 + $0x138] sm:$0xf]
      %v2901 = vld [vmem:[%s2864 + $0x140] sm:$0xf]
      %v2902 = vld [vmem:[%s2864 + $0x148] sm:$0xf]
      %v2903 = vld [vmem:[%s2864 + $0x150] sm:$0xf]
      %v2904 = vld [vmem:[%s2864 + $0x158] sm:$0xf]
      %v2905 = vld [vmem:[%s2864 + $0x168] sm:$0xf]
      %v2906 = vld [vmem:[%s2864 + $0x170] sm:$0xf]
      %v2907 = vld [vmem:[%s2864 + $0x178] sm:$0xf]
      %v2908 = vld [vmem:[%s2864 + $0x180] sm:$0xf]
      %v2909 = vld [vmem:[%s2864 + $0x188] sm:$0xf]
      %v2910 = vld [vmem:[%s2864 + $0x190] sm:$0xf]
      %v2911 = vld [vmem:[%s2864 + $0x198] sm:$0xf]
      %v2912 = vld [vmem:[%s2864 + $0x1a0] sm:$0xf]
      %v2913 = vld [vmem:[%s2864 + $0x1b0] sm:$0xf]
      %v2914 = vld [vmem:[%s2864 + $0x1b8] sm:$0xf]
      %v2915 = vld [vmem:[%s2864 + $0x1c0] sm:$0xf]
      %v2916 = vld [vmem:[%s2864 + $0x1c8] sm:$0xf]
      %v2917 = vld [vmem:[%s2864 + $0x1d0] sm:$0xf]
      %v2918 = vld [vmem:[%s2864 + $0x1d8] sm:$0xf]
      %v2919 = vld [vmem:[%s2864 + $0x1e0] sm:$0xf]
      %v2920 = vld [vmem:[%s2864 + $0x1e8] sm:$0xf]
      %v2921 = vld [vmem:[%s2864 + $0x1f8] sm:$0xf]
      %v2922 = vld [vmem:[%s2864 + $0x200] sm:$0xf]
      %v2923 = vld [vmem:[%s2864 + $0x208] sm:$0xf]
      %v2924 = vld [vmem:[%s2864 + $0x210] sm:$0xf]
      %v2925 = vld [vmem:[%s2864 + $0x218] sm:$0xf]
      %v2926 = vld [vmem:[%s2864 + $0x220] sm:$0xf]
      %v2927 = vld [vmem:[%s2864 + $0x228] sm:$0xf]
      %v2928 = vld [vmem:[%s2864 + $0x230] sm:$0xf]
      %v2929 = vld [vmem:[%s2864 + $0x4] sm:$0x1]
      %v2930 = vld [vmem:[%s2864 + $0xc] sm:$0x1]
      %v2931 = vld [vmem:[%s2864 + $0x14] sm:$0x1]
      %v2932 = vld [vmem:[%s2864 + $0x1c] sm:$0x1]
      %v2933 = vld [vmem:[%s2864 + $0x24] sm:$0x1]
      %v2934 = vld [vmem:[%s2864 + $0x2c] sm:$0x1]
      %v2935 = vld [vmem:[%s2864 + $0x34] sm:$0x1]
      %v2936 = vld [vmem:[%s2864 + $0x3c] sm:$0x1]
      %v2937 = vld [vmem:[%s2864 + $0x4c] sm:$0x1]
      %v2938 = vld [vmem:[%s2864 + $0x54] sm:$0x1]
      %v2939 = vld [vmem:[%s2864 + $0x5c] sm:$0x1]
      %v2940 = vld [vmem:[%s2864 + $0x64] sm:$0x1]
      %v2941 = vld [vmem:[%s2864 + $0x6c] sm:$0x1]
      %v2942 = vld [vmem:[%s2864 + $0x74] sm:$0x1]
      %v2943 = vld [vmem:[%s2864 + $0x7c] sm:$0x1]
      %v2944 = vld [vmem:[%s2864 + $0x84] sm:$0x1]
      %v2945 = vld [vmem:[%s2864 + $0x94] sm:$0x1]
      %v2946 = vld [vmem:[%s2864 + $0x9c] sm:$0x1]
      %v2947 = vld [vmem:[%s2864 + $0xa4] sm:$0x1]
      %v2948 = vld [vmem:[%s2864 + $0xac] sm:$0x1]
      %v2949 = vld [vmem:[%s2864 + $0xb4] sm:$0x1]
      %v2950 = vld [vmem:[%s2864 + $0xbc] sm:$0x1]
      %v2951 = vld [vmem:[%s2864 + $0xc4] sm:$0x1]
      %v2952 = vld [vmem:[%s2864 + $0xcc] sm:$0x1]
      %v2953 = vld [vmem:[%s2864 + $0xdc] sm:$0x1]
      %v2954 = vld [vmem:[%s2864 + $0xe4] sm:$0x1]
      %v2955 = vld [vmem:[%s2864 + $0xec] sm:$0x1]
      %v2956 = vld [vmem:[%s2864 + $0xf4] sm:$0x1]
      %v2957 = vld [vmem:[%s2864 + $0xfc] sm:$0x1]
      %v2958 = vld [vmem:[%s2864 + $0x104] sm:$0x1]
      %v2959 = vld [vmem:[%s2864 + $0x10c] sm:$0x1]
      %v2960 = vld [vmem:[%s2864 + $0x114] sm:$0x1]
      %v2961 = vld [vmem:[%s2864 + $0x124] sm:$0x1]
      %v2962 = vld [vmem:[%s2864 + $0x12c] sm:$0x1]
      %v2963 = vld [vmem:[%s2864 + $0x134] sm:$0x1]
      %v2964 = vld [vmem:[%s2864 + $0x13c] sm:$0x1]
      %v2965 = vld [vmem:[%s2864 + $0x144] sm:$0x1]
      %v2966 = vld [vmem:[%s2864 + $0x14c] sm:$0x1]
      %v2967 = vld [vmem:[%s2864 + $0x154] sm:$0x1]
      %v2968 = vld [vmem:[%s2864 + $0x15c] sm:$0x1]
      %v2969 = vld [vmem:[%s2864 + $0x16c] sm:$0x1]
      %v2970 = vld [vmem:[%s2864 + $0x174] sm:$0x1]
      %v2971 = vld [vmem:[%s2864 + $0x17c] sm:$0x1]
      %v2972 = vld [vmem:[%s2864 + $0x184] sm:$0x1]
      %v2973 = vld [vmem:[%s2864 + $0x18c] sm:$0x1]
      %v2974 = vld [vmem:[%s2864 + $0x194] sm:$0x1]
      %v2975 = vld [vmem:[%s2864 + $0x19c] sm:$0x1]
      %v2976 = vld [vmem:[%s2864 + $0x1a4] sm:$0x1]
      %v2977 = vld [vmem:[%s2864 + $0x1b4] sm:$0x1]
      %v2978 = vld [vmem:[%s2864 + $0x1bc] sm:$0x1]
      %v2979 = vld [vmem:[%s2864 + $0x1c4] sm:$0x1]
      %v2980 = vld [vmem:[%s2864 + $0x1cc] sm:$0x1]
      %v2981 = vld [vmem:[%s2864 + $0x1d4] sm:$0x1]
      %v2982 = vld [vmem:[%s2864 + $0x1dc] sm:$0x1]
      %v2983 = vld [vmem:[%s2864 + $0x1e4] sm:$0x1]
      %v2984 = vld [vmem:[%s2864 + $0x1ec] sm:$0x1]
      %v2985 = vld [vmem:[%s2864 + $0x1fc] sm:$0x1]
      %v2986 = vld [vmem:[%s2864 + $0x204] sm:$0x1]
      %v2987 = vld [vmem:[%s2864 + $0x20c] sm:$0x1]
      %v2988 = vld [vmem:[%s2864 + $0x214] sm:$0x1]
      %v2989 = vld [vmem:[%s2864 + $0x21c] sm:$0x1]
      %v2990 = vld [vmem:[%s2864 + $0x224] sm:$0x1]
      %v2991 = vld [vmem:[%s2864 + $0x22c] sm:$0x1]
      %v2992 = vld [vmem:[%s2864 + $0x234] sm:$0x1]
      %v2994 = vshrl.u32 %v2865, 16
      %v2996 = vrot.slane %v2994, 4
      %v2997 = vshll.u32 %v2865, 16
      %v2999 = vrot.slane %v2997, 5
      %v3000 = vor.u32 %v2996, %v2999
      %v3001 = vrot.slane %v3000, 4
      %v3003 = vshll.u32 %v2929, 16
      %v3005 = vrot.slane %v3003, 5
      %v3006 = vsel %vm942, %v3001, %v3005
      %v3008 = vshrl.u32 %v2866, 16
      %v3010 = vrot.slane %v3008, 4
      %v3011 = vshll.u32 %v2866, 16
      %v3013 = vrot.slane %v3011, 5
      %v3014 = vor.u32 %v3010, %v3013
      %v3015 = vrot.slane %v3014, 4
      %v3017 = vshll.u32 %v2930, 16
      %v3019 = vrot.slane %v3017, 5
      %v3020 = vsel %vm942, %v3015, %v3019
      %v3022 = vshrl.u32 %v2867, 16
      %v3024 = vrot.slane %v3022, 4
      %v3025 = vshll.u32 %v2867, 16
      %v3027 = vrot.slane %v3025, 5
      %v3028 = vor.u32 %v3024, %v3027
      %v3029 = vrot.slane %v3028, 4
      %v3031 = vshll.u32 %v2931, 16
      %v3033 = vrot.slane %v3031, 5
      %v3034 = vsel %vm942, %v3029, %v3033
      %v3036 = vshrl.u32 %v2868, 16
      %v3038 = vrot.slane %v3036, 4
      %v3039 = vshll.u32 %v2868, 16
      %v3041 = vrot.slane %v3039, 5
      %v3042 = vor.u32 %v3038, %v3041
      %v3043 = vrot.slane %v3042, 4
      %v3045 = vshll.u32 %v2932, 16
      %v3047 = vrot.slane %v3045, 5
      %v3048 = vsel %vm942, %v3043, %v3047
      %v3050 = vshrl.u32 %v2869, 16
      %v3052 = vrot.slane %v3050, 4
      %v3053 = vshll.u32 %v2869, 16
      %v3055 = vrot.slane %v3053, 5
      %v3056 = vor.u32 %v3052, %v3055
      %v3057 = vrot.slane %v3056, 4
      %v3059 = vshll.u32 %v2933, 16
      %v3061 = vrot.slane %v3059, 5
      %v3062 = vsel %vm942, %v3057, %v3061
      %v3064 = vshrl.u32 %v2870, 16
      %v3066 = vrot.slane %v3064, 4
      %v3067 = vshll.u32 %v2870, 16
      %v3069 = vrot.slane %v3067, 5
      %v3070 = vor.u32 %v3066, %v3069
      %v3071 = vrot.slane %v3070, 4
      %v3073 = vshll.u32 %v2934, 16
      %v3075 = vrot.slane %v3073, 5
      %v3076 = vsel %vm942, %v3071, %v3075
      %v3078 = vshrl.u32 %v2871, 16
      %v3080 = vrot.slane %v3078, 4
      %v3081 = vshll.u32 %v2871, 16
      %v3083 = vrot.slane %v3081, 5
      %v3084 = vor.u32 %v3080, %v3083
      %v3085 = vrot.slane %v3084, 4
      %v3087 = vshll.u32 %v2935, 16
      %v3089 = vrot.slane %v3087, 5
      %v3090 = vsel %vm942, %v3085, %v3089
      %v3092 = vshrl.u32 %v2872, 16
      %v3094 = vrot.slane %v3092, 4
      %v3095 = vshll.u32 %v2872, 16
      %v3097 = vrot.slane %v3095, 5
      %v3098 = vor.u32 %v3094, %v3097
      %v3099 = vrot.slane %v3098, 4
      %v3101 = vshll.u32 %v2936, 16
      %v3103 = vrot.slane %v3101, 5
      %v3104 = vsel %vm942, %v3099, %v3103
      %v3106 = vshrl.u32 %v2873, 16
      %v3108 = vrot.slane %v3106, 4
      %v3109 = vshll.u32 %v2873, 16
      %v3111 = vrot.slane %v3109, 5
      %v3112 = vor.u32 %v3108, %v3111
      %v3113 = vrot.slane %v3112, 4
      %v3115 = vshll.u32 %v2937, 16
      %v3117 = vrot.slane %v3115, 5
      %v3118 = vsel %vm942, %v3113, %v3117
      %v3120 = vshrl.u32 %v2874, 16
      %v3122 = vrot.slane %v3120, 4
      %v3123 = vshll.u32 %v2874, 16
      %v3125 = vrot.slane %v3123, 5
      %v3126 = vor.u32 %v3122, %v3125
      %v3127 = vrot.slane %v3126, 4
      %v3129 = vshll.u32 %v2938, 16
      %v3131 = vrot.slane %v3129, 5
      %v3132 = vsel %vm942, %v3127, %v3131
      %v3134 = vshrl.u32 %v2875, 16
      %v3136 = vrot.slane %v3134, 4
      %v3137 = vshll.u32 %v2875, 16
      %v3139 = vrot.slane %v3137, 5
      %v3140 = vor.u32 %v3136, %v3139
      %v3141 = vrot.slane %v3140, 4
      %v3143 = vshll.u32 %v2939, 16
      %v3145 = vrot.slane %v3143, 5
      %v3146 = vsel %vm942, %v3141, %v3145
      %v3148 = vshrl.u32 %v2876, 16
      %v3150 = vrot.slane %v3148, 4
      %v3151 = vshll.u32 %v2876, 16
      %v3153 = vrot.slane %v3151, 5
      %v3154 = vor.u32 %v3150, %v3153
      %v3155 = vrot.slane %v3154, 4
      %v3157 = vshll.u32 %v2940, 16
      %v3159 = vrot.slane %v3157, 5
      %v3160 = vsel %vm942, %v3155, %v3159
      %v3162 = vshrl.u32 %v2877, 16
      %v3164 = vrot.slane %v3162, 4
      %v3165 = vshll.u32 %v2877, 16
      %v3167 = vrot.slane %v3165, 5
      %v3168 = vor.u32 %v3164, %v3167
      %v3169 = vrot.slane %v3168, 4
      %v3171 = vshll.u32 %v2941, 16
      %v3173 = vrot.slane %v3171, 5
      %v3174 = vsel %vm942, %v3169, %v3173
      %v3176 = vshrl.u32 %v2878, 16
      %v3178 = vrot.slane %v3176, 4
      %v3179 = vshll.u32 %v2878, 16
      %v3181 = vrot.slane %v3179, 5
      %v3182 = vor.u32 %v3178, %v3181
      %v3183 = vrot.slane %v3182, 4
      %v3185 = vshll.u32 %v2942, 16
      %v3187 = vrot.slane %v3185, 5
      %v3188 = vsel %vm942, %v3183, %v3187
      %v3190 = vshrl.u32 %v2879, 16
      %v3192 = vrot.slane %v3190, 4
      %v3193 = vshll.u32 %v2879, 16
      %v3195 = vrot.slane %v3193, 5
      %v3196 = vor.u32 %v3192, %v3195
      %v3197 = vrot.slane %v3196, 4
      %v3199 = vshll.u32 %v2943, 16
      %v3201 = vrot.slane %v3199, 5
      %v3202 = vsel %vm942, %v3197, %v3201
      %v3204 = vshrl.u32 %v2880, 16
      %v3206 = vrot.slane %v3204, 4
      %v3207 = vshll.u32 %v2880, 16
      %v3209 = vrot.slane %v3207, 5
      %v3210 = vor.u32 %v3206, %v3209
      %v3211 = vrot.slane %v3210, 4
      %v3213 = vshll.u32 %v2944, 16
      %v3215 = vrot.slane %v3213, 5
      %v3216 = vsel %vm942, %v3211, %v3215
      %v3218 = vshrl.u32 %v2881, 16
      %v3220 = vrot.slane %v3218, 4
      %v3221 = vshll.u32 %v2881, 16
      %v3223 = vrot.slane %v3221, 5
      %v3224 = vor.u32 %v3220, %v3223
      %v3225 = vrot.slane %v3224, 4
      %v3227 = vshll.u32 %v2945, 16
      %v3229 = vrot.slane %v3227, 5
      %v3230 = vsel %vm942, %v3225, %v3229
      %v3232 = vshrl.u32 %v2882, 16
      %v3234 = vrot.slane %v3232, 4
      %v3235 = vshll.u32 %v2882, 16
      %v3237 = vrot.slane %v3235, 5
      %v3238 = vor.u32 %v3234, %v3237
      %v3239 = vrot.slane %v3238, 4
      %v3241 = vshll.u32 %v2946, 16
      %v3243 = vrot.slane %v3241, 5
      %v3244 = vsel %vm942, %v3239, %v3243
      %v3246 = vshrl.u32 %v2883, 16
      %v3248 = vrot.slane %v3246, 4
      %v3249 = vshll.u32 %v2883, 16
      %v3251 = vrot.slane %v3249, 5
      %v3252 = vor.u32 %v3248, %v3251
      %v3253 = vrot.slane %v3252, 4
      %v3255 = vshll.u32 %v2947, 16
      %v3257 = vrot.slane %v3255, 5
      %v3258 = vsel %vm942, %v3253, %v3257
      %v3260 = vshrl.u32 %v2884, 16
      %v3262 = vrot.slane %v3260, 4
      %v3263 = vshll.u32 %v2884, 16
      %v3265 = vrot.slane %v3263, 5
      %v3266 = vor.u32 %v3262, %v3265
      %v3267 = vrot.slane %v3266, 4
      %v3269 = vshll.u32 %v2948, 16
      %v3271 = vrot.slane %v3269, 5
      %v3272 = vsel %vm942, %v3267, %v3271
      %v3274 = vshrl.u32 %v2885, 16
      %v3276 = vrot.slane %v3274, 4
      %v3277 = vshll.u32 %v2885, 16
      %v3279 = vrot.slane %v3277, 5
      %v3280 = vor.u32 %v3276, %v3279
      %v3281 = vrot.slane %v3280, 4
      %v3283 = vshll.u32 %v2949, 16
      %v3285 = vrot.slane %v3283, 5
      %v3286 = vsel %vm942, %v3281, %v3285
      %v3288 = vshrl.u32 %v2886, 16
      %v3290 = vrot.slane %v3288, 4
      %v3291 = vshll.u32 %v2886, 16
      %v3293 = vrot.slane %v3291, 5
      %v3294 = vor.u32 %v3290, %v3293
      %v3295 = vrot.slane %v3294, 4
      %v3297 = vshll.u32 %v2950, 16
      %v3299 = vrot.slane %v3297, 5
      %v3300 = vsel %vm942, %v3295, %v3299
      %v3302 = vshrl.u32 %v2887, 16
      %v3304 = vrot.slane %v3302, 4
      %v3305 = vshll.u32 %v2887, 16
      %v3307 = vrot.slane %v3305, 5
      %v3308 = vor.u32 %v3304, %v3307
      %v3309 = vrot.slane %v3308, 4
      %v3311 = vshll.u32 %v2951, 16
      %v3313 = vrot.slane %v3311, 5
      %v3314 = vsel %vm942, %v3309, %v3313
      %v3316 = vshrl.u32 %v2888, 16
      %v3318 = vrot.slane %v3316, 4
      %v3319 = vshll.u32 %v2888, 16
      %v3321 = vrot.slane %v3319, 5
      %v3322 = vor.u32 %v3318, %v3321
      %v3323 = vrot.slane %v3322, 4
      %v3325 = vshll.u32 %v2952, 16
      %v3327 = vrot.slane %v3325, 5
      %v3328 = vsel %vm942, %v3323, %v3327
      %v3330 = vshrl.u32 %v2889, 16
      %v3332 = vrot.slane %v3330, 4
      %v3333 = vshll.u32 %v2889, 16
      %v3335 = vrot.slane %v3333, 5
      %v3336 = vor.u32 %v3332, %v3335
      %v3337 = vrot.slane %v3336, 4
      %v3339 = vshll.u32 %v2953, 16
      %v3341 = vrot.slane %v3339, 5
      %v3342 = vsel %vm942, %v3337, %v3341
      %v3344 = vshrl.u32 %v2890, 16
      %v3346 = vrot.slane %v3344, 4
      %v3347 = vshll.u32 %v2890, 16
      %v3349 = vrot.slane %v3347, 5
      %v3350 = vor.u32 %v3346, %v3349
      %v3351 = vrot.slane %v3350, 4
      %v3353 = vshll.u32 %v2954, 16
      %v3355 = vrot.slane %v3353, 5
      %v3356 = vsel %vm942, %v3351, %v3355
      %v3358 = vshrl.u32 %v2891, 16
      %v3360 = vrot.slane %v3358, 4
      %v3361 = vshll.u32 %v2891, 16
      %v3363 = vrot.slane %v3361, 5
      %v3364 = vor.u32 %v3360, %v3363
      %v3365 = vrot.slane %v3364, 4
      %v3367 = vshll.u32 %v2955, 16
      %v3369 = vrot.slane %v3367, 5
      %v3370 = vsel %vm942, %v3365, %v3369
      %v3372 = vshrl.u32 %v2892, 16
      %v3374 = vrot.slane %v3372, 4
      %v3375 = vshll.u32 %v2892, 16
      %v3377 = vrot.slane %v3375, 5
      %v3378 = vor.u32 %v3374, %v3377
      %v3379 = vrot.slane %v3378, 4
      %v3381 = vshll.u32 %v2956, 16
      %v3383 = vrot.slane %v3381, 5
      %v3384 = vsel %vm942, %v3379, %v3383
      %v3386 = vshrl.u32 %v2893, 16
      %v3388 = vrot.slane %v3386, 4
      %v3389 = vshll.u32 %v2893, 16
      %v3391 = vrot.slane %v3389, 5
      %v3392 = vor.u32 %v3388, %v3391
      %v3393 = vrot.slane %v3392, 4
      %v3395 = vshll.u32 %v2957, 16
      %v3397 = vrot.slane %v3395, 5
      %v3398 = vsel %vm942, %v3393, %v3397
      %v3400 = vshrl.u32 %v2894, 16
      %v3402 = vrot.slane %v3400, 4
      %v3403 = vshll.u32 %v2894, 16
      %v3405 = vrot.slane %v3403, 5
      %v3406 = vor.u32 %v3402, %v3405
      %v3407 = vrot.slane %v3406, 4
      %v3409 = vshll.u32 %v2958, 16
      %v3411 = vrot.slane %v3409, 5
      %v3412 = vsel %vm942, %v3407, %v3411
      %v3414 = vshrl.u32 %v2895, 16
      %v3416 = vrot.slane %v3414, 4
      %v3417 = vshll.u32 %v2895, 16
      %v3419 = vrot.slane %v3417, 5
      %v3420 = vor.u32 %v3416, %v3419
      %v3421 = vrot.slane %v3420, 4
      %v3423 = vshll.u32 %v2959, 16
      %v3425 = vrot.slane %v3423, 5
      %v3426 = vsel %vm942, %v3421, %v3425
      %v3428 = vshrl.u32 %v2896, 16
      %v3430 = vrot.slane %v3428, 4
      %v3431 = vshll.u32 %v2896, 16
      %v3433 = vrot.slane %v3431, 5
      %v3434 = vor.u32 %v3430, %v3433
      %v3435 = vrot.slane %v3434, 4
      %v3437 = vshll.u32 %v2960, 16
      %v3439 = vrot.slane %v3437, 5
      %v3440 = vsel %vm942, %v3435, %v3439
      %v3442 = vshrl.u32 %v2897, 16
      %v3444 = vrot.slane %v3442, 4
      %v3445 = vshll.u32 %v2897, 16
      %v3447 = vrot.slane %v3445, 5
      %v3448 = vor.u32 %v3444, %v3447
      %v3449 = vrot.slane %v3448, 4
      %v3451 = vshll.u32 %v2961, 16
      %v3453 = vrot.slane %v3451, 5
      %v3454 = vsel %vm942, %v3449, %v3453
      %v3456 = vshrl.u32 %v2898, 16
      %v3458 = vrot.slane %v3456, 4
      %v3459 = vshll.u32 %v2898, 16
      %v3461 = vrot.slane %v3459, 5
      %v3462 = vor.u32 %v3458, %v3461
      %v3463 = vrot.slane %v3462, 4
      %v3465 = vshll.u32 %v2962, 16
      %v3467 = vrot.slane %v3465, 5
      %v3468 = vsel %vm942, %v3463, %v3467
      %v3470 = vshrl.u32 %v2899, 16
      %v3472 = vrot.slane %v3470, 4
      %v3473 = vshll.u32 %v2899, 16
      %v3475 = vrot.slane %v3473, 5
      %v3476 = vor.u32 %v3472, %v3475
      %v3477 = vrot.slane %v3476, 4
      %v3479 = vshll.u32 %v2963, 16
      %v3481 = vrot.slane %v3479, 5
      %v3482 = vsel %vm942, %v3477, %v3481
      %v3484 = vshrl.u32 %v2900, 16
      %v3486 = vrot.slane %v3484, 4
      %v3487 = vshll.u32 %v2900, 16
      %v3489 = vrot.slane %v3487, 5
      %v3490 = vor.u32 %v3486, %v3489
      %v3491 = vrot.slane %v3490, 4
      %v3493 = vshll.u32 %v2964, 16
      %v3495 = vrot.slane %v3493, 5
      %v3496 = vsel %vm942, %v3491, %v3495
      %v3498 = vshrl.u32 %v2901, 16
      %v3500 = vrot.slane %v3498, 4
      %v3501 = vshll.u32 %v2901, 16
      %v3503 = vrot.slane %v3501, 5
      %v3504 = vor.u32 %v3500, %v3503
      %v3505 = vrot.slane %v3504, 4
      %v3507 = vshll.u32 %v2965, 16
      %v3509 = vrot.slane %v3507, 5
      %v3510 = vsel %vm942, %v3505, %v3509
      %v3512 = vshrl.u32 %v2902, 16
      %v3514 = vrot.slane %v3512, 4
      %v3515 = vshll.u32 %v2902, 16
      %v3517 = vrot.slane %v3515, 5
      %v3518 = vor.u32 %v3514, %v3517
      %v3519 = vrot.slane %v3518, 4
      %v3521 = vshll.u32 %v2966, 16
      %v3523 = vrot.slane %v3521, 5
      %v3524 = vsel %vm942, %v3519, %v3523
      %v3526 = vshrl.u32 %v2903, 16
      %v3528 = vrot.slane %v3526, 4
      %v3529 = vshll.u32 %v2903, 16
      %v3531 = vrot.slane %v3529, 5
      %v3532 = vor.u32 %v3528, %v3531
      %v3533 = vrot.slane %v3532, 4
      %v3535 = vshll.u32 %v2967, 16
      %v3537 = vrot.slane %v3535, 5
      %v3538 = vsel %vm942, %v3533, %v3537
      %v3540 = vshrl.u32 %v2904, 16
      %v3542 = vrot.slane %v3540, 4
      %v3543 = vshll.u32 %v2904, 16
      %v3545 = vrot.slane %v3543, 5
      %v3546 = vor.u32 %v3542, %v3545
      %v3547 = vrot.slane %v3546, 4
      %v3549 = vshll.u32 %v2968, 16
      %v3551 = vrot.slane %v3549, 5
      %v3552 = vsel %vm942, %v3547, %v3551
      %v3554 = vshrl.u32 %v2905, 16
      %v3556 = vrot.slane %v3554, 4
      %v3557 = vshll.u32 %v2905, 16
      %v3559 = vrot.slane %v3557, 5
      %v3560 = vor.u32 %v3556, %v3559
      %v3561 = vrot.slane %v3560, 4
      %v3563 = vshll.u32 %v2969, 16
      %v3565 = vrot.slane %v3563, 5
      %v3566 = vsel %vm942, %v3561, %v3565
      %v3568 = vshrl.u32 %v2906, 16
      %v3570 = vrot.slane %v3568, 4
      %v3571 = vshll.u32 %v2906, 16
      %v3573 = vrot.slane %v3571, 5
      %v3574 = vor.u32 %v3570, %v3573
      %v3575 = vrot.slane %v3574, 4
      %v3577 = vshll.u32 %v2970, 16
      %v3579 = vrot.slane %v3577, 5
      %v3580 = vsel %vm942, %v3575, %v3579
      %v3582 = vshrl.u32 %v2907, 16
      %v3584 = vrot.slane %v3582, 4
      %v3585 = vshll.u32 %v2907, 16
      %v3587 = vrot.slane %v3585, 5
      %v3588 = vor.u32 %v3584, %v3587
      %v3589 = vrot.slane %v3588, 4
      %v3591 = vshll.u32 %v2971, 16
      %v3593 = vrot.slane %v3591, 5
      %v3594 = vsel %vm942, %v3589, %v3593
      %v3596 = vshrl.u32 %v2908, 16
      %v3598 = vrot.slane %v3596, 4
      %v3599 = vshll.u32 %v2908, 16
      %v3601 = vrot.slane %v3599, 5
      %v3602 = vor.u32 %v3598, %v3601
      %v3603 = vrot.slane %v3602, 4
      %v3605 = vshll.u32 %v2972, 16
      %v3607 = vrot.slane %v3605, 5
      %v3608 = vsel %vm942, %v3603, %v3607
      %v3610 = vshrl.u32 %v2909, 16
      %v3612 = vrot.slane %v3610, 4
      %v3613 = vshll.u32 %v2909, 16
      %v3615 = vrot.slane %v3613, 5
      %v3616 = vor.u32 %v3612, %v3615
      %v3617 = vrot.slane %v3616, 4
      %v3619 = vshll.u32 %v2973, 16
      %v3621 = vrot.slane %v3619, 5
      %v3622 = vsel %vm942, %v3617, %v3621
      %v3624 = vshrl.u32 %v2910, 16
      %v3626 = vrot.slane %v3624, 4
      %v3627 = vshll.u32 %v2910, 16
      %v3629 = vrot.slane %v3627, 5
      %v3630 = vor.u32 %v3626, %v3629
      %v3631 = vrot.slane %v3630, 4
      %v3633 = vshll.u32 %v2974, 16
      %v3635 = vrot.slane %v3633, 5
      %v3636 = vsel %vm942, %v3631, %v3635
      %v3638 = vshrl.u32 %v2911, 16
      %v3640 = vrot.slane %v3638, 4
      %v3641 = vshll.u32 %v2911, 16
      %v3643 = vrot.slane %v3641, 5
      %v3644 = vor.u32 %v3640, %v3643
      %v3645 = vrot.slane %v3644, 4
      %v3647 = vshll.u32 %v2975, 16
      %v3649 = vrot.slane %v3647, 5
      %v3650 = vsel %vm942, %v3645, %v3649
      %v3652 = vshrl.u32 %v2912, 16
      %v3654 = vrot.slane %v3652, 4
      %v3655 = vshll.u32 %v2912, 16
      %v3657 = vrot.slane %v3655, 5
      %v3658 = vor.u32 %v3654, %v3657
      %v3659 = vrot.slane %v3658, 4
      %v3661 = vshll.u32 %v2976, 16
      %v3663 = vrot.slane %v3661, 5
      %v3664 = vsel %vm942, %v3659, %v3663
      %v3666 = vshrl.u32 %v2913, 16
      %v3668 = vrot.slane %v3666, 4
      %v3669 = vshll.u32 %v2913, 16
      %v3671 = vrot.slane %v3669, 5
      %v3672 = vor.u32 %v3668, %v3671
      %v3673 = vrot.slane %v3672, 4
      %v3675 = vshll.u32 %v2977, 16
      %v3677 = vrot.slane %v3675, 5
      %v3678 = vsel %vm942, %v3673, %v3677
      %v3680 = vshrl.u32 %v2914, 16
      %v3682 = vrot.slane %v3680, 4
      %v3683 = vshll.u32 %v2914, 16
      %v3685 = vrot.slane %v3683, 5
      %v3686 = vor.u32 %v3682, %v3685
      %v3687 = vrot.slane %v3686, 4
      %v3689 = vshll.u32 %v2978, 16
      %v3691 = vrot.slane %v3689, 5
      %v3692 = vsel %vm942, %v3687, %v3691
      %v3694 = vshrl.u32 %v2915, 16
      %v3696 = vrot.slane %v3694, 4
      %v3697 = vshll.u32 %v2915, 16
      %v3699 = vrot.slane %v3697, 5
      %v3700 = vor.u32 %v3696, %v3699
      %v3701 = vrot.slane %v3700, 4
      %v3703 = vshll.u32 %v2979, 16
      %v3705 = vrot.slane %v3703, 5
      %v3706 = vsel %vm942, %v3701, %v3705
      %v3708 = vshrl.u32 %v2916, 16
      %v3710 = vrot.slane %v3708, 4
      %v3711 = vshll.u32 %v2916, 16
      %v3713 = vrot.slane %v3711, 5
      %v3714 = vor.u32 %v3710, %v3713
      %v3715 = vrot.slane %v3714, 4
      %v3717 = vshll.u32 %v2980, 16
      %v3719 = vrot.slane %v3717, 5
      %v3720 = vsel %vm942, %v3715, %v3719
      %v3722 = vshrl.u32 %v2917, 16
      %v3724 = vrot.slane %v3722, 4
      %v3725 = vshll.u32 %v2917, 16
      %v3727 = vrot.slane %v3725, 5
      %v3728 = vor.u32 %v3724, %v3727
      %v3729 = vrot.slane %v3728, 4
      %v3731 = vshll.u32 %v2981, 16
      %v3733 = vrot.slane %v3731, 5
      %v3734 = vsel %vm942, %v3729, %v3733
      %v3736 = vshrl.u32 %v2918, 16
      %v3738 = vrot.slane %v3736, 4
      %v3739 = vshll.u32 %v2918, 16
      %v3741 = vrot.slane %v3739, 5
      %v3742 = vor.u32 %v3738, %v3741
      %v3743 = vrot.slane %v3742, 4
      %v3745 = vshll.u32 %v2982, 16
      %v3747 = vrot.slane %v3745, 5
      %v3748 = vsel %vm942, %v3743, %v3747
      %v3750 = vshrl.u32 %v2919, 16
      %v3752 = vrot.slane %v3750, 4
      %v3753 = vshll.u32 %v2919, 16
      %v3755 = vrot.slane %v3753, 5
      %v3756 = vor.u32 %v3752, %v3755
      %v3757 = vrot.slane %v3756, 4
      %v3759 = vshll.u32 %v2983, 16
      %v3761 = vrot.slane %v3759, 5
      %v3762 = vsel %vm942, %v3757, %v3761
      %v3764 = vshrl.u32 %v2920, 16
      %v3766 = vrot.slane %v3764, 4
      %v3767 = vshll.u32 %v2920, 16
      %v3769 = vrot.slane %v3767, 5
      %v3770 = vor.u32 %v3766, %v3769
      %v3771 = vrot.slane %v3770, 4
      %v3773 = vshll.u32 %v2984, 16
      %v3775 = vrot.slane %v3773, 5
      %v3776 = vsel %vm942, %v3771, %v3775
      %v3778 = vshrl.u32 %v2921, 16
      %v3780 = vrot.slane %v3778, 4
      %v3781 = vshll.u32 %v2921, 16
      %v3783 = vrot.slane %v3781, 5
      %v3784 = vor.u32 %v3780, %v3783
      %v3785 = vrot.slane %v3784, 4
      %v3787 = vshll.u32 %v2985, 16
      %v3789 = vrot.slane %v3787, 5
      %v3790 = vsel %vm942, %v3785, %v3789
      %v3792 = vshrl.u32 %v2922, 16
      %v3794 = vrot.slane %v3792, 4
      %v3795 = vshll.u32 %v2922, 16
      %v3797 = vrot.slane %v3795, 5
      %v3798 = vor.u32 %v3794, %v3797
      %v3799 = vrot.slane %v3798, 4
      %v3801 = vshll.u32 %v2986, 16
      %v3803 = vrot.slane %v3801, 5
      %v3804 = vsel %vm942, %v3799, %v3803
      %v3806 = vshrl.u32 %v2923, 16
      %v3808 = vrot.slane %v3806, 4
      %v3809 = vshll.u32 %v2923, 16
      %v3811 = vrot.slane %v3809, 5
      %v3812 = vor.u32 %v3808, %v3811
      %v3813 = vrot.slane %v3812, 4
      %v3815 = vshll.u32 %v2987, 16
      %v3817 = vrot.slane %v3815, 5
      %v3818 = vsel %vm942, %v3813, %v3817
      %v3820 = vshrl.u32 %v2924, 16
      %v3822 = vrot.slane %v3820, 4
      %v3823 = vshll.u32 %v2924, 16
      %v3825 = vrot.slane %v3823, 5
      %v3826 = vor.u32 %v3822, %v3825
      %v3827 = vrot.slane %v3826, 4
      %v3829 = vshll.u32 %v2988, 16
      %v3831 = vrot.slane %v3829, 5
      %v3832 = vsel %vm942, %v3827, %v3831
      %v3834 = vshrl.u32 %v2925, 16
      %v3836 = vrot.slane %v3834, 4
      %v3837 = vshll.u32 %v2925, 16
      %v3839 = vrot.slane %v3837, 5
      %v3840 = vor.u32 %v3836, %v3839
      %v3841 = vrot.slane %v3840, 4
      %v3843 = vshll.u32 %v2989, 16
      %v3845 = vrot.slane %v3843, 5
      %v3846 = vsel %vm942, %v3841, %v3845
      %v3848 = vshrl.u32 %v2926, 16
      %v3850 = vrot.slane %v3848, 4
      %v3851 = vshll.u32 %v2926, 16
      %v3853 = vrot.slane %v3851, 5
      %v3854 = vor.u32 %v3850, %v3853
      %v3855 = vrot.slane %v3854, 4
      %v3857 = vshll.u32 %v2990, 16
      %v3859 = vrot.slane %v3857, 5
      %v3860 = vsel %vm942, %v3855, %v3859
      %v3862 = vshrl.u32 %v2927, 16
      %v3864 = vrot.slane %v3862, 4
      %v3865 = vshll.u32 %v2927, 16
      %v3867 = vrot.slane %v3865, 5
      %v3868 = vor.u32 %v3864, %v3867
      %v3869 = vrot.slane %v3868, 4
      %v3871 = vshll.u32 %v2991, 16
      %v3873 = vrot.slane %v3871, 5
      %v3874 = vsel %vm942, %v3869, %v3873
      %v3876 = vshrl.u32 %v2928, 16
      %v3878 = vrot.slane %v3876, 4
      %v3879 = vshll.u32 %v2928, 16
      %v3881 = vrot.slane %v3879, 5
      %v3882 = vor.u32 %v3878, %v3881
      %v3883 = vrot.slane %v3882, 4
      %v3885 = vshll.u32 %v2992, 16
      %v3887 = vrot.slane %v3885, 5
      %v3888 = vsel %vm942, %v3883, %v3887
      %s3889 = scalar_lea.vmem [#allocation2], 80
      %v3890 = vld [vmem:[%s3889] sm:$0xf]
      %v3891 = vld [vmem:[%s3889 + $0x8] sm:$0xf]
      %v3892 = vld [vmem:[%s3889 + $0x10] sm:$0xf]
      %v3893 = vld [vmem:[%s3889 + $0x18] sm:$0xf]
      %v3894 = vld [vmem:[%s3889 + $0x20] sm:$0xf]
      %v3895 = vld [vmem:[%s3889 + $0x28] sm:$0xf]
      %v3896 = vld [vmem:[%s3889 + $0x30] sm:$0xf]
      %v3897 = vld [vmem:[%s3889 + $0x38] sm:$0xf]
      %v3898 = vld [vmem:[%s3889 + $0x48] sm:$0xf]
      %v3899 = vld [vmem:[%s3889 + $0x50] sm:$0xf]
      %v3900 = vld [vmem:[%s3889 + $0x58] sm:$0xf]
      %v3901 = vld [vmem:[%s3889 + $0x60] sm:$0xf]
      %v3902 = vld [vmem:[%s3889 + $0x68] sm:$0xf]
      %v3903 = vld [vmem:[%s3889 + $0x70] sm:$0xf]
      %v3904 = vld [vmem:[%s3889 + $0x78] sm:$0xf]
      %v3905 = vld [vmem:[%s3889 + $0x80] sm:$0xf]
      %v3906 = vld [vmem:[%s3889 + $0x90] sm:$0xf]
      %v3907 = vld [vmem:[%s3889 + $0x98] sm:$0xf]
      %v3908 = vld [vmem:[%s3889 + $0xa0] sm:$0xf]
      %v3909 = vld [vmem:[%s3889 + $0xa8] sm:$0xf]
      %v3910 = vld [vmem:[%s3889 + $0xb0] sm:$0xf]
      %v3911 = vld [vmem:[%s3889 + $0xb8] sm:$0xf]
      %v3912 = vld [vmem:[%s3889 + $0xc0] sm:$0xf]
      %v3913 = vld [vmem:[%s3889 + $0xc8] sm:$0xf]
      %v3914 = vld [vmem:[%s3889 + $0xd8] sm:$0xf]
      %v3915 = vld [vmem:[%s3889 + $0xe0] sm:$0xf]
      %v3916 = vld [vmem:[%s3889 + $0xe8] sm:$0xf]
      %v3917 = vld [vmem:[%s3889 + $0xf0] sm:$0xf]
      %v3918 = vld [vmem:[%s3889 + $0xf8] sm:$0xf]
      %v3919 = vld [vmem:[%s3889 + $0x100] sm:$0xf]
      %v3920 = vld [vmem:[%s3889 + $0x108] sm:$0xf]
      %v3921 = vld [vmem:[%s3889 + $0x110] sm:$0xf]
      %v3922 = vld [vmem:[%s3889 + $0x120] sm:$0xf]
      %v3923 = vld [vmem:[%s3889 + $0x128] sm:$0xf]
      %v3924 = vld [vmem:[%s3889 + $0x130] sm:$0xf]
      %v3925 = vld [vmem:[%s3889 + $0x138] sm:$0xf]
      %v3926 = vld [vmem:[%s3889 + $0x140] sm:$0xf]
      %v3927 = vld [vmem:[%s3889 + $0x148] sm:$0xf]
      %v3928 = vld [vmem:[%s3889 + $0x150] sm:$0xf]
      %v3929 = vld [vmem:[%s3889 + $0x158] sm:$0xf]
      %v3930 = vld [vmem:[%s3889 + $0x168] sm:$0xf]
      %v3931 = vld [vmem:[%s3889 + $0x170] sm:$0xf]
      %v3932 = vld [vmem:[%s3889 + $0x178] sm:$0xf]
      %v3933 = vld [vmem:[%s3889 + $0x180] sm:$0xf]
      %v3934 = vld [vmem:[%s3889 + $0x188] sm:$0xf]
      %v3935 = vld [vmem:[%s3889 + $0x190] sm:$0xf]
      %v3936 = vld [vmem:[%s3889 + $0x198] sm:$0xf]
      %v3937 = vld [vmem:[%s3889 + $0x1a0] sm:$0xf]
      %v3938 = vld [vmem:[%s3889 + $0x1b0] sm:$0xf]
      %v3939 = vld [vmem:[%s3889 + $0x1b8] sm:$0xf]
      %v3940 = vld [vmem:[%s3889 + $0x1c0] sm:$0xf]
      %v3941 = vld [vmem:[%s3889 + $0x1c8] sm:$0xf]
      %v3942 = vld [vmem:[%s3889 + $0x1d0] sm:$0xf]
      %v3943 = vld [vmem:[%s3889 + $0x1d8] sm:$0xf]
      %v3944 = vld [vmem:[%s3889 + $0x1e0] sm:$0xf]
      %v3945 = vld [vmem:[%s3889 + $0x1e8] sm:$0xf]
      %v3946 = vld [vmem:[%s3889 + $0x1f8] sm:$0xf]
      %v3947 = vld [vmem:[%s3889 + $0x200] sm:$0xf]
      %v3948 = vld [vmem:[%s3889 + $0x208] sm:$0xf]
      %v3949 = vld [vmem:[%s3889 + $0x210] sm:$0xf]
      %v3950 = vld [vmem:[%s3889 + $0x218] sm:$0xf]
      %v3951 = vld [vmem:[%s3889 + $0x220] sm:$0xf]
      %v3952 = vld [vmem:[%s3889 + $0x228] sm:$0xf]
      %v3953 = vld [vmem:[%s3889 + $0x230] sm:$0xf]
      %v3954 = vld [vmem:[%s3889 + $0x4] sm:$0x1]
      %v3955 = vld [vmem:[%s3889 + $0xc] sm:$0x1]
      %v3956 = vld [vmem:[%s3889 + $0x14] sm:$0x1]
      %v3957 = vld [vmem:[%s3889 + $0x1c] sm:$0x1]
      %v3958 = vld [vmem:[%s3889 + $0x24] sm:$0x1]
      %v3959 = vld [vmem:[%s3889 + $0x2c] sm:$0x1]
      %v3960 = vld [vmem:[%s3889 + $0x34] sm:$0x1]
      %v3961 = vld [vmem:[%s3889 + $0x3c] sm:$0x1]
      %v3962 = vld [vmem:[%s3889 + $0x4c] sm:$0x1]
      %v3963 = vld [vmem:[%s3889 + $0x54] sm:$0x1]
      %v3964 = vld [vmem:[%s3889 + $0x5c] sm:$0x1]
      %v3965 = vld [vmem:[%s3889 + $0x64] sm:$0x1]
      %v3966 = vld [vmem:[%s3889 + $0x6c] sm:$0x1]
      %v3967 = vld [vmem:[%s3889 + $0x74] sm:$0x1]
      %v3968 = vld [vmem:[%s3889 + $0x7c] sm:$0x1]
      %v3969 = vld [vmem:[%s3889 + $0x84] sm:$0x1]
      %v3970 = vld [vmem:[%s3889 + $0x94] sm:$0x1]
      %v3971 = vld [vmem:[%s3889 + $0x9c] sm:$0x1]
      %v3972 = vld [vmem:[%s3889 + $0xa4] sm:$0x1]
      %v3973 = vld [vmem:[%s3889 + $0xac] sm:$0x1]
      %v3974 = vld [vmem:[%s3889 + $0xb4] sm:$0x1]
      %v3975 = vld [vmem:[%s3889 + $0xbc] sm:$0x1]
      %v3976 = vld [vmem:[%s3889 + $0xc4] sm:$0x1]
      %v3977 = vld [vmem:[%s3889 + $0xcc] sm:$0x1]
      %v3978 = vld [vmem:[%s3889 + $0xdc] sm:$0x1]
      %v3979 = vld [vmem:[%s3889 + $0xe4] sm:$0x1]
      %v3980 = vld [vmem:[%s3889 + $0xec] sm:$0x1]
      %v3981 = vld [vmem:[%s3889 + $0xf4] sm:$0x1]
      %v3982 = vld [vmem:[%s3889 + $0xfc] sm:$0x1]
      %v3983 = vld [vmem:[%s3889 + $0x104] sm:$0x1]
      %v3984 = vld [vmem:[%s3889 + $0x10c] sm:$0x1]
      %v3985 = vld [vmem:[%s3889 + $0x114] sm:$0x1]
      %v3986 = vld [vmem:[%s3889 + $0x124] sm:$0x1]
      %v3987 = vld [vmem:[%s3889 + $0x12c] sm:$0x1]
      %v3988 = vld [vmem:[%s3889 + $0x134] sm:$0x1]
      %v3989 = vld [vmem:[%s3889 + $0x13c] sm:$0x1]
      %v3990 = vld [vmem:[%s3889 + $0x144] sm:$0x1]
      %v3991 = vld [vmem:[%s3889 + $0x14c] sm:$0x1]
      %v3992 = vld [vmem:[%s3889 + $0x154] sm:$0x1]
      %v3993 = vld [vmem:[%s3889 + $0x15c] sm:$0x1]
      %v3994 = vld [vmem:[%s3889 + $0x16c] sm:$0x1]
      %v3995 = vld [vmem:[%s3889 + $0x174] sm:$0x1]
      %v3996 = vld [vmem:[%s3889 + $0x17c] sm:$0x1]
      %v3997 = vld [vmem:[%s3889 + $0x184] sm:$0x1]
      %v3998 = vld [vmem:[%s3889 + $0x18c] sm:$0x1]
      %v3999 = vld [vmem:[%s3889 + $0x194] sm:$0x1]
      %v4000 = vld [vmem:[%s3889 + $0x19c] sm:$0x1]
      %v4001 = vld [vmem:[%s3889 + $0x1a4] sm:$0x1]
      %v4002 = vld [vmem:[%s3889 + $0x1b4] sm:$0x1]
      %v4003 = vld [vmem:[%s3889 + $0x1bc] sm:$0x1]
      %v4004 = vld [vmem:[%s3889 + $0x1c4] sm:$0x1]
      %v4005 = vld [vmem:[%s3889 + $0x1cc] sm:$0x1]
      %v4006 = vld [vmem:[%s3889 + $0x1d4] sm:$0x1]
      %v4007 = vld [vmem:[%s3889 + $0x1dc] sm:$0x1]
      %v4008 = vld [vmem:[%s3889 + $0x1e4] sm:$0x1]
      %v4009 = vld [vmem:[%s3889 + $0x1ec] sm:$0x1]
      %v4010 = vld [vmem:[%s3889 + $0x1fc] sm:$0x1]
      %v4011 = vld [vmem:[%s3889 + $0x204] sm:$0x1]
      %v4012 = vld [vmem:[%s3889 + $0x20c] sm:$0x1]
      %v4013 = vld [vmem:[%s3889 + $0x214] sm:$0x1]
      %v4014 = vld [vmem:[%s3889 + $0x21c] sm:$0x1]
      %v4015 = vld [vmem:[%s3889 + $0x224] sm:$0x1]
      %v4016 = vld [vmem:[%s3889 + $0x22c] sm:$0x1]
      %v4017 = vld [vmem:[%s3889 + $0x234] sm:$0x1]
      %v4019 = vshrl.u32 %v3890, 16
      %v4021 = vrot.slane %v4019, 4
      %v4022 = vshll.u32 %v3890, 16
      %v4024 = vrot.slane %v4022, 5
      %v4025 = vor.u32 %v4021, %v4024
      %v4026 = vrot.slane %v4025, 4
      %v4028 = vshll.u32 %v3954, 16
      %v4030 = vrot.slane %v4028, 5
      %v4031 = vsel %vm942, %v4026, %v4030
      %v4033 = vshrl.u32 %v3891, 16
      %v4035 = vrot.slane %v4033, 4
      %v4036 = vshll.u32 %v3891, 16
      %v4038 = vrot.slane %v4036, 5
      %v4039 = vor.u32 %v4035, %v4038
      %v4040 = vrot.slane %v4039, 4
      %v4042 = vshll.u32 %v3955, 16
      %v4044 = vrot.slane %v4042, 5
      %v4045 = vsel %vm942, %v4040, %v4044
      %v4047 = vshrl.u32 %v3892, 16
      %v4049 = vrot.slane %v4047, 4
      %v4050 = vshll.u32 %v3892, 16
      %v4052 = vrot.slane %v4050, 5
      %v4053 = vor.u32 %v4049, %v4052
      %v4054 = vrot.slane %v4053, 4
      %v4056 = vshll.u32 %v3956, 16
      %v4058 = vrot.slane %v4056, 5
      %v4059 = vsel %vm942, %v4054, %v4058
      %v4061 = vshrl.u32 %v3893, 16
      %v4063 = vrot.slane %v4061, 4
      %v4064 = vshll.u32 %v3893, 16
      %v4066 = vrot.slane %v4064, 5
      %v4067 = vor.u32 %v4063, %v4066
      %v4068 = vrot.slane %v4067, 4
      %v4070 = vshll.u32 %v3957, 16
      %v4072 = vrot.slane %v4070, 5
      %v4073 = vsel %vm942, %v4068, %v4072
      %v4075 = vshrl.u32 %v3894, 16
      %v4077 = vrot.slane %v4075, 4
      %v4078 = vshll.u32 %v3894, 16
      %v4080 = vrot.slane %v4078, 5
      %v4081 = vor.u32 %v4077, %v4080
      %v4082 = vrot.slane %v4081, 4
      %v4084 = vshll.u32 %v3958, 16
      %v4086 = vrot.slane %v4084, 5
      %v4087 = vsel %vm942, %v4082, %v4086
      %v4089 = vshrl.u32 %v3895, 16
      %v4091 = vrot.slane %v4089, 4
      %v4092 = vshll.u32 %v3895, 16
      %v4094 = vrot.slane %v4092, 5
      %v4095 = vor.u32 %v4091, %v4094
      %v4096 = vrot.slane %v4095, 4
      %v4098 = vshll.u32 %v3959, 16
      %v4100 = vrot.slane %v4098, 5
      %v4101 = vsel %vm942, %v4096, %v4100
      %v4103 = vshrl.u32 %v3896, 16
      %v4105 = vrot.slane %v4103, 4
      %v4106 = vshll.u32 %v3896, 16
      %v4108 = vrot.slane %v4106, 5
      %v4109 = vor.u32 %v4105, %v4108
      %v4110 = vrot.slane %v4109, 4
      %v4112 = vshll.u32 %v3960, 16
      %v4114 = vrot.slane %v4112, 5
      %v4115 = vsel %vm942, %v4110, %v4114
      %v4117 = vshrl.u32 %v3897, 16
      %v4119 = vrot.slane %v4117, 4
      %v4120 = vshll.u32 %v3897, 16
      %v4122 = vrot.slane %v4120, 5
      %v4123 = vor.u32 %v4119, %v4122
      %v4124 = vrot.slane %v4123, 4
      %v4126 = vshll.u32 %v3961, 16
      %v4128 = vrot.slane %v4126, 5
      %v4129 = vsel %vm942, %v4124, %v4128
      %v4131 = vshrl.u32 %v3898, 16
      %v4133 = vrot.slane %v4131, 4
      %v4134 = vshll.u32 %v3898, 16
      %v4136 = vrot.slane %v4134, 5
      %v4137 = vor.u32 %v4133, %v4136
      %v4138 = vrot.slane %v4137, 4
      %v4140 = vshll.u32 %v3962, 16
      %v4142 = vrot.slane %v4140, 5
      %v4143 = vsel %vm942, %v4138, %v4142
      %v4145 = vshrl.u32 %v3899, 16
      %v4147 = vrot.slane %v4145, 4
      %v4148 = vshll.u32 %v3899, 16
      %v4150 = vrot.slane %v4148, 5
      %v4151 = vor.u32 %v4147, %v4150
      %v4152 = vrot.slane %v4151, 4
      %v4154 = vshll.u32 %v3963, 16
      %v4156 = vrot.slane %v4154, 5
      %v4157 = vsel %vm942, %v4152, %v4156
      %v4159 = vshrl.u32 %v3900, 16
      %v4161 = vrot.slane %v4159, 4
      %v4162 = vshll.u32 %v3900, 16
      %v4164 = vrot.slane %v4162, 5
      %v4165 = vor.u32 %v4161, %v4164
      %v4166 = vrot.slane %v4165, 4
      %v4168 = vshll.u32 %v3964, 16
      %v4170 = vrot.slane %v4168, 5
      %v4171 = vsel %vm942, %v4166, %v4170
      %v4173 = vshrl.u32 %v3901, 16
      %v4175 = vrot.slane %v4173, 4
      %v4176 = vshll.u32 %v3901, 16
      %v4178 = vrot.slane %v4176, 5
      %v4179 = vor.u32 %v4175, %v4178
      %v4180 = vrot.slane %v4179, 4
      %v4182 = vshll.u32 %v3965, 16
      %v4184 = vrot.slane %v4182, 5
      %v4185 = vsel %vm942, %v4180, %v4184
      %v4187 = vshrl.u32 %v3902, 16
      %v4189 = vrot.slane %v4187, 4
      %v4190 = vshll.u32 %v3902, 16
      %v4192 = vrot.slane %v4190, 5
      %v4193 = vor.u32 %v4189, %v4192
      %v4194 = vrot.slane %v4193, 4
      %v4196 = vshll.u32 %v3966, 16
      %v4198 = vrot.slane %v4196, 5
      %v4199 = vsel %vm942, %v4194, %v4198
      %v4201 = vshrl.u32 %v3903, 16
      %v4203 = vrot.slane %v4201, 4
      %v4204 = vshll.u32 %v3903, 16
      %v4206 = vrot.slane %v4204, 5
      %v4207 = vor.u32 %v4203, %v4206
      %v4208 = vrot.slane %v4207, 4
      %v4210 = vshll.u32 %v3967, 16
      %v4212 = vrot.slane %v4210, 5
      %v4213 = vsel %vm942, %v4208, %v4212
      %v4215 = vshrl.u32 %v3904, 16
      %v4217 = vrot.slane %v4215, 4
      %v4218 = vshll.u32 %v3904, 16
      %v4220 = vrot.slane %v4218, 5
      %v4221 = vor.u32 %v4217, %v4220
      %v4222 = vrot.slane %v4221, 4
      %v4224 = vshll.u32 %v3968, 16
      %v4226 = vrot.slane %v4224, 5
      %v4227 = vsel %vm942, %v4222, %v4226
      %v4229 = vshrl.u32 %v3905, 16
      %v4231 = vrot.slane %v4229, 4
      %v4232 = vshll.u32 %v3905, 16
      %v4234 = vrot.slane %v4232, 5
      %v4235 = vor.u32 %v4231, %v4234
      %v4236 = vrot.slane %v4235, 4
      %v4238 = vshll.u32 %v3969, 16
      %v4240 = vrot.slane %v4238, 5
      %v4241 = vsel %vm942, %v4236, %v4240
      %v4243 = vshrl.u32 %v3906, 16
      %v4245 = vrot.slane %v4243, 4
      %v4246 = vshll.u32 %v3906, 16
      %v4248 = vrot.slane %v4246, 5
      %v4249 = vor.u32 %v4245, %v4248
      %v4250 = vrot.slane %v4249, 4
      %v4252 = vshll.u32 %v3970, 16
      %v4254 = vrot.slane %v4252, 5
      %v4255 = vsel %vm942, %v4250, %v4254
      %v4257 = vshrl.u32 %v3907, 16
      %v4259 = vrot.slane %v4257, 4
      %v4260 = vshll.u32 %v3907, 16
      %v4262 = vrot.slane %v4260, 5
      %v4263 = vor.u32 %v4259, %v4262
      %v4264 = vrot.slane %v4263, 4
      %v4266 = vshll.u32 %v3971, 16
      %v4268 = vrot.slane %v4266, 5
      %v4269 = vsel %vm942, %v4264, %v4268
      %v4271 = vshrl.u32 %v3908, 16
      %v4273 = vrot.slane %v4271, 4
      %v4274 = vshll.u32 %v3908, 16
      %v4276 = vrot.slane %v4274, 5
      %v4277 = vor.u32 %v4273, %v4276
      %v4278 = vrot.slane %v4277, 4
      %v4280 = vshll.u32 %v3972, 16
      %v4282 = vrot.slane %v4280, 5
      %v4283 = vsel %vm942, %v4278, %v4282
      %v4285 = vshrl.u32 %v3909, 16
      %v4287 = vrot.slane %v4285, 4
      %v4288 = vshll.u32 %v3909, 16
      %v4290 = vrot.slane %v4288, 5
      %v4291 = vor.u32 %v4287, %v4290
      %v4292 = vrot.slane %v4291, 4
      %v4294 = vshll.u32 %v3973, 16
      %v4296 = vrot.slane %v4294, 5
      %v4297 = vsel %vm942, %v4292, %v4296
      %v4299 = vshrl.u32 %v3910, 16
      %v4301 = vrot.slane %v4299, 4
      %v4302 = vshll.u32 %v3910, 16
      %v4304 = vrot.slane %v4302, 5
      %v4305 = vor.u32 %v4301, %v4304
      %v4306 = vrot.slane %v4305, 4
      %v4308 = vshll.u32 %v3974, 16
      %v4310 = vrot.slane %v4308, 5
      %v4311 = vsel %vm942, %v4306, %v4310
      %v4313 = vshrl.u32 %v3911, 16
      %v4315 = vrot.slane %v4313, 4
      %v4316 = vshll.u32 %v3911, 16
      %v4318 = vrot.slane %v4316, 5
      %v4319 = vor.u32 %v4315, %v4318
      %v4320 = vrot.slane %v4319, 4
      %v4322 = vshll.u32 %v3975, 16
      %v4324 = vrot.slane %v4322, 5
      %v4325 = vsel %vm942, %v4320, %v4324
      %v4327 = vshrl.u32 %v3912, 16
      %v4329 = vrot.slane %v4327, 4
      %v4330 = vshll.u32 %v3912, 16
      %v4332 = vrot.slane %v4330, 5
      %v4333 = vor.u32 %v4329, %v4332
      %v4334 = vrot.slane %v4333, 4
      %v4336 = vshll.u32 %v3976, 16
      %v4338 = vrot.slane %v4336, 5
      %v4339 = vsel %vm942, %v4334, %v4338
      %v4341 = vshrl.u32 %v3913, 16
      %v4343 = vrot.slane %v4341, 4
      %v4344 = vshll.u32 %v3913, 16
      %v4346 = vrot.slane %v4344, 5
      %v4347 = vor.u32 %v4343, %v4346
      %v4348 = vrot.slane %v4347, 4
      %v4350 = vshll.u32 %v3977, 16
      %v4352 = vrot.slane %v4350, 5
      %v4353 = vsel %vm942, %v4348, %v4352
      %v4355 = vshrl.u32 %v3914, 16
      %v4357 = vrot.slane %v4355, 4
      %v4358 = vshll.u32 %v3914, 16
      %v4360 = vrot.slane %v4358, 5
      %v4361 = vor.u32 %v4357, %v4360
      %v4362 = vrot.slane %v4361, 4
      %v4364 = vshll.u32 %v3978, 16
      %v4366 = vrot.slane %v4364, 5
      %v4367 = vsel %vm942, %v4362, %v4366
      %v4369 = vshrl.u32 %v3915, 16
      %v4371 = vrot.slane %v4369, 4
      %v4372 = vshll.u32 %v3915, 16
      %v4374 = vrot.slane %v4372, 5
      %v4375 = vor.u32 %v4371, %v4374
      %v4376 = vrot.slane %v4375, 4
      %v4378 = vshll.u32 %v3979, 16
      %v4380 = vrot.slane %v4378, 5
      %v4381 = vsel %vm942, %v4376, %v4380
      %v4383 = vshrl.u32 %v3916, 16
      %v4385 = vrot.slane %v4383, 4
      %v4386 = vshll.u32 %v3916, 16
      %v4388 = vrot.slane %v4386, 5
      %v4389 = vor.u32 %v4385, %v4388
      %v4390 = vrot.slane %v4389, 4
      %v4392 = vshll.u32 %v3980, 16
      %v4394 = vrot.slane %v4392, 5
      %v4395 = vsel %vm942, %v4390, %v4394
      %v4397 = vshrl.u32 %v3917, 16
      %v4399 = vrot.slane %v4397, 4
      %v4400 = vshll.u32 %v3917, 16
      %v4402 = vrot.slane %v4400, 5
      %v4403 = vor.u32 %v4399, %v4402
      %v4404 = vrot.slane %v4403, 4
      %v4406 = vshll.u32 %v3981, 16
      %v4408 = vrot.slane %v4406, 5
      %v4409 = vsel %vm942, %v4404, %v4408
      %v4411 = vshrl.u32 %v3918, 16
      %v4413 = vrot.slane %v4411, 4
      %v4414 = vshll.u32 %v3918, 16
      %v4416 = vrot.slane %v4414, 5
      %v4417 = vor.u32 %v4413, %v4416
      %v4418 = vrot.slane %v4417, 4
      %v4420 = vshll.u32 %v3982, 16
      %v4422 = vrot.slane %v4420, 5
      %v4423 = vsel %vm942, %v4418, %v4422
      %v4425 = vshrl.u32 %v3919, 16
      %v4427 = vrot.slane %v4425, 4
      %v4428 = vshll.u32 %v3919, 16
      %v4430 = vrot.slane %v4428, 5
      %v4431 = vor.u32 %v4427, %v4430
      %v4432 = vrot.slane %v4431, 4
      %v4434 = vshll.u32 %v3983, 16
      %v4436 = vrot.slane %v4434, 5
      %v4437 = vsel %vm942, %v4432, %v4436
      %v4439 = vshrl.u32 %v3920, 16
      %v4441 = vrot.slane %v4439, 4
      %v4442 = vshll.u32 %v3920, 16
      %v4444 = vrot.slane %v4442, 5
      %v4445 = vor.u32 %v4441, %v4444
      %v4446 = vrot.slane %v4445, 4
      %v4448 = vshll.u32 %v3984, 16
      %v4450 = vrot.slane %v4448, 5
      %v4451 = vsel %vm942, %v4446, %v4450
      %v4453 = vshrl.u32 %v3921, 16
      %v4455 = vrot.slane %v4453, 4
      %v4456 = vshll.u32 %v3921, 16
      %v4458 = vrot.slane %v4456, 5
      %v4459 = vor.u32 %v4455, %v4458
      %v4460 = vrot.slane %v4459, 4
      %v4462 = vshll.u32 %v3985, 16
      %v4464 = vrot.slane %v4462, 5
      %v4465 = vsel %vm942, %v4460, %v4464
      %v4467 = vshrl.u32 %v3922, 16
      %v4469 = vrot.slane %v4467, 4
      %v4470 = vshll.u32 %v3922, 16
      %v4472 = vrot.slane %v4470, 5
      %v4473 = vor.u32 %v4469, %v4472
      %v4474 = vrot.slane %v4473, 4
      %v4476 = vshll.u32 %v3986, 16
      %v4478 = vrot.slane %v4476, 5
      %v4479 = vsel %vm942, %v4474, %v4478
      %v4481 = vshrl.u32 %v3923, 16
      %v4483 = vrot.slane %v4481, 4
      %v4484 = vshll.u32 %v3923, 16
      %v4486 = vrot.slane %v4484, 5
      %v4487 = vor.u32 %v4483, %v4486
      %v4488 = vrot.slane %v4487, 4
      %v4490 = vshll.u32 %v3987, 16
      %v4492 = vrot.slane %v4490, 5
      %v4493 = vsel %vm942, %v4488, %v4492
      %v4495 = vshrl.u32 %v3924, 16
      %v4497 = vrot.slane %v4495, 4
      %v4498 = vshll.u32 %v3924, 16
      %v4500 = vrot.slane %v4498, 5
      %v4501 = vor.u32 %v4497, %v4500
      %v4502 = vrot.slane %v4501, 4
      %v4504 = vshll.u32 %v3988, 16
      %v4506 = vrot.slane %v4504, 5
      %v4507 = vsel %vm942, %v4502, %v4506
      %v4509 = vshrl.u32 %v3925, 16
      %v4511 = vrot.slane %v4509, 4
      %v4512 = vshll.u32 %v3925, 16
      %v4514 = vrot.slane %v4512, 5
      %v4515 = vor.u32 %v4511, %v4514
      %v4516 = vrot.slane %v4515, 4
      %v4518 = vshll.u32 %v3989, 16
      %v4520 = vrot.slane %v4518, 5
      %v4521 = vsel %vm942, %v4516, %v4520
      %v4523 = vshrl.u32 %v3926, 16
      %v4525 = vrot.slane %v4523, 4
      %v4526 = vshll.u32 %v3926, 16
      %v4528 = vrot.slane %v4526, 5
      %v4529 = vor.u32 %v4525, %v4528
      %v4530 = vrot.slane %v4529, 4
      %v4532 = vshll.u32 %v3990, 16
      %v4534 = vrot.slane %v4532, 5
      %v4535 = vsel %vm942, %v4530, %v4534
      %v4537 = vshrl.u32 %v3927, 16
      %v4539 = vrot.slane %v4537, 4
      %v4540 = vshll.u32 %v3927, 16
      %v4542 = vrot.slane %v4540, 5
      %v4543 = vor.u32 %v4539, %v4542
      %v4544 = vrot.slane %v4543, 4
      %v4546 = vshll.u32 %v3991, 16
      %v4548 = vrot.slane %v4546, 5
      %v4549 = vsel %vm942, %v4544, %v4548
      %v4551 = vshrl.u32 %v3928, 16
      %v4553 = vrot.slane %v4551, 4
      %v4554 = vshll.u32 %v3928, 16
      %v4556 = vrot.slane %v4554, 5
      %v4557 = vor.u32 %v4553, %v4556
      %v4558 = vrot.slane %v4557, 4
      %v4560 = vshll.u32 %v3992, 16
      %v4562 = vrot.slane %v4560, 5
      %v4563 = vsel %vm942, %v4558, %v4562
      %v4565 = vshrl.u32 %v3929, 16
      %v4567 = vrot.slane %v4565, 4
      %v4568 = vshll.u32 %v3929, 16
      %v4570 = vrot.slane %v4568, 5
      %v4571 = vor.u32 %v4567, %v4570
      %v4572 = vrot.slane %v4571, 4
      %v4574 = vshll.u32 %v3993, 16
      %v4576 = vrot.slane %v4574, 5
      %v4577 = vsel %vm942, %v4572, %v4576
      %v4579 = vshrl.u32 %v3930, 16
      %v4581 = vrot.slane %v4579, 4
      %v4582 = vshll.u32 %v3930, 16
      %v4584 = vrot.slane %v4582, 5
      %v4585 = vor.u32 %v4581, %v4584
      %v4586 = vrot.slane %v4585, 4
      %v4588 = vshll.u32 %v3994, 16
      %v4590 = vrot.slane %v4588, 5
      %v4591 = vsel %vm942, %v4586, %v4590
      %v4593 = vshrl.u32 %v3931, 16
      %v4595 = vrot.slane %v4593, 4
      %v4596 = vshll.u32 %v3931, 16
      %v4598 = vrot.slane %v4596, 5
      %v4599 = vor.u32 %v4595, %v4598
      %v4600 = vrot.slane %v4599, 4
      %v4602 = vshll.u32 %v3995, 16
      %v4604 = vrot.slane %v4602, 5
      %v4605 = vsel %vm942, %v4600, %v4604
      %v4607 = vshrl.u32 %v3932, 16
      %v4609 = vrot.slane %v4607, 4
      %v4610 = vshll.u32 %v3932, 16
      %v4612 = vrot.slane %v4610, 5
      %v4613 = vor.u32 %v4609, %v4612
      %v4614 = vrot.slane %v4613, 4
      %v4616 = vshll.u32 %v3996, 16
      %v4618 = vrot.slane %v4616, 5
      %v4619 = vsel %vm942, %v4614, %v4618
      %v4621 = vshrl.u32 %v3933, 16
      %v4623 = vrot.slane %v4621, 4
      %v4624 = vshll.u32 %v3933, 16
      %v4626 = vrot.slane %v4624, 5
      %v4627 = vor.u32 %v4623, %v4626
      %v4628 = vrot.slane %v4627, 4
      %v4630 = vshll.u32 %v3997, 16
      %v4632 = vrot.slane %v4630, 5
      %v4633 = vsel %vm942, %v4628, %v4632
      %v4635 = vshrl.u32 %v3934, 16
      %v4637 = vrot.slane %v4635, 4
      %v4638 = vshll.u32 %v3934, 16
      %v4640 = vrot.slane %v4638, 5
      %v4641 = vor.u32 %v4637, %v4640
      %v4642 = vrot.slane %v4641, 4
      %v4644 = vshll.u32 %v3998, 16
      %v4646 = vrot.slane %v4644, 5
      %v4647 = vsel %vm942, %v4642, %v4646
      %v4649 = vshrl.u32 %v3935, 16
      %v4651 = vrot.slane %v4649, 4
      %v4652 = vshll.u32 %v3935, 16
      %v4654 = vrot.slane %v4652, 5
      %v4655 = vor.u32 %v4651, %v4654
      %v4656 = vrot.slane %v4655, 4
      %v4658 = vshll.u32 %v3999, 16
      %v4660 = vrot.slane %v4658, 5
      %v4661 = vsel %vm942, %v4656, %v4660
      %v4663 = vshrl.u32 %v3936, 16
      %v4665 = vrot.slane %v4663, 4
      %v4666 = vshll.u32 %v3936, 16
      %v4668 = vrot.slane %v4666, 5
      %v4669 = vor.u32 %v4665, %v4668
      %v4670 = vrot.slane %v4669, 4
      %v4672 = vshll.u32 %v4000, 16
      %v4674 = vrot.slane %v4672, 5
      %v4675 = vsel %vm942, %v4670, %v4674
      %v4677 = vshrl.u32 %v3937, 16
      %v4679 = vrot.slane %v4677, 4
      %v4680 = vshll.u32 %v3937, 16
      %v4682 = vrot.slane %v4680, 5
      %v4683 = vor.u32 %v4679, %v4682
      %v4684 = vrot.slane %v4683, 4
      %v4686 = vshll.u32 %v4001, 16
      %v4688 = vrot.slane %v4686, 5
      %v4689 = vsel %vm942, %v4684, %v4688
      %v4691 = vshrl.u32 %v3938, 16
      %v4693 = vrot.slane %v4691, 4
      %v4694 = vshll.u32 %v3938, 16
      %v4696 = vrot.slane %v4694, 5
      %v4697 = vor.u32 %v4693, %v4696
      %v4698 = vrot.slane %v4697, 4
      %v4700 = vshll.u32 %v4002, 16
      %v4702 = vrot.slane %v4700, 5
      %v4703 = vsel %vm942, %v4698, %v4702
      %v4705 = vshrl.u32 %v3939, 16
      %v4707 = vrot.slane %v4705, 4
      %v4708 = vshll.u32 %v3939, 16
      %v4710 = vrot.slane %v4708, 5
      %v4711 = vor.u32 %v4707, %v4710
      %v4712 = vrot.slane %v4711, 4
      %v4714 = vshll.u32 %v4003, 16
      %v4716 = vrot.slane %v4714, 5
      %v4717 = vsel %vm942, %v4712, %v4716
      %v4719 = vshrl.u32 %v3940, 16
      %v4721 = vrot.slane %v4719, 4
      %v4722 = vshll.u32 %v3940, 16
      %v4724 = vrot.slane %v4722, 5
      %v4725 = vor.u32 %v4721, %v4724
      %v4726 = vrot.slane %v4725, 4
      %v4728 = vshll.u32 %v4004, 16
      %v4730 = vrot.slane %v4728, 5
      %v4731 = vsel %vm942, %v4726, %v4730
      %v4733 = vshrl.u32 %v3941, 16
      %v4735 = vrot.slane %v4733, 4
      %v4736 = vshll.u32 %v3941, 16
      %v4738 = vrot.slane %v4736, 5
      %v4739 = vor.u32 %v4735, %v4738
      %v4740 = vrot.slane %v4739, 4
      %v4742 = vshll.u32 %v4005, 16
      %v4744 = vrot.slane %v4742, 5
      %v4745 = vsel %vm942, %v4740, %v4744
      %v4747 = vshrl.u32 %v3942, 16
      %v4749 = vrot.slane %v4747, 4
      %v4750 = vshll.u32 %v3942, 16
      %v4752 = vrot.slane %v4750, 5
      %v4753 = vor.u32 %v4749, %v4752
      %v4754 = vrot.slane %v4753, 4
      %v4756 = vshll.u32 %v4006, 16
      %v4758 = vrot.slane %v4756, 5
      %v4759 = vsel %vm942, %v4754, %v4758
      %v4761 = vshrl.u32 %v3943, 16
      %v4763 = vrot.slane %v4761, 4
      %v4764 = vshll.u32 %v3943, 16
      %v4766 = vrot.slane %v4764, 5
      %v4767 = vor.u32 %v4763, %v4766
      %v4768 = vrot.slane %v4767, 4
      %v4770 = vshll.u32 %v4007, 16
      %v4772 = vrot.slane %v4770, 5
      %v4773 = vsel %vm942, %v4768, %v4772
      %v4775 = vshrl.u32 %v3944, 16
      %v4777 = vrot.slane %v4775, 4
      %v4778 = vshll.u32 %v3944, 16
      %v4780 = vrot.slane %v4778, 5
      %v4781 = vor.u32 %v4777, %v4780
      %v4782 = vrot.slane %v4781, 4
      %v4784 = vshll.u32 %v4008, 16
      %v4786 = vrot.slane %v4784, 5
      %v4787 = vsel %vm942, %v4782, %v4786
      %v4789 = vshrl.u32 %v3945, 16
      %v4791 = vrot.slane %v4789, 4
      %v4792 = vshll.u32 %v3945, 16
      %v4794 = vrot.slane %v4792, 5
      %v4795 = vor.u32 %v4791, %v4794
      %v4796 = vrot.slane %v4795, 4
      %v4798 = vshll.u32 %v4009, 16
      %v4800 = vrot.slane %v4798, 5
      %v4801 = vsel %vm942, %v4796, %v4800
      %v4803 = vshrl.u32 %v3946, 16
      %v4805 = vrot.slane %v4803, 4
      %v4806 = vshll.u32 %v3946, 16
      %v4808 = vrot.slane %v4806, 5
      %v4809 = vor.u32 %v4805, %v4808
      %v4810 = vrot.slane %v4809, 4
      %v4812 = vshll.u32 %v4010, 16
      %v4814 = vrot.slane %v4812, 5
      %v4815 = vsel %vm942, %v4810, %v4814
      %v4817 = vshrl.u32 %v3947, 16
      %v4819 = vrot.slane %v4817, 4
      %v4820 = vshll.u32 %v3947, 16
      %v4822 = vrot.slane %v4820, 5
      %v4823 = vor.u32 %v4819, %v4822
      %v4824 = vrot.slane %v4823, 4
      %v4826 = vshll.u32 %v4011, 16
      %v4828 = vrot.slane %v4826, 5
      %v4829 = vsel %vm942, %v4824, %v4828
      %v4831 = vshrl.u32 %v3948, 16
      %v4833 = vrot.slane %v4831, 4
      %v4834 = vshll.u32 %v3948, 16
      %v4836 = vrot.slane %v4834, 5
      %v4837 = vor.u32 %v4833, %v4836
      %v4838 = vrot.slane %v4837, 4
      %v4840 = vshll.u32 %v4012, 16
      %v4842 = vrot.slane %v4840, 5
      %v4843 = vsel %vm942, %v4838, %v4842
      %v4845 = vshrl.u32 %v3949, 16
      %v4847 = vrot.slane %v4845, 4
      %v4848 = vshll.u32 %v3949, 16
      %v4850 = vrot.slane %v4848, 5
      %v4851 = vor.u32 %v4847, %v4850
      %v4852 = vrot.slane %v4851, 4
      %v4854 = vshll.u32 %v4013, 16
      %v4856 = vrot.slane %v4854, 5
      %v4857 = vsel %vm942, %v4852, %v4856
      %v4859 = vshrl.u32 %v3950, 16
      %v4861 = vrot.slane %v4859, 4
      %v4862 = vshll.u32 %v3950, 16
      %v4864 = vrot.slane %v4862, 5
      %v4865 = vor.u32 %v4861, %v4864
      %v4866 = vrot.slane %v4865, 4
      %v4868 = vshll.u32 %v4014, 16
      %v4870 = vrot.slane %v4868, 5
      %v4871 = vsel %vm942, %v4866, %v4870
      %v4873 = vshrl.u32 %v3951, 16
      %v4875 = vrot.slane %v4873, 4
      %v4876 = vshll.u32 %v3951, 16
      %v4878 = vrot.slane %v4876, 5
      %v4879 = vor.u32 %v4875, %v4878
      %v4880 = vrot.slane %v4879, 4
      %v4882 = vshll.u32 %v4015, 16
      %v4884 = vrot.slane %v4882, 5
      %v4885 = vsel %vm942, %v4880, %v4884
      %v4887 = vshrl.u32 %v3952, 16
      %v4889 = vrot.slane %v4887, 4
      %v4890 = vshll.u32 %v3952, 16
      %v4892 = vrot.slane %v4890, 5
      %v4893 = vor.u32 %v4889, %v4892
      %v4894 = vrot.slane %v4893, 4
      %v4896 = vshll.u32 %v4016, 16
      %v4898 = vrot.slane %v4896, 5
      %v4899 = vsel %vm942, %v4894, %v4898
      %v4901 = vshrl.u32 %v3953, 16
      %v4903 = vrot.slane %v4901, 4
      %v4904 = vshll.u32 %v3953, 16
      %v4906 = vrot.slane %v4904, 5
      %v4907 = vor.u32 %v4903, %v4906
      %v4908 = vrot.slane %v4907, 4
      %v4910 = vshll.u32 %v4017, 16
      %v4912 = vrot.slane %v4910, 5
      %v4913 = vsel %vm942, %v4908, %v4912
      %v4978 = vunpack.c.l.b16 %v812
      %v4979 = vunpack.c.l.b16 %v813
      %v4980 = vunpack.c.l.b16 %v814
      %v4981 = vunpack.c.l.b16 %v815
      %v4982 = vunpack.c.l.b16 %v816
      %v4983 = vunpack.c.l.b16 %v817
      %v4984 = vunpack.c.l.b16 %v818
      %v4985 = vunpack.c.l.b16 %v819
      %v4986 = vunpack.c.l.b16 %v820
      %v4987 = vunpack.c.l.b16 %v821
      %v4988 = vunpack.c.l.b16 %v822
      %v4989 = vunpack.c.l.b16 %v823
      %v4990 = vunpack.c.l.b16 %v824
      %v4991 = vunpack.c.l.b16 %v825
      %v4992 = vunpack.c.l.b16 %v826
      %v4993 = vunpack.c.l.b16 %v827
      %v4994 = vunpack.c.l.b16 %v828
      %v4995 = vunpack.c.l.b16 %v829
      %v4996 = vunpack.c.l.b16 %v830
      %v4997 = vunpack.c.l.b16 %v831
      %v4998 = vunpack.c.l.b16 %v832
      %v4999 = vunpack.c.l.b16 %v833
      %v5000 = vunpack.c.l.b16 %v834
      %v5001 = vunpack.c.l.b16 %v835
      %v5002 = vunpack.c.l.b16 %v836
      %v5003 = vunpack.c.l.b16 %v837
      %v5004 = vunpack.c.l.b16 %v838
      %v5005 = vunpack.c.l.b16 %v839
      %v5006 = vunpack.c.l.b16 %v840
      %v5007 = vunpack.c.l.b16 %v841
      %v5008 = vunpack.c.l.b16 %v842
      %v5009 = vunpack.c.l.b16 %v843
      %v5010 = vunpack.c.l.b16 %v844
      %v5011 = vunpack.c.l.b16 %v845
      %v5012 = vunpack.c.l.b16 %v846
      %v5013 = vunpack.c.l.b16 %v847
      %v5014 = vunpack.c.l.b16 %v848
      %v5015 = vunpack.c.l.b16 %v849
      %v5016 = vunpack.c.l.b16 %v850
      %v5017 = vunpack.c.l.b16 %v851
      %v5018 = vunpack.c.l.b16 %v852
      %v5019 = vunpack.c.l.b16 %v853
      %v5020 = vunpack.c.l.b16 %v854
      %v5021 = vunpack.c.l.b16 %v855
      %v5022 = vunpack.c.l.b16 %v856
      %v5023 = vunpack.c.l.b16 %v857
      %v5024 = vunpack.c.l.b16 %v858
      %v5025 = vunpack.c.l.b16 %v859
      %v5026 = vunpack.c.l.b16 %v860
      %v5027 = vunpack.c.l.b16 %v861
      %v5028 = vunpack.c.l.b16 %v862
      %v5029 = vunpack.c.l.b16 %v863
      %v5030 = vunpack.c.l.b16 %v864
      %v5031 = vunpack.c.l.b16 %v865
      %v5032 = vunpack.c.l.b16 %v866
      %v5033 = vunpack.c.l.b16 %v867
      %v5034 = vunpack.c.l.b16 %v868
      %v5035 = vunpack.c.l.b16 %v869
      %v5036 = vunpack.c.l.b16 %v870
      %v5037 = vunpack.c.l.b16 %v871
      %v5038 = vunpack.c.l.b16 %v872
      %v5039 = vunpack.c.l.b16 %v873
      %v5040 = vunpack.c.l.b16 %v874
      %v5041 = vunpack.c.l.b16 %v875
      %v5042 = vpack.c.b16 %v4979, %v4978
      %v5043 = vpack.c.b16 %v4981, %v4980
      %v5044 = vpack.c.b16 %v4983, %v4982
      %v5045 = vpack.c.b16 %v4985, %v4984
      %v5046 = vpack.c.b16 %v4987, %v4986
      %v5047 = vpack.c.b16 %v4989, %v4988
      %v5048 = vpack.c.b16 %v4991, %v4990
      %v5049 = vpack.c.b16 %v4993, %v4992
      %v5050 = vpack.c.b16 %v4995, %v4994
      %v5051 = vpack.c.b16 %v4997, %v4996
      %v5052 = vpack.c.b16 %v4999, %v4998
      %v5053 = vpack.c.b16 %v5001, %v5000
      %v5054 = vpack.c.b16 %v5003, %v5002
      %v5055 = vpack.c.b16 %v5005, %v5004
      %v5056 = vpack.c.b16 %v5007, %v5006
      %v5057 = vpack.c.b16 %v5009, %v5008
      %v5058 = vpack.c.b16 %v5011, %v5010
      %v5059 = vpack.c.b16 %v5013, %v5012
      %v5060 = vpack.c.b16 %v5015, %v5014
      %v5061 = vpack.c.b16 %v5017, %v5016
      %v5062 = vpack.c.b16 %v5019, %v5018
      %v5063 = vpack.c.b16 %v5021, %v5020
      %v5064 = vpack.c.b16 %v5023, %v5022
      %v5065 = vpack.c.b16 %v5025, %v5024
      %v5066 = vpack.c.b16 %v5027, %v5026
      %v5067 = vpack.c.b16 %v5029, %v5028
      %v5068 = vpack.c.b16 %v5031, %v5030
      %v5069 = vpack.c.b16 %v5033, %v5032
      %v5070 = vpack.c.b16 %v5035, %v5034
      %v5071 = vpack.c.b16 %v5037, %v5036
      %v5072 = vpack.c.b16 %v5039, %v5038
      %v5073 = vpack.c.b16 %v5041, %v5040
      %v5074 = vunpack.c.l.b16 %v956
      %v5075 = vunpack.c.l.b16 %v970
      %v5076 = vunpack.c.l.b16 %v984
      %v5077 = vunpack.c.l.b16 %v998
      %v5078 = vunpack.c.l.b16 %v1012
      %v5079 = vunpack.c.l.b16 %v1026
      %v5080 = vunpack.c.l.b16 %v1040
      %v5081 = vunpack.c.l.b16 %v1054
      %v5082 = vunpack.c.l.b16 %v1068
      %v5083 = vunpack.c.l.b16 %v1082
      %v5084 = vunpack.c.l.b16 %v1096
      %v5085 = vunpack.c.l.b16 %v1110
      %v5086 = vunpack.c.l.b16 %v1124
      %v5087 = vunpack.c.l.b16 %v1138
      %v5088 = vunpack.c.l.b16 %v1152
      %v5089 = vunpack.c.l.b16 %v1166
      %v5090 = vunpack.c.l.b16 %v1180
      %v5091 = vunpack.c.l.b16 %v1194
      %v5092 = vunpack.c.l.b16 %v1208
      %v5093 = vunpack.c.l.b16 %v1222
      %v5094 = vunpack.c.l.b16 %v1236
      %v5095 = vunpack.c.l.b16 %v1250
      %v5096 = vunpack.c.l.b16 %v1264
      %v5097 = vunpack.c.l.b16 %v1278
      %v5098 = vunpack.c.l.b16 %v1292
      %v5099 = vunpack.c.l.b16 %v1306
      %v5100 = vunpack.c.l.b16 %v1320
      %v5101 = vunpack.c.l.b16 %v1334
      %v5102 = vunpack.c.l.b16 %v1348
      %v5103 = vunpack.c.l.b16 %v1362
      %v5104 = vunpack.c.l.b16 %v1376
      %v5105 = vunpack.c.l.b16 %v1390
      %v5106 = vunpack.c.l.b16 %v1404
      %v5107 = vunpack.c.l.b16 %v1418
      %v5108 = vunpack.c.l.b16 %v1432
      %v5109 = vunpack.c.l.b16 %v1446
      %v5110 = vunpack.c.l.b16 %v1460
      %v5111 = vunpack.c.l.b16 %v1474
      %v5112 = vunpack.c.l.b16 %v1488
      %v5113 = vunpack.c.l.b16 %v1502
      %v5114 = vunpack.c.l.b16 %v1516
      %v5115 = vunpack.c.l.b16 %v1530
      %v5116 = vunpack.c.l.b16 %v1544
      %v5117 = vunpack.c.l.b16 %v1558
      %v5118 = vunpack.c.l.b16 %v1572
      %v5119 = vunpack.c.l.b16 %v1586
      %v5120 = vunpack.c.l.b16 %v1600
      %v5121 = vunpack.c.l.b16 %v1614
      %v5122 = vunpack.c.l.b16 %v1628
      %v5123 = vunpack.c.l.b16 %v1642
      %v5124 = vunpack.c.l.b16 %v1656
      %v5125 = vunpack.c.l.b16 %v1670
      %v5126 = vunpack.c.l.b16 %v1684
      %v5127 = vunpack.c.l.b16 %v1698
      %v5128 = vunpack.c.l.b16 %v1712
      %v5129 = vunpack.c.l.b16 %v1726
      %v5130 = vunpack.c.l.b16 %v1740
      %v5131 = vunpack.c.l.b16 %v1754
      %v5132 = vunpack.c.l.b16 %v1768
      %v5133 = vunpack.c.l.b16 %v1782
      %v5134 = vunpack.c.l.b16 %v1796
      %v5135 = vunpack.c.l.b16 %v1810
      %v5136 = vunpack.c.l.b16 %v1824
      %v5137 = vunpack.c.l.b16 %v1838
      %v5138 = vpack.c.b16 %v5075, %v5074
      %v5139 = vpack.c.b16 %v5077, %v5076
      %v5140 = vpack.c.b16 %v5079, %v5078
      %v5141 = vpack.c.b16 %v5081, %v5080
      %v5142 = vpack.c.b16 %v5083, %v5082
      %v5143 = vpack.c.b16 %v5085, %v5084
      %v5144 = vpack.c.b16 %v5087, %v5086
      %v5145 = vpack.c.b16 %v5089, %v5088
      %v5146 = vpack.c.b16 %v5091, %v5090
      %v5147 = vpack.c.b16 %v5093, %v5092
      %v5148 = vpack.c.b16 %v5095, %v5094
      %v5149 = vpack.c.b16 %v5097, %v5096
      %v5150 = vpack.c.b16 %v5099, %v5098
      %v5151 = vpack.c.b16 %v5101, %v5100
      %v5152 = vpack.c.b16 %v5103, %v5102
      %v5153 = vpack.c.b16 %v5105, %v5104
      %v5154 = vpack.c.b16 %v5107, %v5106
      %v5155 = vpack.c.b16 %v5109, %v5108
      %v5156 = vpack.c.b16 %v5111, %v5110
      %v5157 = vpack.c.b16 %v5113, %v5112
      %v5158 = vpack.c.b16 %v5115, %v5114
      %v5159 = vpack.c.b16 %v5117, %v5116
      %v5160 = vpack.c.b16 %v5119, %v5118
      %v5161 = vpack.c.b16 %v5121, %v5120
      %v5162 = vpack.c.b16 %v5123, %v5122
      %v5163 = vpack.c.b16 %v5125, %v5124
      %v5164 = vpack.c.b16 %v5127, %v5126
      %v5165 = vpack.c.b16 %v5129, %v5128
      %v5166 = vpack.c.b16 %v5131, %v5130
      %v5167 = vpack.c.b16 %v5133, %v5132
      %v5168 = vpack.c.b16 %v5135, %v5134
      %v5169 = vpack.c.b16 %v5137, %v5136
      %5170 = vrot.lane.b32.xlu0 %v5138, 4
      %v5171 = vpop.permute.xlu0 %5170
      %5172 = vrot.lane.b32.xlu0 %v5139, 4
      %v5173 = vpop.permute.xlu0 %5172
      %5174 = vrot.lane.b32.xlu0 %v5140, 4
      %v5175 = vpop.permute.xlu0 %5174
      %5176 = vrot.lane.b32.xlu0 %v5141, 4
      %v5177 = vpop.permute.xlu0 %5176
      %5178 = vrot.lane.b32.xlu0 %v5142, 4
      %v5179 = vpop.permute.xlu0 %5178
      %5180 = vrot.lane.b32.xlu0 %v5143, 4
      %v5181 = vpop.permute.xlu0 %5180
      %5182 = vrot.lane.b32.xlu0 %v5144, 4
      %v5183 = vpop.permute.xlu0 %5182
      %5184 = vrot.lane.b32.xlu0 %v5145, 4
      %v5185 = vpop.permute.xlu0 %5184
      %5186 = vrot.lane.b32.xlu0 %v5146, 4
      %v5187 = vpop.permute.xlu0 %5186
      %5188 = vrot.lane.b32.xlu0 %v5147, 4
      %v5189 = vpop.permute.xlu0 %5188
      %5190 = vrot.lane.b32.xlu0 %v5148, 4
      %v5191 = vpop.permute.xlu0 %5190
      %5192 = vrot.lane.b32.xlu0 %v5149, 4
      %v5193 = vpop.permute.xlu0 %5192
      %5194 = vrot.lane.b32.xlu0 %v5150, 4
      %v5195 = vpop.permute.xlu0 %5194
      %5196 = vrot.lane.b32.xlu0 %v5151, 4
      %v5197 = vpop.permute.xlu0 %5196
      %5198 = vrot.lane.b32.xlu0 %v5152, 4
      %v5199 = vpop.permute.xlu0 %5198
      %5200 = vrot.lane.b32.xlu0 %v5153, 4
      %v5201 = vpop.permute.xlu0 %5200
      %5202 = vrot.lane.b32.xlu0 %v5154, 4
      %v5203 = vpop.permute.xlu0 %5202
      %5204 = vrot.lane.b32.xlu0 %v5155, 4
      %v5205 = vpop.permute.xlu0 %5204
      %5206 = vrot.lane.b32.xlu0 %v5156, 4
      %v5207 = vpop.permute.xlu0 %5206
      %5208 = vrot.lane.b32.xlu0 %v5157, 4
      %v5209 = vpop.permute.xlu0 %5208
      %5210 = vrot.lane.b32.xlu0 %v5158, 4
      %v5211 = vpop.permute.xlu0 %5210
      %5212 = vrot.lane.b32.xlu0 %v5159, 4
      %v5213 = vpop.permute.xlu0 %5212
      %5214 = vrot.lane.b32.xlu0 %v5160, 4
      %v5215 = vpop.permute.xlu0 %5214
      %5216 = vrot.lane.b32.xlu0 %v5161, 4
      %v5217 = vpop.permute.xlu0 %5216
      %5218 = vrot.lane.b32.xlu0 %v5162, 4
      %v5219 = vpop.permute.xlu0 %5218
      %5220 = vrot.lane.b32.xlu0 %v5163, 4
      %v5221 = vpop.permute.xlu0 %5220
      %5222 = vrot.lane.b32.xlu0 %v5164, 4
      %v5223 = vpop.permute.xlu0 %5222
      %5224 = vrot.lane.b32.xlu0 %v5165, 4
      %v5225 = vpop.permute.xlu0 %5224
      %5226 = vrot.lane.b32.xlu0 %v5166, 4
      %v5227 = vpop.permute.xlu0 %5226
      %5228 = vrot.lane.b32.xlu0 %v5167, 4
      %v5229 = vpop.permute.xlu0 %5228
      %5230 = vrot.lane.b32.xlu0 %v5168, 4
      %v5231 = vpop.permute.xlu0 %5230
      %5232 = vrot.lane.b32.xlu0 %v5169, 4
      %v5233 = vpop.permute.xlu0 %5232
      %v5298 = vunpack.c.l.b16 %v1840
      %v5299 = vunpack.c.l.b16 %v1841
      %v5300 = vunpack.c.l.b16 %v1842
      %v5301 = vunpack.c.l.b16 %v1843
      %v5302 = vunpack.c.l.b16 %v1844
      %v5303 = vunpack.c.l.b16 %v1845
      %v5304 = vunpack.c.l.b16 %v1846
      %v5305 = vunpack.c.l.b16 %v1847
      %v5306 = vunpack.c.l.b16 %v1848
      %v5307 = vunpack.c.l.b16 %v1849
      %v5308 = vunpack.c.l.b16 %v1850
      %v5309 = vunpack.c.l.b16 %v1851
      %v5310 = vunpack.c.l.b16 %v1852
      %v5311 = vunpack.c.l.b16 %v1853
      %v5312 = vunpack.c.l.b16 %v1854
      %v5313 = vunpack.c.l.b16 %v1855
      %v5314 = vunpack.c.l.b16 %v1856
      %v5315 = vunpack.c.l.b16 %v1857
      %v5316 = vunpack.c.l.b16 %v1858
      %v5317 = vunpack.c.l.b16 %v1859
      %v5318 = vunpack.c.l.b16 %v1860
      %v5319 = vunpack.c.l.b16 %v1861
      %v5320 = vunpack.c.l.b16 %v1862
      %v5321 = vunpack.c.l.b16 %v1863
      %v5322 = vunpack.c.l.b16 %v1864
      %v5323 = vunpack.c.l.b16 %v1865
      %v5324 = vunpack.c.l.b16 %v1866
      %v5325 = vunpack.c.l.b16 %v1867
      %v5326 = vunpack.c.l.b16 %v1868
      %v5327 = vunpack.c.l.b16 %v1869
      %v5328 = vunpack.c.l.b16 %v1870
      %v5329 = vunpack.c.l.b16 %v1871
      %v5330 = vunpack.c.l.b16 %v1872
      %v5331 = vunpack.c.l.b16 %v1873
      %v5332 = vunpack.c.l.b16 %v1874
      %v5333 = vunpack.c.l.b16 %v1875
      %v5334 = vunpack.c.l.b16 %v1876
      %v5335 = vunpack.c.l.b16 %v1877
      %v5336 = vunpack.c.l.b16 %v1878
      %v5337 = vunpack.c.l.b16 %v1879
      %v5338 = vunpack.c.l.b16 %v1880
      %v5339 = vunpack.c.l.b16 %v1881
      %v5340 = vunpack.c.l.b16 %v1882
      %v5341 = vunpack.c.l.b16 %v1883
      %v5342 = vunpack.c.l.b16 %v1884
      %v5343 = vunpack.c.l.b16 %v1885
      %v5344 = vunpack.c.l.b16 %v1886
      %v5345 = vunpack.c.l.b16 %v1887
      %v5346 = vunpack.c.l.b16 %v1888
      %v5347 = vunpack.c.l.b16 %v1889
      %v5348 = vunpack.c.l.b16 %v1890
      %v5349 = vunpack.c.l.b16 %v1891
      %v5350 = vunpack.c.l.b16 %v1892
      %v5351 = vunpack.c.l.b16 %v1893
      %v5352 = vunpack.c.l.b16 %v1894
      %v5353 = vunpack.c.l.b16 %v1895
      %v5354 = vunpack.c.l.b16 %v1896
      %v5355 = vunpack.c.l.b16 %v1897
      %v5356 = vunpack.c.l.b16 %v1898
      %v5357 = vunpack.c.l.b16 %v1899
      %v5358 = vunpack.c.l.b16 %v1900
      %v5359 = vunpack.c.l.b16 %v1901
      %v5360 = vunpack.c.l.b16 %v1902
      %v5361 = vunpack.c.l.b16 %v1903
      %v5362 = vpack.c.b16 %v5299, %v5298
      %v5363 = vpack.c.b16 %v5301, %v5300
      %v5364 = vpack.c.b16 %v5303, %v5302
      %v5365 = vpack.c.b16 %v5305, %v5304
      %v5366 = vpack.c.b16 %v5307, %v5306
      %v5367 = vpack.c.b16 %v5309, %v5308
      %v5368 = vpack.c.b16 %v5311, %v5310
      %v5369 = vpack.c.b16 %v5313, %v5312
      %v5370 = vpack.c.b16 %v5315, %v5314
      %v5371 = vpack.c.b16 %v5317, %v5316
      %v5372 = vpack.c.b16 %v5319, %v5318
      %v5373 = vpack.c.b16 %v5321, %v5320
      %v5374 = vpack.c.b16 %v5323, %v5322
      %v5375 = vpack.c.b16 %v5325, %v5324
      %v5376 = vpack.c.b16 %v5327, %v5326
      %v5377 = vpack.c.b16 %v5329, %v5328
      %v5378 = vpack.c.b16 %v5331, %v5330
      %v5379 = vpack.c.b16 %v5333, %v5332
      %v5380 = vpack.c.b16 %v5335, %v5334
      %v5381 = vpack.c.b16 %v5337, %v5336
      %v5382 = vpack.c.b16 %v5339, %v5338
      %v5383 = vpack.c.b16 %v5341, %v5340
      %v5384 = vpack.c.b16 %v5343, %v5342
      %v5385 = vpack.c.b16 %v5345, %v5344
      %v5386 = vpack.c.b16 %v5347, %v5346
      %v5387 = vpack.c.b16 %v5349, %v5348
      %v5388 = vpack.c.b16 %v5351, %v5350
      %v5389 = vpack.c.b16 %v5353, %v5352
      %v5390 = vpack.c.b16 %v5355, %v5354
      %v5391 = vpack.c.b16 %v5357, %v5356
      %v5392 = vpack.c.b16 %v5359, %v5358
      %v5393 = vpack.c.b16 %v5361, %v5360
      %5394 = vrot.lane.b32.xlu0 %v5362, 8
      %v5395 = vpop.permute.xlu0 %5394
      %5396 = vrot.lane.b32.xlu0 %v5363, 8
      %v5397 = vpop.permute.xlu0 %5396
      %5398 = vrot.lane.b32.xlu0 %v5364, 8
      %v5399 = vpop.permute.xlu0 %5398
      %5400 = vrot.lane.b32.xlu0 %v5365, 8
      %v5401 = vpop.permute.xlu0 %5400
      %5402 = vrot.lane.b32.xlu0 %v5366, 8
      %v5403 = vpop.permute.xlu0 %5402
      %5404 = vrot.lane.b32.xlu0 %v5367, 8
      %v5405 = vpop.permute.xlu0 %5404
      %5406 = vrot.lane.b32.xlu0 %v5368, 8
      %v5407 = vpop.permute.xlu0 %5406
      %5408 = vrot.lane.b32.xlu0 %v5369, 8
      %v5409 = vpop.permute.xlu0 %5408
      %5410 = vrot.lane.b32.xlu0 %v5370, 8
      %v5411 = vpop.permute.xlu0 %5410
      %5412 = vrot.lane.b32.xlu0 %v5371, 8
      %v5413 = vpop.permute.xlu0 %5412
      %5414 = vrot.lane.b32.xlu0 %v5372, 8
      %v5415 = vpop.permute.xlu0 %5414
      %5416 = vrot.lane.b32.xlu0 %v5373, 8
      %v5417 = vpop.permute.xlu0 %5416
      %5418 = vrot.lane.b32.xlu0 %v5374, 8
      %v5419 = vpop.permute.xlu0 %5418
      %5420 = vrot.lane.b32.xlu0 %v5375, 8
      %v5421 = vpop.permute.xlu0 %5420
      %5422 = vrot.lane.b32.xlu0 %v5376, 8
      %v5423 = vpop.permute.xlu0 %5422
      %5424 = vrot.lane.b32.xlu0 %v5377, 8
      %v5425 = vpop.permute.xlu0 %5424
      %5426 = vrot.lane.b32.xlu0 %v5378, 8
      %v5427 = vpop.permute.xlu0 %5426
      %5428 = vrot.lane.b32.xlu0 %v5379, 8
      %v5429 = vpop.permute.xlu0 %5428
      %5430 = vrot.lane.b32.xlu0 %v5380, 8
      %v5431 = vpop.permute.xlu0 %5430
      %5432 = vrot.lane.b32.xlu0 %v5381, 8
      %v5433 = vpop.permute.xlu0 %5432
      %5434 = vrot.lane.b32.xlu0 %v5382, 8
      %v5435 = vpop.permute.xlu0 %5434
      %5436 = vrot.lane.b32.xlu0 %v5383, 8
      %v5437 = vpop.permute.xlu0 %5436
      %5438 = vrot.lane.b32.xlu0 %v5384, 8
      %v5439 = vpop.permute.xlu0 %5438
      %5440 = vrot.lane.b32.xlu0 %v5385, 8
      %v5441 = vpop.permute.xlu0 %5440
      %5442 = vrot.lane.b32.xlu0 %v5386, 8
      %v5443 = vpop.permute.xlu0 %5442
      %5444 = vrot.lane.b32.xlu0 %v5387, 8
      %v5445 = vpop.permute.xlu0 %5444
      %5446 = vrot.lane.b32.xlu0 %v5388, 8
      %v5447 = vpop.permute.xlu0 %5446
      %5448 = vrot.lane.b32.xlu0 %v5389, 8
      %v5449 = vpop.permute.xlu0 %5448
      %5450 = vrot.lane.b32.xlu0 %v5390, 8
      %v5451 = vpop.permute.xlu0 %5450
      %5452 = vrot.lane.b32.xlu0 %v5391, 8
      %v5453 = vpop.permute.xlu0 %5452
      %5454 = vrot.lane.b32.xlu0 %v5392, 8
      %v5455 = vpop.permute.xlu0 %5454
      %5456 = vrot.lane.b32.xlu0 %v5393, 8
      %v5457 = vpop.permute.xlu0 %5456
      %v5458 = vunpack.c.l.b16 %v1981
      %v5459 = vunpack.c.l.b16 %v1995
      %v5460 = vunpack.c.l.b16 %v2009
      %v5461 = vunpack.c.l.b16 %v2023
      %v5462 = vunpack.c.l.b16 %v2037
      %v5463 = vunpack.c.l.b16 %v2051
      %v5464 = vunpack.c.l.b16 %v2065
      %v5465 = vunpack.c.l.b16 %v2079
      %v5466 = vunpack.c.l.b16 %v2093
      %v5467 = vunpack.c.l.b16 %v2107
      %v5468 = vunpack.c.l.b16 %v2121
      %v5469 = vunpack.c.l.b16 %v2135
      %v5470 = vunpack.c.l.b16 %v2149
      %v5471 = vunpack.c.l.b16 %v2163
      %v5472 = vunpack.c.l.b16 %v2177
      %v5473 = vunpack.c.l.b16 %v2191
      %v5474 = vunpack.c.l.b16 %v2205
      %v5475 = vunpack.c.l.b16 %v2219
      %v5476 = vunpack.c.l.b16 %v2233
      %v5477 = vunpack.c.l.b16 %v2247
      %v5478 = vunpack.c.l.b16 %v2261
      %v5479 = vunpack.c.l.b16 %v2275
      %v5480 = vunpack.c.l.b16 %v2289
      %v5481 = vunpack.c.l.b16 %v2303
      %v5482 = vunpack.c.l.b16 %v2317
      %v5483 = vunpack.c.l.b16 %v2331
      %v5484 = vunpack.c.l.b16 %v2345
      %v5485 = vunpack.c.l.b16 %v2359
      %v5486 = vunpack.c.l.b16 %v2373
      %v5487 = vunpack.c.l.b16 %v2387
      %v5488 = vunpack.c.l.b16 %v2401
      %v5489 = vunpack.c.l.b16 %v2415
      %v5490 = vunpack.c.l.b16 %v2429
      %v5491 = vunpack.c.l.b16 %v2443
      %v5492 = vunpack.c.l.b16 %v2457
      %v5493 = vunpack.c.l.b16 %v2471
      %v5494 = vunpack.c.l.b16 %v2485
      %v5495 = vunpack.c.l.b16 %v2499
      %v5496 = vunpack.c.l.b16 %v2513
      %v5497 = vunpack.c.l.b16 %v2527
      %v5498 = vunpack.c.l.b16 %v2541
      %v5499 = vunpack.c.l.b16 %v2555
      %v5500 = vunpack.c.l.b16 %v2569
      %v5501 = vunpack.c.l.b16 %v2583
      %v5502 = vunpack.c.l.b16 %v2597
      %v5503 = vunpack.c.l.b16 %v2611
      %v5504 = vunpack.c.l.b16 %v2625
      %v5505 = vunpack.c.l.b16 %v2639
      %v5506 = vunpack.c.l.b16 %v2653
      %v5507 = vunpack.c.l.b16 %v2667
      %v5508 = vunpack.c.l.b16 %v2681
      %v5509 = vunpack.c.l.b16 %v2695
      %v5510 = vunpack.c.l.b16 %v2709
      %v5511 = vunpack.c.l.b16 %v2723
      %v5512 = vunpack.c.l.b16 %v2737
      %v5513 = vunpack.c.l.b16 %v2751
      %v5514 = vunpack.c.l.b16 %v2765
      %v5515 = vunpack.c.l.b16 %v2779
      %v5516 = vunpack.c.l.b16 %v2793
      %v5517 = vunpack.c.l.b16 %v2807
      %v5518 = vunpack.c.l.b16 %v2821
      %v5519 = vunpack.c.l.b16 %v2835
      %v5520 = vunpack.c.l.b16 %v2849
      %v5521 = vunpack.c.l.b16 %v2863
      %v5522 = vpack.c.b16 %v5459, %v5458
      %v5523 = vpack.c.b16 %v5461, %v5460
      %v5524 = vpack.c.b16 %v5463, %v5462
      %v5525 = vpack.c.b16 %v5465, %v5464
      %v5526 = vpack.c.b16 %v5467, %v5466
      %v5527 = vpack.c.b16 %v5469, %v5468
      %v5528 = vpack.c.b16 %v5471, %v5470
      %v5529 = vpack.c.b16 %v5473, %v5472
      %v5530 = vpack.c.b16 %v5475, %v5474
      %v5531 = vpack.c.b16 %v5477, %v5476
      %v5532 = vpack.c.b16 %v5479, %v5478
      %v5533 = vpack.c.b16 %v5481, %v5480
      %v5534 = vpack.c.b16 %v5483, %v5482
      %v5535 = vpack.c.b16 %v5485, %v5484
      %v5536 = vpack.c.b16 %v5487, %v5486
      %v5537 = vpack.c.b16 %v5489, %v5488
      %v5538 = vpack.c.b16 %v5491, %v5490
      %v5539 = vpack.c.b16 %v5493, %v5492
      %v5540 = vpack.c.b16 %v5495, %v5494
      %v5541 = vpack.c.b16 %v5497, %v5496
      %v5542 = vpack.c.b16 %v5499, %v5498
      %v5543 = vpack.c.b16 %v5501, %v5500
      %v5544 = vpack.c.b16 %v5503, %v5502
      %v5545 = vpack.c.b16 %v5505, %v5504
      %v5546 = vpack.c.b16 %v5507, %v5506
      %v5547 = vpack.c.b16 %v5509, %v5508
      %v5548 = vpack.c.b16 %v5511, %v5510
      %v5549 = vpack.c.b16 %v5513, %v5512
      %v5550 = vpack.c.b16 %v5515, %v5514
      %v5551 = vpack.c.b16 %v5517, %v5516
      %v5552 = vpack.c.b16 %v5519, %v5518
      %v5553 = vpack.c.b16 %v5521, %v5520
      %5554 = vrot.lane.b32.xlu0 %v5522, 12
      %v5555 = vpop.permute.xlu0 %5554
      %5556 = vrot.lane.b32.xlu0 %v5523, 12
      %v5557 = vpop.permute.xlu0 %5556
      %5558 = vrot.lane.b32.xlu0 %v5524, 12
      %v5559 = vpop.permute.xlu0 %5558
      %5560 = vrot.lane.b32.xlu0 %v5525, 12
      %v5561 = vpop.permute.xlu0 %5560
      %5562 = vrot.lane.b32.xlu0 %v5526, 12
      %v5563 = vpop.permute.xlu0 %5562
      %5564 = vrot.lane.b32.xlu0 %v5527, 12
      %v5565 = vpop.permute.xlu0 %5564
      %5566 = vrot.lane.b32.xlu0 %v5528, 12
      %v5567 = vpop.permute.xlu0 %5566
      %5568 = vrot.lane.b32.xlu0 %v5529, 12
      %v5569 = vpop.permute.xlu0 %5568
      %5570 = vrot.lane.b32.xlu0 %v5530, 12
      %v5571 = vpop.permute.xlu0 %5570
      %5572 = vrot.lane.b32.xlu0 %v5531, 12
      %v5573 = vpop.permute.xlu0 %5572
      %5574 = vrot.lane.b32.xlu0 %v5532, 12
      %v5575 = vpop.permute.xlu0 %5574
      %5576 = vrot.lane.b32.xlu0 %v5533, 12
      %v5577 = vpop.permute.xlu0 %5576
      %5578 = vrot.lane.b32.xlu0 %v5534, 12
      %v5579 = vpop.permute.xlu0 %5578
      %5580 = vrot.lane.b32.xlu0 %v5535, 12
      %v5581 = vpop.permute.xlu0 %5580
      %5582 = vrot.lane.b32.xlu0 %v5536, 12
      %v5583 = vpop.permute.xlu0 %5582
      %5584 = vrot.lane.b32.xlu0 %v5537, 12
      %v5585 = vpop.permute.xlu0 %5584
      %5586 = vrot.lane.b32.xlu0 %v5538, 12
      %v5587 = vpop.permute.xlu0 %5586
      %5588 = vrot.lane.b32.xlu0 %v5539, 12
      %v5589 = vpop.permute.xlu0 %5588
      %5590 = vrot.lane.b32.xlu0 %v5540, 12
      %v5591 = vpop.permute.xlu0 %5590
      %5592 = vrot.lane.b32.xlu0 %v5541, 12
      %v5593 = vpop.permute.xlu0 %5592
      %5594 = vrot.lane.b32.xlu0 %v5542, 12
      %v5595 = vpop.permute.xlu0 %5594
      %5596 = vrot.lane.b32.xlu0 %v5543, 12
      %v5597 = vpop.permute.xlu0 %5596
      %5598 = vrot.lane.b32.xlu0 %v5544, 12
      %v5599 = vpop.permute.xlu0 %5598
      %5600 = vrot.lane.b32.xlu0 %v5545, 12
      %v5601 = vpop.permute.xlu0 %5600
      %5602 = vrot.lane.b32.xlu0 %v5546, 12
      %v5603 = vpop.permute.xlu0 %5602
      %5604 = vrot.lane.b32.xlu0 %v5547, 12
      %v5605 = vpop.permute.xlu0 %5604
      %5606 = vrot.lane.b32.xlu0 %v5548, 12
      %v5607 = vpop.permute.xlu0 %5606
      %5608 = vrot.lane.b32.xlu0 %v5549, 12
      %v5609 = vpop.permute.xlu0 %5608
      %5610 = vrot.lane.b32.xlu0 %v5550, 12
      %v5611 = vpop.permute.xlu0 %5610
      %5612 = vrot.lane.b32.xlu0 %v5551, 12
      %v5613 = vpop.permute.xlu0 %5612
      %5614 = vrot.lane.b32.xlu0 %v5552, 12
      %v5615 = vpop.permute.xlu0 %5614
      %5616 = vrot.lane.b32.xlu0 %v5553, 12
      %v5617 = vpop.permute.xlu0 %5616
      %v5682 = vunpack.c.l.b16 %v2865
      %v5683 = vunpack.c.l.b16 %v2866
      %v5684 = vunpack.c.l.b16 %v2867
      %v5685 = vunpack.c.l.b16 %v2868
      %v5686 = vunpack.c.l.b16 %v2869
      %v5687 = vunpack.c.l.b16 %v2870
      %v5688 = vunpack.c.l.b16 %v2871
      %v5689 = vunpack.c.l.b16 %v2872
      %v5690 = vunpack.c.l.b16 %v2873
      %v5691 = vunpack.c.l.b16 %v2874
      %v5692 = vunpack.c.l.b16 %v2875
      %v5693 = vunpack.c.l.b16 %v2876
      %v5694 = vunpack.c.l.b16 %v2877
      %v5695 = vunpack.c.l.b16 %v2878
      %v5696 = vunpack.c.l.b16 %v2879
      %v5697 = vunpack.c.l.b16 %v2880
      %v5698 = vunpack.c.l.b16 %v2881
      %v5699 = vunpack.c.l.b16 %v2882
      %v5700 = vunpack.c.l.b16 %v2883
      %v5701 = vunpack.c.l.b16 %v2884
      %v5702 = vunpack.c.l.b16 %v2885
      %v5703 = vunpack.c.l.b16 %v2886
      %v5704 = vunpack.c.l.b16 %v2887
      %v5705 = vunpack.c.l.b16 %v2888
      %v5706 = vunpack.c.l.b16 %v2889
      %v5707 = vunpack.c.l.b16 %v2890
      %v5708 = vunpack.c.l.b16 %v2891
      %v5709 = vunpack.c.l.b16 %v2892
      %v5710 = vunpack.c.l.b16 %v2893
      %v5711 = vunpack.c.l.b16 %v2894
      %v5712 = vunpack.c.l.b16 %v2895
      %v5713 = vunpack.c.l.b16 %v2896
      %v5714 = vunpack.c.l.b16 %v2897
      %v5715 = vunpack.c.l.b16 %v2898
      %v5716 = vunpack.c.l.b16 %v2899
      %v5717 = vunpack.c.l.b16 %v2900
      %v5718 = vunpack.c.l.b16 %v2901
      %v5719 = vunpack.c.l.b16 %v2902
      %v5720 = vunpack.c.l.b16 %v2903
      %v5721 = vunpack.c.l.b16 %v2904
      %v5722 = vunpack.c.l.b16 %v2905
      %v5723 = vunpack.c.l.b16 %v2906
      %v5724 = vunpack.c.l.b16 %v2907
      %v5725 = vunpack.c.l.b16 %v2908
      %v5726 = vunpack.c.l.b16 %v2909
      %v5727 = vunpack.c.l.b16 %v2910
      %v5728 = vunpack.c.l.b16 %v2911
      %v5729 = vunpack.c.l.b16 %v2912
      %v5730 = vunpack.c.l.b16 %v2913
      %v5731 = vunpack.c.l.b16 %v2914
      %v5732 = vunpack.c.l.b16 %v2915
      %v5733 = vunpack.c.l.b16 %v2916
      %v5734 = vunpack.c.l.b16 %v2917
      %v5735 = vunpack.c.l.b16 %v2918
      %v5736 = vunpack.c.l.b16 %v2919
      %v5737 = vunpack.c.l.b16 %v2920
      %v5738 = vunpack.c.l.b16 %v2921
      %v5739 = vunpack.c.l.b16 %v2922
      %v5740 = vunpack.c.l.b16 %v2923
      %v5741 = vunpack.c.l.b16 %v2924
      %v5742 = vunpack.c.l.b16 %v2925
      %v5743 = vunpack.c.l.b16 %v2926
      %v5744 = vunpack.c.l.b16 %v2927
      %v5745 = vunpack.c.l.b16 %v2928
      %v5746 = vpack.c.b16 %v5683, %v5682
      %v5747 = vpack.c.b16 %v5685, %v5684
      %v5748 = vpack.c.b16 %v5687, %v5686
      %v5749 = vpack.c.b16 %v5689, %v5688
      %v5750 = vpack.c.b16 %v5691, %v5690
      %v5751 = vpack.c.b16 %v5693, %v5692
      %v5752 = vpack.c.b16 %v5695, %v5694
      %v5753 = vpack.c.b16 %v5697, %v5696
      %v5754 = vpack.c.b16 %v5699, %v5698
      %v5755 = vpack.c.b16 %v5701, %v5700
      %v5756 = vpack.c.b16 %v5703, %v5702
      %v5757 = vpack.c.b16 %v5705, %v5704
      %v5758 = vpack.c.b16 %v5707, %v5706
      %v5759 = vpack.c.b16 %v5709, %v5708
      %v5760 = vpack.c.b16 %v5711, %v5710
      %v5761 = vpack.c.b16 %v5713, %v5712
      %v5762 = vpack.c.b16 %v5715, %v5714
      %v5763 = vpack.c.b16 %v5717, %v5716
      %v5764 = vpack.c.b16 %v5719, %v5718
      %v5765 = vpack.c.b16 %v5721, %v5720
      %v5766 = vpack.c.b16 %v5723, %v5722
      %v5767 = vpack.c.b16 %v5725, %v5724
      %v5768 = vpack.c.b16 %v5727, %v5726
      %v5769 = vpack.c.b16 %v5729, %v5728
      %v5770 = vpack.c.b16 %v5731, %v5730
      %v5771 = vpack.c.b16 %v5733, %v5732
      %v5772 = vpack.c.b16 %v5735, %v5734
      %v5773 = vpack.c.b16 %v5737, %v5736
      %v5774 = vpack.c.b16 %v5739, %v5738
      %v5775 = vpack.c.b16 %v5741, %v5740
      %v5776 = vpack.c.b16 %v5743, %v5742
      %v5777 = vpack.c.b16 %v5745, %v5744
      %5778 = vrot.lane.b32.xlu0 %v5746, 16
      %v5779 = vpop.permute.xlu0 %5778
      %5780 = vrot.lane.b32.xlu0 %v5747, 16
      %v5781 = vpop.permute.xlu0 %5780
      %5782 = vrot.lane.b32.xlu0 %v5748, 16
      %v5783 = vpop.permute.xlu0 %5782
      %5784 = vrot.lane.b32.xlu0 %v5749, 16
      %v5785 = vpop.permute.xlu0 %5784
      %5786 = vrot.lane.b32.xlu0 %v5750, 16
      %v5787 = vpop.permute.xlu0 %5786
      %5788 = vrot.lane.b32.xlu0 %v5751, 16
      %v5789 = vpop.permute.xlu0 %5788
      %5790 = vrot.lane.b32.xlu0 %v5752, 16
      %v5791 = vpop.permute.xlu0 %5790
      %5792 = vrot.lane.b32.xlu0 %v5753, 16
      %v5793 = vpop.permute.xlu0 %5792
      %5794 = vrot.lane.b32.xlu0 %v5754, 16
      %v5795 = vpop.permute.xlu0 %5794
      %5796 = vrot.lane.b32.xlu0 %v5755, 16
      %v5797 = vpop.permute.xlu0 %5796
      %5798 = vrot.lane.b32.xlu0 %v5756, 16
      %v5799 = vpop.permute.xlu0 %5798
      %5800 = vrot.lane.b32.xlu0 %v5757, 16
      %v5801 = vpop.permute.xlu0 %5800
      %5802 = vrot.lane.b32.xlu0 %v5758, 16
      %v5803 = vpop.permute.xlu0 %5802
      %5804 = vrot.lane.b32.xlu0 %v5759, 16
      %v5805 = vpop.permute.xlu0 %5804
      %5806 = vrot.lane.b32.xlu0 %v5760, 16
      %v5807 = vpop.permute.xlu0 %5806
      %5808 = vrot.lane.b32.xlu0 %v5761, 16
      %v5809 = vpop.permute.xlu0 %5808
      %5810 = vrot.lane.b32.xlu0 %v5762, 16
      %v5811 = vpop.permute.xlu0 %5810
      %5812 = vrot.lane.b32.xlu0 %v5763, 16
      %v5813 = vpop.permute.xlu0 %5812
      %5814 = vrot.lane.b32.xlu0 %v5764, 16
      %v5815 = vpop.permute.xlu0 %5814
      %5816 = vrot.lane.b32.xlu0 %v5765, 16
      %v5817 = vpop.permute.xlu0 %5816
      %5818 = vrot.lane.b32.xlu0 %v5766, 16
      %v5819 = vpop.permute.xlu0 %5818
      %5820 = vrot.lane.b32.xlu0 %v5767, 16
      %v5821 = vpop.permute.xlu0 %5820
      %5822 = vrot.lane.b32.xlu0 %v5768, 16
      %v5823 = vpop.permute.xlu0 %5822
      %5824 = vrot.lane.b32.xlu0 %v5769, 16
      %v5825 = vpop.permute.xlu0 %5824
      %5826 = vrot.lane.b32.xlu0 %v5770, 16
      %v5827 = vpop.permute.xlu0 %5826
      %5828 = vrot.lane.b32.xlu0 %v5771, 16
      %v5829 = vpop.permute.xlu0 %5828
      %5830 = vrot.lane.b32.xlu0 %v5772, 16
      %v5831 = vpop.permute.xlu0 %5830
      %5832 = vrot.lane.b32.xlu0 %v5773, 16
      %v5833 = vpop.permute.xlu0 %5832
      %5834 = vrot.lane.b32.xlu0 %v5774, 16
      %v5835 = vpop.permute.xlu0 %5834
      %5836 = vrot.lane.b32.xlu0 %v5775, 16
      %v5837 = vpop.permute.xlu0 %5836
      %5838 = vrot.lane.b32.xlu0 %v5776, 16
      %v5839 = vpop.permute.xlu0 %5838
      %5840 = vrot.lane.b32.xlu0 %v5777, 16
      %v5841 = vpop.permute.xlu0 %5840
      %v5842 = vunpack.c.l.b16 %v3006
      %v5843 = vunpack.c.l.b16 %v3020
      %v5844 = vunpack.c.l.b16 %v3034
      %v5845 = vunpack.c.l.b16 %v3048
      %v5846 = vunpack.c.l.b16 %v3062
      %v5847 = vunpack.c.l.b16 %v3076
      %v5848 = vunpack.c.l.b16 %v3090
      %v5849 = vunpack.c.l.b16 %v3104
      %v5850 = vunpack.c.l.b16 %v3118
      %v5851 = vunpack.c.l.b16 %v3132
      %v5852 = vunpack.c.l.b16 %v3146
      %v5853 = vunpack.c.l.b16 %v3160
      %v5854 = vunpack.c.l.b16 %v3174
      %v5855 = vunpack.c.l.b16 %v3188
      %v5856 = vunpack.c.l.b16 %v3202
      %v5857 = vunpack.c.l.b16 %v3216
      %v5858 = vunpack.c.l.b16 %v3230
      %v5859 = vunpack.c.l.b16 %v3244
      %v5860 = vunpack.c.l.b16 %v3258
      %v5861 = vunpack.c.l.b16 %v3272
      %v5862 = vunpack.c.l.b16 %v3286
      %v5863 = vunpack.c.l.b16 %v3300
      %v5864 = vunpack.c.l.b16 %v3314
      %v5865 = vunpack.c.l.b16 %v3328
      %v5866 = vunpack.c.l.b16 %v3342
      %v5867 = vunpack.c.l.b16 %v3356
      %v5868 = vunpack.c.l.b16 %v3370
      %v5869 = vunpack.c.l.b16 %v3384
      %v5870 = vunpack.c.l.b16 %v3398
      %v5871 = vunpack.c.l.b16 %v3412
      %v5872 = vunpack.c.l.b16 %v3426
      %v5873 = vunpack.c.l.b16 %v3440
      %v5874 = vunpack.c.l.b16 %v3454
      %v5875 = vunpack.c.l.b16 %v3468
      %v5876 = vunpack.c.l.b16 %v3482
      %v5877 = vunpack.c.l.b16 %v3496
      %v5878 = vunpack.c.l.b16 %v3510
      %v5879 = vunpack.c.l.b16 %v3524
      %v5880 = vunpack.c.l.b16 %v3538
      %v5881 = vunpack.c.l.b16 %v3552
      %v5882 = vunpack.c.l.b16 %v3566
      %v5883 = vunpack.c.l.b16 %v3580
      %v5884 = vunpack.c.l.b16 %v3594
      %v5885 = vunpack.c.l.b16 %v3608
      %v5886 = vunpack.c.l.b16 %v3622
      %v5887 = vunpack.c.l.b16 %v3636
      %v5888 = vunpack.c.l.b16 %v3650
      %v5889 = vunpack.c.l.b16 %v3664
      %v5890 = vunpack.c.l.b16 %v3678
      %v5891 = vunpack.c.l.b16 %v3692
      %v5892 = vunpack.c.l.b16 %v3706
      %v5893 = vunpack.c.l.b16 %v3720
      %v5894 = vunpack.c.l.b16 %v3734
      %v5895 = vunpack.c.l.b16 %v3748
      %v5896 = vunpack.c.l.b16 %v3762
      %v5897 = vunpack.c.l.b16 %v3776
      %v5898 = vunpack.c.l.b16 %v3790
      %v5899 = vunpack.c.l.b16 %v3804
      %v5900 = vunpack.c.l.b16 %v3818
      %v5901 = vunpack.c.l.b16 %v3832
      %v5902 = vunpack.c.l.b16 %v3846
      %v5903 = vunpack.c.l.b16 %v3860
      %v5904 = vunpack.c.l.b16 %v3874
      %v5905 = vunpack.c.l.b16 %v3888
      %v5906 = vpack.c.b16 %v5843, %v5842
      %v5907 = vpack.c.b16 %v5845, %v5844
      %v5908 = vpack.c.b16 %v5847, %v5846
      %v5909 = vpack.c.b16 %v5849, %v5848
      %v5910 = vpack.c.b16 %v5851, %v5850
      %v5911 = vpack.c.b16 %v5853, %v5852
      %v5912 = vpack.c.b16 %v5855, %v5854
      %v5913 = vpack.c.b16 %v5857, %v5856
      %v5914 = vpack.c.b16 %v5859, %v5858
      %v5915 = vpack.c.b16 %v5861, %v5860
      %v5916 = vpack.c.b16 %v5863, %v5862
      %v5917 = vpack.c.b16 %v5865, %v5864
      %v5918 = vpack.c.b16 %v5867, %v5866
      %v5919 = vpack.c.b16 %v5869, %v5868
      %v5920 = vpack.c.b16 %v5871, %v5870
      %v5921 = vpack.c.b16 %v5873, %v5872
      %v5922 = vpack.c.b16 %v5875, %v5874
      %v5923 = vpack.c.b16 %v5877, %v5876
      %v5924 = vpack.c.b16 %v5879, %v5878
      %v5925 = vpack.c.b16 %v5881, %v5880
      %v5926 = vpack.c.b16 %v5883, %v5882
      %v5927 = vpack.c.b16 %v5885, %v5884
      %v5928 = vpack.c.b16 %v5887, %v5886
      %v5929 = vpack.c.b16 %v5889, %v5888
      %v5930 = vpack.c.b16 %v5891, %v5890
      %v5931 = vpack.c.b16 %v5893, %v5892
      %v5932 = vpack.c.b16 %v5895, %v5894
      %v5933 = vpack.c.b16 %v5897, %v5896
      %v5934 = vpack.c.b16 %v5899, %v5898
      %v5935 = vpack.c.b16 %v5901, %v5900
      %v5936 = vpack.c.b16 %v5903, %v5902
      %v5937 = vpack.c.b16 %v5905, %v5904
      %5938 = vrot.lane.b32.xlu0 %v5906, 20
      %v5939 = vpop.permute.xlu0 %5938
      %5940 = vrot.lane.b32.xlu0 %v5907, 20
      %v5941 = vpop.permute.xlu0 %5940
      %5942 = vrot.lane.b32.xlu0 %v5908, 20
      %v5943 = vpop.permute.xlu0 %5942
      %5944 = vrot.lane.b32.xlu0 %v5909, 20
      %v5945 = vpop.permute.xlu0 %5944
      %5946 = vrot.lane.b32.xlu0 %v5910, 20
      %v5947 = vpop.permute.xlu0 %5946
      %5948 = vrot.lane.b32.xlu0 %v5911, 20
      %v5949 = vpop.permute.xlu0 %5948
      %5950 = vrot.lane.b32.xlu0 %v5912, 20
      %v5951 = vpop.permute.xlu0 %5950
      %5952 = vrot.lane.b32.xlu0 %v5913, 20
      %v5953 = vpop.permute.xlu0 %5952
      %5954 = vrot.lane.b32.xlu0 %v5914, 20
      %v5955 = vpop.permute.xlu0 %5954
      %5956 = vrot.lane.b32.xlu0 %v5915, 20
      %v5957 = vpop.permute.xlu0 %5956
      %5958 = vrot.lane.b32.xlu0 %v5916, 20
      %v5959 = vpop.permute.xlu0 %5958
      %5960 = vrot.lane.b32.xlu0 %v5917, 20
      %v5961 = vpop.permute.xlu0 %5960
      %5962 = vrot.lane.b32.xlu0 %v5918, 20
      %v5963 = vpop.permute.xlu0 %5962
      %5964 = vrot.lane.b32.xlu0 %v5919, 20
      %v5965 = vpop.permute.xlu0 %5964
      %5966 = vrot.lane.b32.xlu0 %v5920, 20
      %v5967 = vpop.permute.xlu0 %5966
      %5968 = vrot.lane.b32.xlu0 %v5921, 20
      %v5969 = vpop.permute.xlu0 %5968
      %5970 = vrot.lane.b32.xlu0 %v5922, 20
      %v5971 = vpop.permute.xlu0 %5970
      %5972 = vrot.lane.b32.xlu0 %v5923, 20
      %v5973 = vpop.permute.xlu0 %5972
      %5974 = vrot.lane.b32.xlu0 %v5924, 20
      %v5975 = vpop.permute.xlu0 %5974
      %5976 = vrot.lane.b32.xlu0 %v5925, 20
      %v5977 = vpop.permute.xlu0 %5976
      %5978 = vrot.lane.b32.xlu0 %v5926, 20
      %v5979 = vpop.permute.xlu0 %5978
      %5980 = vrot.lane.b32.xlu0 %v5927, 20
      %v5981 = vpop.permute.xlu0 %5980
      %5982 = vrot.lane.b32.xlu0 %v5928, 20
      %v5983 = vpop.permute.xlu0 %5982
      %5984 = vrot.lane.b32.xlu0 %v5929, 20
      %v5985 = vpop.permute.xlu0 %5984
      %5986 = vrot.lane.b32.xlu0 %v5930, 20
      %v5987 = vpop.permute.xlu0 %5986
      %5988 = vrot.lane.b32.xlu0 %v5931, 20
      %v5989 = vpop.permute.xlu0 %5988
      %5990 = vrot.lane.b32.xlu0 %v5932, 20
      %v5991 = vpop.permute.xlu0 %5990
      %5992 = vrot.lane.b32.xlu0 %v5933, 20
      %v5993 = vpop.permute.xlu0 %5992
      %5994 = vrot.lane.b32.xlu0 %v5934, 20
      %v5995 = vpop.permute.xlu0 %5994
      %5996 = vrot.lane.b32.xlu0 %v5935, 20
      %v5997 = vpop.permute.xlu0 %5996
      %5998 = vrot.lane.b32.xlu0 %v5936, 20
      %v5999 = vpop.permute.xlu0 %5998
      %6000 = vrot.lane.b32.xlu0 %v5937, 20
      %v6001 = vpop.permute.xlu0 %6000
      %v6066 = vunpack.c.l.b16 %v3890
      %v6067 = vunpack.c.l.b16 %v3891
      %v6068 = vunpack.c.l.b16 %v3892
      %v6069 = vunpack.c.l.b16 %v3893
      %v6070 = vunpack.c.l.b16 %v3894
      %v6071 = vunpack.c.l.b16 %v3895
      %v6072 = vunpack.c.l.b16 %v3896
      %v6073 = vunpack.c.l.b16 %v3897
      %v6074 = vunpack.c.l.b16 %v3898
      %v6075 = vunpack.c.l.b16 %v3899
      %v6076 = vunpack.c.l.b16 %v3900
      %v6077 = vunpack.c.l.b16 %v3901
      %v6078 = vunpack.c.l.b16 %v3902
      %v6079 = vunpack.c.l.b16 %v3903
      %v6080 = vunpack.c.l.b16 %v3904
      %v6081 = vunpack.c.l.b16 %v3905
      %v6082 = vunpack.c.l.b16 %v3906
      %v6083 = vunpack.c.l.b16 %v3907
      %v6084 = vunpack.c.l.b16 %v3908
      %v6085 = vunpack.c.l.b16 %v3909
      %v6086 = vunpack.c.l.b16 %v3910
      %v6087 = vunpack.c.l.b16 %v3911
      %v6088 = vunpack.c.l.b16 %v3912
      %v6089 = vunpack.c.l.b16 %v3913
      %v6090 = vunpack.c.l.b16 %v3914
      %v6091 = vunpack.c.l.b16 %v3915
      %v6092 = vunpack.c.l.b16 %v3916
      %v6093 = vunpack.c.l.b16 %v3917
      %v6094 = vunpack.c.l.b16 %v3918
      %v6095 = vunpack.c.l.b16 %v3919
      %v6096 = vunpack.c.l.b16 %v3920
      %v6097 = vunpack.c.l.b16 %v3921
      %v6098 = vunpack.c.l.b16 %v3922
      %v6099 = vunpack.c.l.b16 %v3923
      %v6100 = vunpack.c.l.b16 %v3924
      %v6101 = vunpack.c.l.b16 %v3925
      %v6102 = vunpack.c.l.b16 %v3926
      %v6103 = vunpack.c.l.b16 %v3927
      %v6104 = vunpack.c.l.b16 %v3928
      %v6105 = vunpack.c.l.b16 %v3929
      %v6106 = vunpack.c.l.b16 %v3930
      %v6107 = vunpack.c.l.b16 %v3931
      %v6108 = vunpack.c.l.b16 %v3932
      %v6109 = vunpack.c.l.b16 %v3933
      %v6110 = vunpack.c.l.b16 %v3934
      %v6111 = vunpack.c.l.b16 %v3935
      %v6112 = vunpack.c.l.b16 %v3936
      %v6113 = vunpack.c.l.b16 %v3937
      %v6114 = vunpack.c.l.b16 %v3938
      %v6115 = vunpack.c.l.b16 %v3939
      %v6116 = vunpack.c.l.b16 %v3940
      %v6117 = vunpack.c.l.b16 %v3941
      %v6118 = vunpack.c.l.b16 %v3942
      %v6119 = vunpack.c.l.b16 %v3943
      %v6120 = vunpack.c.l.b16 %v3944
      %v6121 = vunpack.c.l.b16 %v3945
      %v6122 = vunpack.c.l.b16 %v3946
      %v6123 = vunpack.c.l.b16 %v3947
      %v6124 = vunpack.c.l.b16 %v3948
      %v6125 = vunpack.c.l.b16 %v3949
      %v6126 = vunpack.c.l.b16 %v3950
      %v6127 = vunpack.c.l.b16 %v3951
      %v6128 = vunpack.c.l.b16 %v3952
      %v6129 = vunpack.c.l.b16 %v3953
      %v6130 = vpack.c.b16 %v6067, %v6066
      %v6131 = vpack.c.b16 %v6069, %v6068
      %v6132 = vpack.c.b16 %v6071, %v6070
      %v6133 = vpack.c.b16 %v6073, %v6072
      %v6134 = vpack.c.b16 %v6075, %v6074
      %v6135 = vpack.c.b16 %v6077, %v6076
      %v6136 = vpack.c.b16 %v6079, %v6078
      %v6137 = vpack.c.b16 %v6081, %v6080
      %v6138 = vpack.c.b16 %v6083, %v6082
      %v6139 = vpack.c.b16 %v6085, %v6084
      %v6140 = vpack.c.b16 %v6087, %v6086
      %v6141 = vpack.c.b16 %v6089, %v6088
      %v6142 = vpack.c.b16 %v6091, %v6090
      %v6143 = vpack.c.b16 %v6093, %v6092
      %v6144 = vpack.c.b16 %v6095, %v6094
      %v6145 = vpack.c.b16 %v6097, %v6096
      %v6146 = vpack.c.b16 %v6099, %v6098
      %v6147 = vpack.c.b16 %v6101, %v6100
      %v6148 = vpack.c.b16 %v6103, %v6102
      %v6149 = vpack.c.b16 %v6105, %v6104
      %v6150 = vpack.c.b16 %v6107, %v6106
      %v6151 = vpack.c.b16 %v6109, %v6108
      %v6152 = vpack.c.b16 %v6111, %v6110
      %v6153 = vpack.c.b16 %v6113, %v6112
      %v6154 = vpack.c.b16 %v6115, %v6114
      %v6155 = vpack.c.b16 %v6117, %v6116
      %v6156 = vpack.c.b16 %v6119, %v6118
      %v6157 = vpack.c.b16 %v6121, %v6120
      %v6158 = vpack.c.b16 %v6123, %v6122
      %v6159 = vpack.c.b16 %v6125, %v6124
      %v6160 = vpack.c.b16 %v6127, %v6126
      %v6161 = vpack.c.b16 %v6129, %v6128
      %6162 = vrot.lane.b32.xlu0 %v6130, 24
      %v6163 = vpop.permute.xlu0 %6162
      %6164 = vrot.lane.b32.xlu0 %v6131, 24
      %v6165 = vpop.permute.xlu0 %6164
      %6166 = vrot.lane.b32.xlu0 %v6132, 24
      %v6167 = vpop.permute.xlu0 %6166
      %6168 = vrot.lane.b32.xlu0 %v6133, 24
      %v6169 = vpop.permute.xlu0 %6168
      %6170 = vrot.lane.b32.xlu0 %v6134, 24
      %v6171 = vpop.permute.xlu0 %6170
      %6172 = vrot.lane.b32.xlu0 %v6135, 24
      %v6173 = vpop.permute.xlu0 %6172
      %6174 = vrot.lane.b32.xlu0 %v6136, 24
      %v6175 = vpop.permute.xlu0 %6174
      %6176 = vrot.lane.b32.xlu0 %v6137, 24
      %v6177 = vpop.permute.xlu0 %6176
      %6178 = vrot.lane.b32.xlu0 %v6138, 24
      %v6179 = vpop.permute.xlu0 %6178
      %6180 = vrot.lane.b32.xlu0 %v6139, 24
      %v6181 = vpop.permute.xlu0 %6180
      %6182 = vrot.lane.b32.xlu0 %v6140, 24
      %v6183 = vpop.permute.xlu0 %6182
      %6184 = vrot.lane.b32.xlu0 %v6141, 24
      %v6185 = vpop.permute.xlu0 %6184
      %6186 = vrot.lane.b32.xlu0 %v6142, 24
      %v6187 = vpop.permute.xlu0 %6186
      %6188 = vrot.lane.b32.xlu0 %v6143, 24
      %v6189 = vpop.permute.xlu0 %6188
      %6190 = vrot.lane.b32.xlu0 %v6144, 24
      %v6191 = vpop.permute.xlu0 %6190
      %6192 = vrot.lane.b32.xlu0 %v6145, 24
      %v6193 = vpop.permute.xlu0 %6192
      %6194 = vrot.lane.b32.xlu0 %v6146, 24
      %v6195 = vpop.permute.xlu0 %6194
      %6196 = vrot.lane.b32.xlu0 %v6147, 24
      %v6197 = vpop.permute.xlu0 %6196
      %6198 = vrot.lane.b32.xlu0 %v6148, 24
      %v6199 = vpop.permute.xlu0 %6198
      %6200 = vrot.lane.b32.xlu0 %v6149, 24
      %v6201 = vpop.permute.xlu0 %6200
      %6202 = vrot.lane.b32.xlu0 %v6150, 24
      %v6203 = vpop.permute.xlu0 %6202
      %6204 = vrot.lane.b32.xlu0 %v6151, 24
      %v6205 = vpop.permute.xlu0 %6204
      %6206 = vrot.lane.b32.xlu0 %v6152, 24
      %v6207 = vpop.permute.xlu0 %6206
      %6208 = vrot.lane.b32.xlu0 %v6153, 24
      %v6209 = vpop.permute.xlu0 %6208
      %6210 = vrot.lane.b32.xlu0 %v6154, 24
      %v6211 = vpop.permute.xlu0 %6210
      %6212 = vrot.lane.b32.xlu0 %v6155, 24
      %v6213 = vpop.permute.xlu0 %6212
      %6214 = vrot.lane.b32.xlu0 %v6156, 24
      %v6215 = vpop.permute.xlu0 %6214
      %6216 = vrot.lane.b32.xlu0 %v6157, 24
      %v6217 = vpop.permute.xlu0 %6216
      %6218 = vrot.lane.b32.xlu0 %v6158, 24
      %v6219 = vpop.permute.xlu0 %6218
      %6220 = vrot.lane.b32.xlu0 %v6159, 24
      %v6221 = vpop.permute.xlu0 %6220
      %6222 = vrot.lane.b32.xlu0 %v6160, 24
      %v6223 = vpop.permute.xlu0 %6222
      %6224 = vrot.lane.b32.xlu0 %v6161, 24
      %v6225 = vpop.permute.xlu0 %6224
      %v6226 = vunpack.c.l.b16 %v4031
      %v6227 = vunpack.c.l.b16 %v4045
      %v6228 = vunpack.c.l.b16 %v4059
      %v6229 = vunpack.c.l.b16 %v4073
      %v6230 = vunpack.c.l.b16 %v4087
      %v6231 = vunpack.c.l.b16 %v4101
      %v6232 = vunpack.c.l.b16 %v4115
      %v6233 = vunpack.c.l.b16 %v4129
      %v6234 = vunpack.c.l.b16 %v4143
      %v6235 = vunpack.c.l.b16 %v4157
      %v6236 = vunpack.c.l.b16 %v4171
      %v6237 = vunpack.c.l.b16 %v4185
      %v6238 = vunpack.c.l.b16 %v4199
      %v6239 = vunpack.c.l.b16 %v4213
      %v6240 = vunpack.c.l.b16 %v4227
      %v6241 = vunpack.c.l.b16 %v4241
      %v6242 = vunpack.c.l.b16 %v4255
      %v6243 = vunpack.c.l.b16 %v4269
      %v6244 = vunpack.c.l.b16 %v4283
      %v6245 = vunpack.c.l.b16 %v4297
      %v6246 = vunpack.c.l.b16 %v4311
      %v6247 = vunpack.c.l.b16 %v4325
      %v6248 = vunpack.c.l.b16 %v4339
      %v6249 = vunpack.c.l.b16 %v4353
      %v6250 = vunpack.c.l.b16 %v4367
      %v6251 = vunpack.c.l.b16 %v4381
      %v6252 = vunpack.c.l.b16 %v4395
      %v6253 = vunpack.c.l.b16 %v4409
      %v6254 = vunpack.c.l.b16 %v4423
      %v6255 = vunpack.c.l.b16 %v4437
      %v6256 = vunpack.c.l.b16 %v4451
      %v6257 = vunpack.c.l.b16 %v4465
      %v6258 = vunpack.c.l.b16 %v4479
      %v6259 = vunpack.c.l.b16 %v4493
      %v6260 = vunpack.c.l.b16 %v4507
      %v6261 = vunpack.c.l.b16 %v4521
      %v6262 = vunpack.c.l.b16 %v4535
      %v6263 = vunpack.c.l.b16 %v4549
      %v6264 = vunpack.c.l.b16 %v4563
      %v6265 = vunpack.c.l.b16 %v4577
      %v6266 = vunpack.c.l.b16 %v4591
      %v6267 = vunpack.c.l.b16 %v4605
      %v6268 = vunpack.c.l.b16 %v4619
      %v6269 = vunpack.c.l.b16 %v4633
      %v6270 = vunpack.c.l.b16 %v4647
      %v6271 = vunpack.c.l.b16 %v4661
      %v6272 = vunpack.c.l.b16 %v4675
      %v6273 = vunpack.c.l.b16 %v4689
      %v6274 = vunpack.c.l.b16 %v4703
      %v6275 = vunpack.c.l.b16 %v4717
      %v6276 = vunpack.c.l.b16 %v4731
      %v6277 = vunpack.c.l.b16 %v4745
      %v6278 = vunpack.c.l.b16 %v4759
      %v6279 = vunpack.c.l.b16 %v4773
      %v6280 = vunpack.c.l.b16 %v4787
      %v6281 = vunpack.c.l.b16 %v4801
      %v6282 = vunpack.c.l.b16 %v4815
      %v6283 = vunpack.c.l.b16 %v4829
      %v6284 = vunpack.c.l.b16 %v4843
      %v6285 = vunpack.c.l.b16 %v4857
      %v6286 = vunpack.c.l.b16 %v4871
      %v6287 = vunpack.c.l.b16 %v4885
      %v6288 = vunpack.c.l.b16 %v4899
      %v6289 = vunpack.c.l.b16 %v4913
      %v6290 = vpack.c.b16 %v6227, %v6226
      %v6291 = vpack.c.b16 %v6229, %v6228
      %v6292 = vpack.c.b16 %v6231, %v6230
      %v6293 = vpack.c.b16 %v6233, %v6232
      %v6294 = vpack.c.b16 %v6235, %v6234
      %v6295 = vpack.c.b16 %v6237, %v6236
      %v6296 = vpack.c.b16 %v6239, %v6238
      %v6297 = vpack.c.b16 %v6241, %v6240
      %v6298 = vpack.c.b16 %v6243, %v6242
      %v6299 = vpack.c.b16 %v6245, %v6244
      %v6300 = vpack.c.b16 %v6247, %v6246
      %v6301 = vpack.c.b16 %v6249, %v6248
      %v6302 = vpack.c.b16 %v6251, %v6250
      %v6303 = vpack.c.b16 %v6253, %v6252
      %v6304 = vpack.c.b16 %v6255, %v6254
      %v6305 = vpack.c.b16 %v6257, %v6256
      %v6306 = vpack.c.b16 %v6259, %v6258
      %v6307 = vpack.c.b16 %v6261, %v6260
      %v6308 = vpack.c.b16 %v6263, %v6262
      %v6309 = vpack.c.b16 %v6265, %v6264
      %v6310 = vpack.c.b16 %v6267, %v6266
      %v6311 = vpack.c.b16 %v6269, %v6268
      %v6312 = vpack.c.b16 %v6271, %v6270
      %v6313 = vpack.c.b16 %v6273, %v6272
      %v6314 = vpack.c.b16 %v6275, %v6274
      %v6315 = vpack.c.b16 %v6277, %v6276
      %v6316 = vpack.c.b16 %v6279, %v6278
      %v6317 = vpack.c.b16 %v6281, %v6280
      %v6318 = vpack.c.b16 %v6283, %v6282
      %v6319 = vpack.c.b16 %v6285, %v6284
      %v6320 = vpack.c.b16 %v6287, %v6286
      %v6321 = vpack.c.b16 %v6289, %v6288
      %6322 = vrot.lane.b32.xlu0 %v6290, 28
      %v6323 = vpop.permute.xlu0 %6322
      %6324 = vrot.lane.b32.xlu0 %v6291, 28
      %v6325 = vpop.permute.xlu0 %6324
      %6326 = vrot.lane.b32.xlu0 %v6292, 28
      %v6327 = vpop.permute.xlu0 %6326
      %6328 = vrot.lane.b32.xlu0 %v6293, 28
      %v6329 = vpop.permute.xlu0 %6328
      %6330 = vrot.lane.b32.xlu0 %v6294, 28
      %v6331 = vpop.permute.xlu0 %6330
      %6332 = vrot.lane.b32.xlu0 %v6295, 28
      %v6333 = vpop.permute.xlu0 %6332
      %6334 = vrot.lane.b32.xlu0 %v6296, 28
      %v6335 = vpop.permute.xlu0 %6334
      %6336 = vrot.lane.b32.xlu0 %v6297, 28
      %v6337 = vpop.permute.xlu0 %6336
      %6338 = vrot.lane.b32.xlu0 %v6298, 28
      %v6339 = vpop.permute.xlu0 %6338
      %6340 = vrot.lane.b32.xlu0 %v6299, 28
      %v6341 = vpop.permute.xlu0 %6340
      %6342 = vrot.lane.b32.xlu0 %v6300, 28
      %v6343 = vpop.permute.xlu0 %6342
      %6344 = vrot.lane.b32.xlu0 %v6301, 28
      %v6345 = vpop.permute.xlu0 %6344
      %6346 = vrot.lane.b32.xlu0 %v6302, 28
      %v6347 = vpop.permute.xlu0 %6346
      %6348 = vrot.lane.b32.xlu0 %v6303, 28
      %v6349 = vpop.permute.xlu0 %6348
      %6350 = vrot.lane.b32.xlu0 %v6304, 28
      %v6351 = vpop.permute.xlu0 %6350
      %6352 = vrot.lane.b32.xlu0 %v6305, 28
      %v6353 = vpop.permute.xlu0 %6352
      %6354 = vrot.lane.b32.xlu0 %v6306, 28
      %v6355 = vpop.permute.xlu0 %6354
      %6356 = vrot.lane.b32.xlu0 %v6307, 28
      %v6357 = vpop.permute.xlu0 %6356
      %6358 = vrot.lane.b32.xlu0 %v6308, 28
      %v6359 = vpop.permute.xlu0 %6358
      %6360 = vrot.lane.b32.xlu0 %v6309, 28
      %v6361 = vpop.permute.xlu0 %6360
      %6362 = vrot.lane.b32.xlu0 %v6310, 28
      %v6363 = vpop.permute.xlu0 %6362
      %6364 = vrot.lane.b32.xlu0 %v6311, 28
      %v6365 = vpop.permute.xlu0 %6364
      %6366 = vrot.lane.b32.xlu0 %v6312, 28
      %v6367 = vpop.permute.xlu0 %6366
      %6368 = vrot.lane.b32.xlu0 %v6313, 28
      %v6369 = vpop.permute.xlu0 %6368
      %6370 = vrot.lane.b32.xlu0 %v6314, 28
      %v6371 = vpop.permute.xlu0 %6370
      %6372 = vrot.lane.b32.xlu0 %v6315, 28
      %v6373 = vpop.permute.xlu0 %6372
      %6374 = vrot.lane.b32.xlu0 %v6316, 28
      %v6375 = vpop.permute.xlu0 %6374
      %6376 = vrot.lane.b32.xlu0 %v6317, 28
      %v6377 = vpop.permute.xlu0 %6376
      %6378 = vrot.lane.b32.xlu0 %v6318, 28
      %v6379 = vpop.permute.xlu0 %6378
      %6380 = vrot.lane.b32.xlu0 %v6319, 28
      %v6381 = vpop.permute.xlu0 %6380
      %6382 = vrot.lane.b32.xlu0 %v6320, 28
      %v6383 = vpop.permute.xlu0 %6382
      %6384 = vrot.lane.b32.xlu0 %v6321, 28
      %v6385 = vpop.permute.xlu0 %6384
      %vm6386 = vcmask 31744
      %v6389 = vsel %vm6386, %v5042, %v5171
      %v6392 = vsel %vm6386, %v5043, %v5173
      %v6395 = vsel %vm6386, %v5044, %v5175
      %v6398 = vsel %vm6386, %v5045, %v5177
      %v6401 = vsel %vm6386, %v5046, %v5179
      %v6404 = vsel %vm6386, %v5047, %v5181
      %v6407 = vsel %vm6386, %v5048, %v5183
      %v6410 = vsel %vm6386, %v5049, %v5185
      %v6413 = vsel %vm6386, %v5050, %v5187
      %v6416 = vsel %vm6386, %v5051, %v5189
      %v6419 = vsel %vm6386, %v5052, %v5191
      %v6422 = vsel %vm6386, %v5053, %v5193
      %v6425 = vsel %vm6386, %v5054, %v5195
      %v6428 = vsel %vm6386, %v5055, %v5197
      %v6431 = vsel %vm6386, %v5056, %v5199
      %v6434 = vsel %vm6386, %v5057, %v5201
      %v6437 = vsel %vm6386, %v5058, %v5203
      %v6440 = vsel %vm6386, %v5059, %v5205
      %v6443 = vsel %vm6386, %v5060, %v5207
      %v6446 = vsel %vm6386, %v5061, %v5209
      %v6449 = vsel %vm6386, %v5062, %v5211
      %v6452 = vsel %vm6386, %v5063, %v5213
      %v6455 = vsel %vm6386, %v5064, %v5215
      %v6458 = vsel %vm6386, %v5065, %v5217
      %v6461 = vsel %vm6386, %v5066, %v5219
      %v6464 = vsel %vm6386, %v5067, %v5221
      %v6467 = vsel %vm6386, %v5068, %v5223
      %v6470 = vsel %vm6386, %v5069, %v5225
      %v6473 = vsel %vm6386, %v5070, %v5227
      %v6476 = vsel %vm6386, %v5071, %v5229
      %v6479 = vsel %vm6386, %v5072, %v5231
      %v6482 = vsel %vm6386, %v5073, %v5233
      %vm6483 = vcmask 64512
      %v6485 = vsel %vm6483, %v6389, %v5395
      %v6487 = vsel %vm6483, %v6392, %v5397
      %v6489 = vsel %vm6483, %v6395, %v5399
      %v6491 = vsel %vm6483, %v6398, %v5401
      %v6493 = vsel %vm6483, %v6401, %v5403
      %v6495 = vsel %vm6483, %v6404, %v5405
      %v6497 = vsel %vm6483, %v6407, %v5407
      %v6499 = vsel %vm6483, %v6410, %v5409
      %v6501 = vsel %vm6483, %v6413, %v5411
      %v6503 = vsel %vm6483, %v6416, %v5413
      %v6505 = vsel %vm6483, %v6419, %v5415
      %v6507 = vsel %vm6483, %v6422, %v5417
      %v6509 = vsel %vm6483, %v6425, %v5419
      %v6511 = vsel %vm6483, %v6428, %v5421
      %v6513 = vsel %vm6483, %v6431, %v5423
      %v6515 = vsel %vm6483, %v6434, %v5425
      %v6517 = vsel %vm6483, %v6437, %v5427
      %v6519 = vsel %vm6483, %v6440, %v5429
      %v6521 = vsel %vm6483, %v6443, %v5431
      %v6523 = vsel %vm6483, %v6446, %v5433
      %v6525 = vsel %vm6483, %v6449, %v5435
      %v6527 = vsel %vm6483, %v6452, %v5437
      %v6529 = vsel %vm6483, %v6455, %v5439
      %v6531 = vsel %vm6483, %v6458, %v5441
      %v6533 = vsel %vm6483, %v6461, %v5443
      %v6535 = vsel %vm6483, %v6464, %v5445
      %v6537 = vsel %vm6483, %v6467, %v5447
      %v6539 = vsel %vm6483, %v6470, %v5449
      %v6541 = vsel %vm6483, %v6473, %v5451
      %v6543 = vsel %vm6483, %v6476, %v5453
      %v6545 = vsel %vm6483, %v6479, %v5455
      %v6547 = vsel %vm6483, %v6482, %v5457
      %vm6548 = vcmask 97280
      %v6550 = vsel %vm6548, %v6485, %v5555
      %v6552 = vsel %vm6548, %v6487, %v5557
      %v6554 = vsel %vm6548, %v6489, %v5559
      %v6556 = vsel %vm6548, %v6491, %v5561
      %v6558 = vsel %vm6548, %v6493, %v5563
      %v6560 = vsel %vm6548, %v6495, %v5565
      %v6562 = vsel %vm6548, %v6497, %v5567
      %v6564 = vsel %vm6548, %v6499, %v5569
      %v6566 = vsel %vm6548, %v6501, %v5571
      %v6568 = vsel %vm6548, %v6503, %v5573
      %v6570 = vsel %vm6548, %v6505, %v5575
      %v6572 = vsel %vm6548, %v6507, %v5577
      %v6574 = vsel %vm6548, %v6509, %v5579
      %v6576 = vsel %vm6548, %v6511, %v5581
      %v6578 = vsel %vm6548, %v6513, %v5583
      %v6580 = vsel %vm6548, %v6515, %v5585
      %v6582 = vsel %vm6548, %v6517, %v5587
      %v6584 = vsel %vm6548, %v6519, %v5589
      %v6586 = vsel %vm6548, %v6521, %v5591
      %v6588 = vsel %vm6548, %v6523, %v5593
      %v6590 = vsel %vm6548, %v6525, %v5595
      %v6592 = vsel %vm6548, %v6527, %v5597
      %v6594 = vsel %vm6548, %v6529, %v5599
      %v6596 = vsel %vm6548, %v6531, %v5601
      %v6598 = vsel %vm6548, %v6533, %v5603
      %v6600 = vsel %vm6548, %v6535, %v5605
      %v6602 = vsel %vm6548, %v6537, %v5607
      %v6604 = vsel %vm6548, %v6539, %v5609
      %v6606 = vsel %vm6548, %v6541, %v5611
      %v6608 = vsel %vm6548, %v6543, %v5613
      %v6610 = vsel %vm6548, %v6545, %v5615
      %v6612 = vsel %vm6548, %v6547, %v5617
      %vm6613 = vcmask 130048
      %v6615 = vsel %vm6613, %v6550, %v5779
      %v6617 = vsel %vm6613, %v6552, %v5781
      %v6619 = vsel %vm6613, %v6554, %v5783
      %v6621 = vsel %vm6613, %v6556, %v5785
      %v6623 = vsel %vm6613, %v6558, %v5787
      %v6625 = vsel %vm6613, %v6560, %v5789
      %v6627 = vsel %vm6613, %v6562, %v5791
      %v6629 = vsel %vm6613, %v6564, %v5793
      %v6631 = vsel %vm6613, %v6566, %v5795
      %v6633 = vsel %vm6613, %v6568, %v5797
      %v6635 = vsel %vm6613, %v6570, %v5799
      %v6637 = vsel %vm6613, %v6572, %v5801
      %v6639 = vsel %vm6613, %v6574, %v5803
      %v6641 = vsel %vm6613, %v6576, %v5805
      %v6643 = vsel %vm6613, %v6578, %v5807
      %v6645 = vsel %vm6613, %v6580, %v5809
      %v6647 = vsel %vm6613, %v6582, %v5811
      %v6649 = vsel %vm6613, %v6584, %v5813
      %v6651 = vsel %vm6613, %v6586, %v5815
      %v6653 = vsel %vm6613, %v6588, %v5817
      %v6655 = vsel %vm6613, %v6590, %v5819
      %v6657 = vsel %vm6613, %v6592, %v5821
      %v6659 = vsel %vm6613, %v6594, %v5823
      %v6661 = vsel %vm6613, %v6596, %v5825
      %v6663 = vsel %vm6613, %v6598, %v5827
      %v6665 = vsel %vm6613, %v6600, %v5829
      %v6667 = vsel %vm6613, %v6602, %v5831
      %v6669 = vsel %vm6613, %v6604, %v5833
      %v6671 = vsel %vm6613, %v6606, %v5835
      %v6673 = vsel %vm6613, %v6608, %v5837
      %v6675 = vsel %vm6613, %v6610, %v5839
      %v6677 = vsel %vm6613, %v6612, %v5841
      %vm6678 = vcmask 162816
      %v6680 = vsel %vm6678, %v6615, %v5939
      %v6682 = vsel %vm6678, %v6617, %v5941
      %v6684 = vsel %vm6678, %v6619, %v5943
      %v6686 = vsel %vm6678, %v6621, %v5945
      %v6688 = vsel %vm6678, %v6623, %v5947
      %v6690 = vsel %vm6678, %v6625, %v5949
      %v6692 = vsel %vm6678, %v6627, %v5951
      %v6694 = vsel %vm6678, %v6629, %v5953
      %v6696 = vsel %vm6678, %v6631, %v5955
      %v6698 = vsel %vm6678, %v6633, %v5957
      %v6700 = vsel %vm6678, %v6635, %v5959
      %v6702 = vsel %vm6678, %v6637, %v5961
      %v6704 = vsel %vm6678, %v6639, %v5963
      %v6706 = vsel %vm6678, %v6641, %v5965
      %v6708 = vsel %vm6678, %v6643, %v5967
      %v6710 = vsel %vm6678, %v6645, %v5969
      %v6712 = vsel %vm6678, %v6647, %v5971
      %v6714 = vsel %vm6678, %v6649, %v5973
      %v6716 = vsel %vm6678, %v6651, %v5975
      %v6718 = vsel %vm6678, %v6653, %v5977
      %v6720 = vsel %vm6678, %v6655, %v5979
      %v6722 = vsel %vm6678, %v6657, %v5981
      %v6724 = vsel %vm6678, %v6659, %v5983
      %v6726 = vsel %vm6678, %v6661, %v5985
      %v6728 = vsel %vm6678, %v6663, %v5987
      %v6730 = vsel %vm6678, %v6665, %v5989
      %v6732 = vsel %vm6678, %v6667, %v5991
      %v6734 = vsel %vm6678, %v6669, %v5993
      %v6736 = vsel %vm6678, %v6671, %v5995
      %v6738 = vsel %vm6678, %v6673, %v5997
      %v6740 = vsel %vm6678, %v6675, %v5999
      %v6742 = vsel %vm6678, %v6677, %v6001
      %vm6743 = vcmask 195584
      %v6745 = vsel %vm6743, %v6680, %v6163
      %v6747 = vsel %vm6743, %v6682, %v6165
      %v6749 = vsel %vm6743, %v6684, %v6167
      %v6751 = vsel %vm6743, %v6686, %v6169
      %v6753 = vsel %vm6743, %v6688, %v6171
      %v6755 = vsel %vm6743, %v6690, %v6173
      %v6757 = vsel %vm6743, %v6692, %v6175
      %v6759 = vsel %vm6743, %v6694, %v6177
      %v6761 = vsel %vm6743, %v6696, %v6179
      %v6763 = vsel %vm6743, %v6698, %v6181
      %v6765 = vsel %vm6743, %v6700, %v6183
      %v6767 = vsel %vm6743, %v6702, %v6185
      %v6769 = vsel %vm6743, %v6704, %v6187
      %v6771 = vsel %vm6743, %v6706, %v6189
      %v6773 = vsel %vm6743, %v6708, %v6191
      %v6775 = vsel %vm6743, %v6710, %v6193
      %v6777 = vsel %vm6743, %v6712, %v6195
      %v6779 = vsel %vm6743, %v6714, %v6197
      %v6781 = vsel %vm6743, %v6716, %v6199
      %v6783 = vsel %vm6743, %v6718, %v6201
      %v6785 = vsel %vm6743, %v6720, %v6203
      %v6787 = vsel %vm6743, %v6722, %v6205
      %v6789 = vsel %vm6743, %v6724, %v6207
      %v6791 = vsel %vm6743, %v6726, %v6209
      %v6793 = vsel %vm6743, %v6728, %v6211
      %v6795 = vsel %vm6743, %v6730, %v6213
      %v6797 = vsel %vm6743, %v6732, %v6215
      %v6799 = vsel %vm6743, %v6734, %v6217
      %v6801 = vsel %vm6743, %v6736, %v6219
      %v6803 = vsel %vm6743, %v6738, %v6221
      %v6805 = vsel %vm6743, %v6740, %v6223
      %v6807 = vsel %vm6743, %v6742, %v6225
      %vm6808 = vcmask 228352
      %v6810 = vsel %vm6808, %v6745, %v6323
      %v6812 = vsel %vm6808, %v6747, %v6325
      %v6814 = vsel %vm6808, %v6749, %v6327
      %v6816 = vsel %vm6808, %v6751, %v6329
      %v6818 = vsel %vm6808, %v6753, %v6331
      %v6820 = vsel %vm6808, %v6755, %v6333
      %v6822 = vsel %vm6808, %v6757, %v6335
      %v6824 = vsel %vm6808, %v6759, %v6337
      %v6826 = vsel %vm6808, %v6761, %v6339
      %v6828 = vsel %vm6808, %v6763, %v6341
      %v6830 = vsel %vm6808, %v6765, %v6343
      %v6832 = vsel %vm6808, %v6767, %v6345
      %v6834 = vsel %vm6808, %v6769, %v6347
      %v6836 = vsel %vm6808, %v6771, %v6349
      %v6838 = vsel %vm6808, %v6773, %v6351
      %v6840 = vsel %vm6808, %v6775, %v6353
      %v6842 = vsel %vm6808, %v6777, %v6355
      %v6844 = vsel %vm6808, %v6779, %v6357
      %v6846 = vsel %vm6808, %v6781, %v6359
      %v6848 = vsel %vm6808, %v6783, %v6361
      %v6850 = vsel %vm6808, %v6785, %v6363
      %v6852 = vsel %vm6808, %v6787, %v6365
      %v6854 = vsel %vm6808, %v6789, %v6367
      %v6856 = vsel %vm6808, %v6791, %v6369
      %v6858 = vsel %vm6808, %v6793, %v6371
      %v6860 = vsel %vm6808, %v6795, %v6373
      %v6862 = vsel %vm6808, %v6797, %v6375
      %v6864 = vsel %vm6808, %v6799, %v6377
      %v6866 = vsel %vm6808, %v6801, %v6379
      %v6868 = vsel %vm6808, %v6803, %v6381
      %v6870 = vsel %vm6808, %v6805, %v6383
      %v6872 = vsel %vm6808, %v6807, %v6385
      %v6873 = vld [vmem:[%s2] sm:$0xf]
      %v6874 = vld [vmem:[%s2 + $0x4] sm:$0xf]
      %v6875 = vld [vmem:[%s2 + $0x8] sm:$0xf]
      %v6876 = vld [vmem:[%s2 + $0xc] sm:$0xf]
      %v6877 = vld [vmem:[%s3] sm:$0x1]
      %v6879 = vperm.slane %v6877, 0
      %v6885 = vunpack.c.l.b16 %v6873
      %v6886 = vunpack.c.l.b16 %v6874
      %v6887 = vunpack.c.l.b16 %v6875
      %v6888 = vunpack.c.l.b16 %v6876
      %v6889 = vpack.c.b16 %v6886, %v6885
      %v6890 = vpack.c.b16 %v6888, %v6887
      %vm6893 = vcmask 261120
      %v6894 = vsel %vm6893, %v6810, 0
      %v6896 = vsel %vm6893, %v6812, 0
      %v6898 = vsel %vm6893, %v6814, 0
      %v6900 = vsel %vm6893, %v6816, 0
      %v6902 = vsel %vm6893, %v6818, 0
      %v6904 = vsel %vm6893, %v6820, 0
      %v6906 = vsel %vm6893, %v6822, 0
      %v6908 = vsel %vm6893, %v6824, 0
      %v6910 = vsel %vm6893, %v6826, 0
      %v6912 = vsel %vm6893, %v6828, 0
      %v6914 = vsel %vm6893, %v6830, 0
      %v6916 = vsel %vm6893, %v6832, 0
      %v6918 = vsel %vm6893, %v6834, 0
      %v6920 = vsel %vm6893, %v6836, 0
      %v6922 = vsel %vm6893, %v6838, 0
      %v6924 = vsel %vm6893, %v6840, 0
      %v6926 = vsel %vm6893, %v6842, 0
      %v6928 = vsel %vm6893, %v6844, 0
      %v6930 = vsel %vm6893, %v6846, 0
      %v6932 = vsel %vm6893, %v6848, 0
      %v6934 = vsel %vm6893, %v6850, 0
      %v6936 = vsel %vm6893, %v6852, 0
      %v6938 = vsel %vm6893, %v6854, 0
      %v6940 = vsel %vm6893, %v6856, 0
      %v6942 = vsel %vm6893, %v6858, 0
      %v6944 = vsel %vm6893, %v6860, 0
      %v6946 = vsel %vm6893, %v6862, 0
      %v6948 = vsel %vm6893, %v6864, 0
      %v6950 = vsel %vm6893, %v6866, 0
      %v6952 = vsel %vm6893, %v6868, 0
      %v6954 = vsel %vm6893, %v6870, 0
      %v6956 = vsel %vm6893, %v6872, 0
      %6958 = vmatpush.bf16.msra.mxu0 0
      %6959 = vmatpush.bf16.msra.mxu0 0
      %6960 = vmatpush.bf16.msra.mxu0 0
      %6961 = vmatpush.bf16.msra.mxu0 0
      %6962 = vmatpush.bf16.msra.mxu0 0
      %6963 = vmatpush.bf16.msra.mxu0 0
      %6964 = vmatpush.bf16.msra.mxu0 %v6890
      %6965 = vmatpush.bf16.msra.mxu0 %v6889
      %6966 = vmatmul.bf16.gmra.mxu0 %v6894
      %v6967 = vpop.f32.mrf.mxu0
      %v6968 = vadd.f32 %v6879, %v6967
      %v6969 = vpop.f32.mrf.mxu0
      %v6970 = vadd.f32 %v6879, %v6969
      %6971 = vmatmul.bf16.gmra.mxu0 %v6896
      %v6972 = vpop.f32.mrf.mxu0
      %v6973 = vadd.f32 %v6879, %v6972
      %v6974 = vpop.f32.mrf.mxu0
      %v6975 = vadd.f32 %v6879, %v6974
      %6976 = vmatmul.bf16.gmra.mxu0 %v6898
      %v6977 = vpop.f32.mrf.mxu0
      %v6978 = vadd.f32 %v6879, %v6977
      %v6979 = vpop.f32.mrf.mxu0
      %v6980 = vadd.f32 %v6879, %v6979
      %6981 = vmatmul.bf16.gmra.mxu0 %v6900
      %v6982 = vpop.f32.mrf.mxu0
      %v6983 = vadd.f32 %v6879, %v6982
      %v6984 = vpop.f32.mrf.mxu0
      %v6985 = vadd.f32 %v6879, %v6984
      %6986 = vmatmul.bf16.gmra.mxu0 %v6902
      %v6987 = vpop.f32.mrf.mxu0
      %v6988 = vadd.f32 %v6879, %v6987
      %v6989 = vpop.f32.mrf.mxu0
      %v6990 = vadd.f32 %v6879, %v6989
      %6991 = vmatmul.bf16.gmra.mxu0 %v6904
      %v6992 = vpop.f32.mrf.mxu0
      %v6993 = vadd.f32 %v6879, %v6992
      %v6994 = vpop.f32.mrf.mxu0
      %v6995 = vadd.f32 %v6879, %v6994
      %6996 = vmatmul.bf16.gmra.mxu0 %v6906
      %v6997 = vpop.f32.mrf.mxu0
      %v6998 = vadd.f32 %v6879, %v6997
      %v6999 = vpop.f32.mrf.mxu0
      %v7000 = vadd.f32 %v6879, %v6999
      %7001 = vmatmul.bf16.gmra.mxu0 %v6908
      %v7002 = vpop.f32.mrf.mxu0
      %v7003 = vadd.f32 %v6879, %v7002
      %v7004 = vpop.f32.mrf.mxu0
      %v7005 = vadd.f32 %v6879, %v7004
      %7006 = vmatmul.bf16.gmra.mxu0 %v6910
      %v7007 = vpop.f32.mrf.mxu0
      %v7008 = vadd.f32 %v6879, %v7007
      %v7009 = vpop.f32.mrf.mxu0
      %v7010 = vadd.f32 %v6879, %v7009
      %7011 = vmatmul.bf16.gmra.mxu0 %v6912
      %v7012 = vpop.f32.mrf.mxu0
      %v7013 = vadd.f32 %v6879, %v7012
      %v7014 = vpop.f32.mrf.mxu0
      %v7015 = vadd.f32 %v6879, %v7014
      %7016 = vmatmul.bf16.gmra.mxu0 %v6914
      %v7017 = vpop.f32.mrf.mxu0
      %v7018 = vadd.f32 %v6879, %v7017
      %v7019 = vpop.f32.mrf.mxu0
      %v7020 = vadd.f32 %v6879, %v7019
      %7021 = vmatmul.bf16.gmra.mxu0 %v6916
      %v7022 = vpop.f32.mrf.mxu0
      %v7023 = vadd.f32 %v6879, %v7022
      %v7024 = vpop.f32.mrf.mxu0
      %v7025 = vadd.f32 %v6879, %v7024
      %7026 = vmatmul.bf16.gmra.mxu0 %v6918
      %v7027 = vpop.f32.mrf.mxu0
      %v7028 = vadd.f32 %v6879, %v7027
      %v7029 = vpop.f32.mrf.mxu0
      %v7030 = vadd.f32 %v6879, %v7029
      %7031 = vmatmul.bf16.gmra.mxu0 %v6920
      %v7032 = vpop.f32.mrf.mxu0
      %v7033 = vadd.f32 %v6879, %v7032
      %v7034 = vpop.f32.mrf.mxu0
      %v7035 = vadd.f32 %v6879, %v7034
      %7036 = vmatmul.bf16.gmra.mxu0 %v6922
      %v7037 = vpop.f32.mrf.mxu0
      %v7038 = vadd.f32 %v6879, %v7037
      %v7039 = vpop.f32.mrf.mxu0
      %v7040 = vadd.f32 %v6879, %v7039
      %7041 = vmatmul.bf16.gmra.mxu0 %v6924
      %v7042 = vpop.f32.mrf.mxu0
      %v7043 = vadd.f32 %v6879, %v7042
      %v7044 = vpop.f32.mrf.mxu0
      %v7045 = vadd.f32 %v6879, %v7044
      %7046 = vmatmul.bf16.gmra.mxu0 %v6926
      %v7047 = vpop.f32.mrf.mxu0
      %v7048 = vadd.f32 %v6879, %v7047
      %v7049 = vpop.f32.mrf.mxu0
      %v7050 = vadd.f32 %v6879, %v7049
      %7051 = vmatmul.bf16.gmra.mxu0 %v6928
      %v7052 = vpop.f32.mrf.mxu0
      %v7053 = vadd.f32 %v6879, %v7052
      %v7054 = vpop.f32.mrf.mxu0
      %v7055 = vadd.f32 %v6879, %v7054
      %7056 = vmatmul.bf16.gmra.mxu0 %v6930
      %v7057 = vpop.f32.mrf.mxu0
      %v7058 = vadd.f32 %v6879, %v7057
      %v7059 = vpop.f32.mrf.mxu0
      %v7060 = vadd.f32 %v6879, %v7059
      %7061 = vmatmul.bf16.gmra.mxu0 %v6932
      %v7062 = vpop.f32.mrf.mxu0
      %v7063 = vadd.f32 %v6879, %v7062
      %v7064 = vpop.f32.mrf.mxu0
      %v7065 = vadd.f32 %v6879, %v7064
      %7066 = vmatmul.bf16.gmra.mxu0 %v6934
      %v7067 = vpop.f32.mrf.mxu0
      %v7068 = vadd.f32 %v6879, %v7067
      %v7069 = vpop.f32.mrf.mxu0
      %v7070 = vadd.f32 %v6879, %v7069
      %7071 = vmatmul.bf16.gmra.mxu0 %v6936
      %v7072 = vpop.f32.mrf.mxu0
      %v7073 = vadd.f32 %v6879, %v7072
      %v7074 = vpop.f32.mrf.mxu0
      %v7075 = vadd.f32 %v6879, %v7074
      %7076 = vmatmul.bf16.gmra.mxu0 %v6938
      %v7077 = vpop.f32.mrf.mxu0
      %v7078 = vadd.f32 %v6879, %v7077
      %v7079 = vpop.f32.mrf.mxu0
      %v7080 = vadd.f32 %v6879, %v7079
      %7081 = vmatmul.bf16.gmra.mxu0 %v6940
      %v7082 = vpop.f32.mrf.mxu0
      %v7083 = vadd.f32 %v6879, %v7082
      %v7084 = vpop.f32.mrf.mxu0
      %v7085 = vadd.f32 %v6879, %v7084
      %7086 = vmatmul.bf16.gmra.mxu0 %v6942
      %v7087 = vpop.f32.mrf.mxu0
      %v7088 = vadd.f32 %v6879, %v7087
      %v7089 = vpop.f32.mrf.mxu0
      %v7090 = vadd.f32 %v6879, %v7089
      %7091 = vmatmul.bf16.gmra.mxu0 %v6944
      %v7092 = vpop.f32.mrf.mxu0
      %v7093 = vadd.f32 %v6879, %v7092
      %v7094 = vpop.f32.mrf.mxu0
      %v7095 = vadd.f32 %v6879, %v7094
      %7096 = vmatmul.bf16.gmra.mxu0 %v6946
      %v7097 = vpop.f32.mrf.mxu0
      %v7098 = vadd.f32 %v6879, %v7097
      %v7099 = vpop.f32.mrf.mxu0
      %v7100 = vadd.f32 %v6879, %v7099
      %7101 = vmatmul.bf16.gmra.mxu0 %v6948
      %v7102 = vpop.f32.mrf.mxu0
      %v7103 = vadd.f32 %v6879, %v7102
      %v7104 = vpop.f32.mrf.mxu0
      %v7105 = vadd.f32 %v6879, %v7104
      %7106 = vmatmul.bf16.gmra.mxu0 %v6950
      %v7107 = vpop.f32.mrf.mxu0
      %v7108 = vadd.f32 %v6879, %v7107
      %v7109 = vpop.f32.mrf.mxu0
      %v7110 = vadd.f32 %v6879, %v7109
      %7111 = vmatmul.bf16.gmra.mxu0 %v6952
      %v7112 = vpop.f32.mrf.mxu0
      %v7113 = vadd.f32 %v6879, %v7112
      %v7114 = vpop.f32.mrf.mxu0
      %v7115 = vadd.f32 %v6879, %v7114
      %7116 = vmatmul.bf16.gmra.mxu0 %v6954
      %v7117 = vpop.f32.mrf.mxu0
      %v7118 = vadd.f32 %v6879, %v7117
      %v7119 = vpop.f32.mrf.mxu0
      %v7120 = vadd.f32 %v6879, %v7119
      %7121 = vmatmul.bf16.gmra.mxu0 %v6956
      %v7122 = vpop.f32.mrf.mxu0
      %v7123 = vadd.f32 %v6879, %v7122
      %v7124 = vpop.f32.mrf.mxu0
      %v7125 = vadd.f32 %v6879, %v7124
      %7126 = vdwg.mxu0
      %7127 = vst.msk [vmem:[%s318] sm:$0xff] %vm6893, %v6968
      %7128 = vst.msk [vmem:[%s318 + $0x8] sm:$0xff] %vm6893, %v6970
      %7129 = vst.msk [vmem:[%s318 + $0x10] sm:$0xff] %vm6893, %v6973
      %7130 = vst.msk [vmem:[%s318 + $0x18] sm:$0xff] %vm6893, %v6975
      %7131 = vst.msk [vmem:[%s318 + $0x20] sm:$0xff] %vm6893, %v6978
      %7132 = vst.msk [vmem:[%s318 + $0x28] sm:$0xff] %vm6893, %v6980
      %7133 = vst.msk [vmem:[%s318 + $0x30] sm:$0xff] %vm6893, %v6983
      %7134 = vst.msk [vmem:[%s318 + $0x38] sm:$0xff] %vm6893, %v6985
      %7135 = vst.msk [vmem:[%s318 + $0x40] sm:$0xff] %vm6893, %v6988
      %7136 = vst.msk [vmem:[%s318 + $0x48] sm:$0xff] %vm6893, %v6990
      %7137 = vst.msk [vmem:[%s318 + $0x50] sm:$0xff] %vm6893, %v6993
      %7138 = vst.msk [vmem:[%s318 + $0x58] sm:$0xff] %vm6893, %v6995
      %7139 = vst.msk [vmem:[%s318 + $0x60] sm:$0xff] %vm6893, %v6998
      %7140 = vst.msk [vmem:[%s318 + $0x68] sm:$0xff] %vm6893, %v7000
      %7141 = vst.msk [vmem:[%s318 + $0x70] sm:$0xff] %vm6893, %v7003
      %7142 = vst.msk [vmem:[%s318 + $0x78] sm:$0xff] %vm6893, %v7005
      %7143 = vst.msk [vmem:[%s318 + $0x80] sm:$0xff] %vm6893, %v7008
      %7144 = vst.msk [vmem:[%s318 + $0x88] sm:$0xff] %vm6893, %v7010
      %7145 = vst.msk [vmem:[%s318 + $0x90] sm:$0xff] %vm6893, %v7013
      %7146 = vst.msk [vmem:[%s318 + $0x98] sm:$0xff] %vm6893, %v7015
      %7147 = vst.msk [vmem:[%s318 + $0xa0] sm:$0xff] %vm6893, %v7018
      %7148 = vst.msk [vmem:[%s318 + $0xa8] sm:$0xff] %vm6893, %v7020
      %7149 = vst.msk [vmem:[%s318 + $0xb0] sm:$0xff] %vm6893, %v7023
      %7150 = vst.msk [vmem:[%s318 + $0xb8] sm:$0xff] %vm6893, %v7025
      %7151 = vst.msk [vmem:[%s318 + $0xc0] sm:$0xff] %vm6893, %v7028
      %7152 = vst.msk [vmem:[%s318 + $0xc8] sm:$0xff] %vm6893, %v7030
      %7153 = vst.msk [vmem:[%s318 + $0xd0] sm:$0xff] %vm6893, %v7033
      %7154 = vst.msk [vmem:[%s318 + $0xd8] sm:$0xff] %vm6893, %v7035
      %7155 = vst.msk [vmem:[%s318 + $0xe0] sm:$0xff] %vm6893, %v7038
      %7156 = vst.msk [vmem:[%s318 + $0xe8] sm:$0xff] %vm6893, %v7040
      %7157 = vst.msk [vmem:[%s318 + $0xf0] sm:$0xff] %vm6893, %v7043
      %7158 = vst.msk [vmem:[%s318 + $0xf8] sm:$0xff] %vm6893, %v7045
      %7159 = vst.msk [vmem:[%s318 + $0x100] sm:$0xff] %vm6893, %v7048
      %7160 = vst.msk [vmem:[%s318 + $0x108] sm:$0xff] %vm6893, %v7050
      %7161 = vst.msk [vmem:[%s318 + $0x110] sm:$0xff] %vm6893, %v7053
      %7162 = vst.msk [vmem:[%s318 + $0x118] sm:$0xff] %vm6893, %v7055
      %7163 = vst.msk [vmem:[%s318 + $0x120] sm:$0xff] %vm6893, %v7058
      %7164 = vst.msk [vmem:[%s318 + $0x128] sm:$0xff] %vm6893, %v7060
      %7165 = vst.msk [vmem:[%s318 + $0x130] sm:$0xff] %vm6893, %v7063
      %7166 = vst.msk [vmem:[%s318 + $0x138] sm:$0xff] %vm6893, %v7065
      %7167 = vst.msk [vmem:[%s318 + $0x140] sm:$0xff] %vm6893, %v7068
      %7168 = vst.msk [vmem:[%s318 + $0x148] sm:$0xff] %vm6893, %v7070
      %7169 = vst.msk [vmem:[%s318 + $0x150] sm:$0xff] %vm6893, %v7073
      %7170 = vst.msk [vmem:[%s318 + $0x158] sm:$0xff] %vm6893, %v7075
      %7171 = vst.msk [vmem:[%s318 + $0x160] sm:$0xff] %vm6893, %v7078
      %7172 = vst.msk [vmem:[%s318 + $0x168] sm:$0xff] %vm6893, %v7080
      %7173 = vst.msk [vmem:[%s318 + $0x170] sm:$0xff] %vm6893, %v7083
      %7174 = vst.msk [vmem:[%s318 + $0x178] sm:$0xff] %vm6893, %v7085
      %7175 = vst.msk [vmem:[%s318 + $0x180] sm:$0xff] %vm6893, %v7088
      %7176 = vst.msk [vmem:[%s318 + $0x188] sm:$0xff] %vm6893, %v7090
      %7177 = vst.msk [vmem:[%s318 + $0x190] sm:$0xff] %vm6893, %v7093
      %7178 = vst.msk [vmem:[%s318 + $0x198] sm:$0xff] %vm6893, %v7095
      %7179 = vst.msk [vmem:[%s318 + $0x1a0] sm:$0xff] %vm6893, %v7098
      %7180 = vst.msk [vmem:[%s318 + $0x1a8] sm:$0xff] %vm6893, %v7100
      %7181 = vst.msk [vmem:[%s318 + $0x1b0] sm:$0xff] %vm6893, %v7103
      %7182 = vst.msk [vmem:[%s318 + $0x1b8] sm:$0xff] %vm6893, %v7105
      %7183 = vst.msk [vmem:[%s318 + $0x1c0] sm:$0xff] %vm6893, %v7108
      %7184 = vst.msk [vmem:[%s318 + $0x1c8] sm:$0xff] %vm6893, %v7110
      %7185 = vst.msk [vmem:[%s318 + $0x1d0] sm:$0xff] %vm6893, %v7113
      %7186 = vst.msk [vmem:[%s318 + $0x1d8] sm:$0xff] %vm6893, %v7115
      %7187 = vst.msk [vmem:[%s318 + $0x1e0] sm:$0xff] %vm6893, %v7118
      %7188 = vst.msk [vmem:[%s318 + $0x1e8] sm:$0xff] %vm6893, %v7120
      %7189 = vst.msk [vmem:[%s318 + $0x1f0] sm:$0xff] %vm6893, %v7123
      %7190 = vst.msk [vmem:[%s318 + $0x1f8] sm:$0xff] %vm6893, %v7125
      %s7191 = smul.u32 8, %s20
      %p7192 = scmp.lt.s32.totalorder %s19, 1
      %s7193 = scalar_select %p7192, %s19, 1
      %p7194 = scmp.lt.s32.totalorder %s7191, 7
      %s7195 = scalar_select %p7194, %s7191, 7
      %s7196 = smul.addr %s7195, 8
      %s7197 = smul.addr %s7193, 64
      %s7198 = sadd.s32 %s7196, %s7197
      %s7199 = smul.addr %s7198, 8
      %s7200 = scalar_lea.vmem %s4, %s7199
      // Predicated region
      $region37: #{tpu_custom_call.1} parent=35 // pred_check
        %p7201 = pneg %p149
      $region38: #{tpu_custom_call.1} parent=35 // pred_check_branch
        %7203 = sbr.rel (%p7201) target = $region40
      $region39: #{tpu_custom_call.1} parent=35 // pred_region
        %s7204 = smul.u32 8, %s20
      $region40: #{tpu_custom_call.1} parent=35 // pred_fallthru
        _
    $region36: #{tpu_custom_call.1} parent=5 // pred_fallthru
      _
    %p7205 = scmp.le.s32.totalorder 2, %s10
    // Predicated region
    $region41: #{tpu_custom_call.1} parent=5 // pred_check
      %p7206 = pneg %p7205
    $region42: #{tpu_custom_call.1} parent=5 // pred_check_branch
      %7208 = sbr.rel (%p7206) target = $region44
    $region43: #{tpu_custom_call.1} parent=5 // pred_region
      %s7209 = ssub.s32 %s10, 2
      // Predicated region
      $region45: #{tpu_custom_call.1} parent=43 // pred_check
        %p7210 = pneg %p155
      $region46: #{tpu_custom_call.1} parent=43 // pred_check_branch
        %7212 = sbr.rel (%p7210) target = $region48
      $region47: #{tpu_custom_call.1} parent=43 // pred_region
        %s7213 = smul.u32 8, %s22
        %p7214 = scmp.lt.s32.totalorder %s21, 1
        %s7215 = scalar_select %p7214, %s21, 1
        %p7216 = scmp.lt.s32.totalorder %s7213, 7
        %s7217 = scalar_select %p7216, %s7213, 7
        %s7218 = smul.addr %s7217, 8
        %s7219 = smul.addr %s7215, 64
        %s7220 = sadd.s32 %s7218, %s7219
        %s7221 = smul.addr %s7220, 8
        %s7222 = scalar_lea.vmem %s4, %s7221
      $region48: #{tpu_custom_call.1} parent=43 // pred_fallthru
        _
    $region44: #{tpu_custom_call.1} parent=5 // pred_fallthru
      _
  $region6: #{tpu_custom_call.1} parent=0 // loop_footer
    %s14 = sadd.s32 1, %s10
  $region7: #{tpu_custom_call.1} parent=0 // loop_footer_branch
    %9 = sbr.rel target = $region3
  $region8: #{tpu_custom_call.1} parent=0 // loop_exit
    _

</llo_original>
